<compile_context>
chip_gen: v5e
topology: v5e:2x2
jax: 0.10.0
libtpu: 0.0.40
codegen_flags: <defaults>
</compile_context>

<pallas_src>
import functools

import jax
import jax.numpy as jnp
from jax import lax
from jax.experimental import pallas as pl
from jax.experimental.pallas import tpu as pltpu


def _round_up(x, m):
    return ((x + m - 1) // m) * m


ATT_LANES = 128  # lane-dense attention-map output width (multiple of 128)


# ----------------------------------------------------------------------------
# Kernel 1: fused SpatialAttention (1x1 conv + sigmoid) + attention-weighted
#           global average pool, Sb segments per grid step (all scales fused).
# ----------------------------------------------------------------------------
def _attn_pool_kernel(feat_ref, w_ref, b_ref, pooled_ref, attn_ref, *, npix):
    """feat_ref  : [Sb, B, Pp, C]  bf16  features (pixel rows >= npix are zero pad)
       w_ref     : [1, C, Sb]      bf16  per-segment 1x1-conv weight columns
       b_ref     : [S_pad]         f32   per-segment conv bias (SMEM, full array)
       pooled_ref: [Sb, B, C]      f32   attention-weighted spatial mean
       attn_ref  : [Sb, B, 128]    f32   sigmoid attention maps (first npix lanes valid)
    """
    g = pl.program_id(0)
    sb, bsz, pp, nch = feat_ref.shape

    feat = feat_ref[...]                                    # [Sb, B, Pp, C] bf16
    feat2d = feat.reshape(sb * bsz * pp, nch)               # clean: Pp % 8 == 0

    # 1x1-conv logits for every (segment-pixel, segment-weight) pair of the
    # block as ONE MXU-direct matmul (big operand is LHS, contraction on its
    # last dim -> no transpose of the [*, C] feature tile).  Only the
    # "diagonal" columns are consumed below; the extra N columns are
    # negligible MXU work.
    logits = jnp.dot(feat2d, w_ref[0],
                     preferred_element_type=jnp.float32)    # [Sb*B*Pp, Sb] f32

    inv_p = 1.0 / float(npix)
    rows = bsz * pp
    pad_zeros = (jnp.zeros((bsz, ATT_LANES - pp), jnp.float32)
                 if pp < ATT_LANES else None)

    for i in range(sb):                                     # static unroll over block
        bias = b_ref[g * sb + i]                            # dynamic SMEM scalar read

        # tiny [B*Pp, 1] column -> [B, Pp] relayout (small by design)
        lg_i = logits[i * rows:(i + 1) * rows, i:i + 1]
        att = jax.nn.sigmoid(lg_i.reshape(bsz, pp) + bias)  # [B, Pp] f32

        # Lane-dense (128-wide) unmasked attention-map store.
        if pad_zeros is not None:
            attn_ref[i] = jnp.concatenate([att, pad_zeros], axis=-1)
        else:
            attn_ref[i] = att

        # attended = feat * att ; adaptive_avg_pool2d((1,1)) == mean over the
        # true npix pixels.  Fused as one MXU contraction over Pp (zero pixel
        # pad rows contribute nothing).
        pooled = lax.dot_general(
            att.astype(feat.dtype).reshape(bsz, 1, pp), feat[i],
            dimension_numbers=(((2,), (1,)), ((0,), (0,))),
            preferred_element_type=jnp.float32)             # [B, 1, C] f32
        pooled_ref[i] = pooled[:, 0, :] * inv_p


def attention_and_pool(seg_feats, w_cols, b_per_seg, *, seg_block, npix):
    """seg_feats: [S_pad, B, Pp, C] bf16 (S_pad % seg_block == 0)
       w_cols   : [S_pad // seg_block, C, seg_block] bf16
       b_per_seg: [S_pad] f32
       Returns (pooled [S_pad, B, C] f32, attn [S_pad, B, 128] f32)."""
    S_pad, B, Pp, C = seg_feats.shape
    assert Pp % 8 == 0 and Pp <= ATT_LANES and C % 128 == 0
    assert S_pad % seg_block == 0
    G = S_pad // seg_block

    kernel = functools.partial(_attn_pool_kernel, npix=npix)
    return pl.pallas_call(
        kernel,
        grid=(G,),
        in_specs=[
            pl.BlockSpec((seg_block, B, Pp, C), lambda g: (g, 0, 0, 0)),
            pl.BlockSpec((1, C, seg_block), lambda g: (g, 0, 0)),
            pl.BlockSpec(memory_space=pltpu.MemorySpace.SMEM),
        ],
        out_specs=[
            pl.BlockSpec((seg_block, B, C), lambda g: (g, 0, 0)),
            pl.BlockSpec((seg_block, B, ATT_LANES), lambda g: (g, 0, 0)),
        ],
        out_shape=[
            jax.ShapeDtypeStruct((S_pad, B, C), jnp.float32),
            jax.ShapeDtypeStruct((S_pad, B, ATT_LANES), jnp.float32),
        ],
        compiler_params=pltpu.CompilerParams(
            dimension_semantics=("parallel",),     # segments are independent
            vmem_limit_bytes=32 * 1024 * 1024),
    )(seg_feats, w_cols, b_per_seg)


# ----------------------------------------------------------------------------
# Kernel 2: final linear projection  y = x @ W + b  (K/N-tiled, bf16 weights,
#           f32 VMEM accumulator, pl.when init/finalize on the K axis).
# ----------------------------------------------------------------------------
def _proj_kernel(x_ref, w_ref, b_ref, o_ref, acc_ref):
    k = pl.program_id(1)

    @pl.when(k == 0)
    def _():
        acc_ref[...] = jnp.zeros_like(acc_ref)

    acc_ref[...] += jnp.dot(x_ref[...], w_ref[...],
                            preferred_element_type=jnp.float32)

    @pl.when(k == pl.num_programs(1) - 1)
    def _():
        o_ref[...] = acc_ref[...] + b_ref[...]


def linear_projection(x, w, b, *, tk=2048):
    """x: [B, F] f32, w: [F, D] (pre-transposed nn.Linear weight), b: [1, D]."""
    B, F = x.shape
    Fw, D = w.shape
    assert Fw == F
    D_pad = _round_up(D, 128)
    # >=2 lane tiles whenever possible so both v7x TensorCores share the weight
    # stream (axis 0 is "parallel"); each weight buffer stays <= ~3 MB so the
    # double-buffered stream fits v5e's 16 MiB scoped default as well.
    half = D_pad // 2
    tn = half if (half % 128 == 0 and half >= 128) else D_pad
    tk = min(tk, _round_up(F, 128))
    F_pad = _round_up(F, tk)

    x_p = jnp.zeros((B, F_pad), jnp.bfloat16).at[:, :F].set(x.astype(jnp.bfloat16))
    w_p = jnp.zeros((F_pad, D_pad), jnp.bfloat16).at[:F, :D].set(w.astype(jnp.bfloat16))
    b_p = jnp.zeros((1, D_pad), jnp.float32).at[:, :D].set(
        jnp.asarray(b, jnp.float32).reshape(1, D))

    w_tile_bytes = tk * tn * 2
    vmem_limit = int(min(48 * 1024 * 1024,
                         max(32 * 1024 * 1024, 4 * w_tile_bytes)))

    out = pl.pallas_call(
        _proj_kernel,
        grid=(D_pad // tn, F_pad // tk),
        in_specs=[
            pl.BlockSpec((B, tk), lambda n, k: (0, k)),
            pl.BlockSpec((tk, tn), lambda n, k: (k, n)),
            pl.BlockSpec((1, tn), lambda n, k: (0, n)),
        ],
        out_specs=pl.BlockSpec((B, tn), lambda n, k: (0, n)),
        out_shape=jax.ShapeDtypeStruct((B, D_pad), jnp.float32),
        scratch_shapes=[pltpu.VMEM((B, tn), jnp.float32)],
        compiler_params=pltpu.CompilerParams(
            dimension_semantics=("parallel", "arbitrary"),
            vmem_limit_bytes=vmem_limit),
    )(x_p, w_p, b_p)
    return out[:, :D]


# ----------------------------------------------------------------------------
# Plain-JAX glue (resizing, backbone stand-in, segment slicing)
# ----------------------------------------------------------------------------
def bilinear_resize_nchw(x, size):
    B, C, _, _ = x.shape
    # F.interpolate(..., mode='bilinear', align_corners=False) uses half-pixel
    # centers, matching jax.image.resize's 'bilinear'.
    return jax.image.resize(x, (B, C, size[0], size[1]), method="bilinear")


def backbone_stub(x_nchw, w_bb, b_bb, feat_hw):
    # TODO(synk): the pretrained torchvision backbone (inception_v3 / resnet)
    # has no clean Pallas equivalent; replaced by a deterministic avg-pool +
    # tanh channel-lift stand-in that preserves the [B, hf, wf, feature_dim]
    # feature-map interface.
    B, C, H, W = x_nchw.shape
    ph, pw = H // feat_hw, W // feat_hw
    x = x_nchw.reshape(B, C, feat_hw, ph, feat_hw, pw).mean(axis=(3, 5))  # [B,C,hf,wf]
    x = jnp.transpose(x, (0, 2, 3, 1))                                    # -> NHWC
    return jnp.tanh(x @ w_bb + b_bb)                                      # [B,hf,wf,Fd]


def tsn_forward(x, params, segment_scales, feature_dim, feat_hw=7):
    """x: [B, Cin, H, W] (NCHW, like the PyTorch module)."""
    B, _, H, W = x.shape
    if H < 32 or W < 32:
        x = bilinear_resize_nchw(x, (max(224, H), max(224, W)))
        H, W = x.shape[2], x.shape[3]

    n_scales = len(segment_scales)
    P = feat_hw * feat_hw
    Pp = _round_up(P, 8)                      # pixel axis padded to a sublane multiple
    C_pad = _round_up(feature_dim, 128)       # channel axis lane-dense

    seg_feats = []
    scale_ids = []
    counts = [0] * n_scales
    for i, (h_segments, w_segments) in enumerate(segment_scales):
        h_size = max(1, H // h_segments)
        w_size = max(1, W // w_segments)
        for h_idx in range(h_segments):
            for w_idx in range(w_segments):
                h_start = h_idx * h_size
                h_end = (h_idx + 1) * h_size if h_idx < h_segments - 1 else H
                w_start = w_idx * w_size
                w_end = (w_idx + 1) * w_size if w_idx < w_segments - 1 else W
                seg = x[:, :, h_start:h_end, w_start:w_end]
                if seg.shape[2] < 32 or seg.shape[3] < 32:
                    continue
                seg = bilinear_resize_nchw(
                    seg, (max(224, seg.shape[2]), max(224, seg.shape[3])))
                feat = backbone_stub(seg, params["w_bb"], params["b_bb"], feat_hw)
                # bf16 cast + pad to the kernel layout at the point of production
                # (no extra full-size f32 [S,B,P,Fd] materialization later).
                feat = feat.reshape(B, P, feature_dim).astype(jnp.bfloat16)
                feat = jnp.pad(feat, ((0, 0), (0, Pp - P),
                                      (0, C_pad - feature_dim)))
                seg_feats.append(feat)
                scale_ids.append(i)
                counts[i] += 1

    all_features = []
    attention_maps = []
    if seg_feats:
        S = len(seg_feats)
        # Block several segments per grid step, keeping >=2 grid steps when
        # possible so v7x megacore still splits the work.
        Sb = 8 if S >= 16 else max(1, (S + 1) // 2)
        S_pad = _round_up(S, Sb)
        for _ in range(S_pad - S):                       # dummy zero segments
            seg_feats.append(jnp.zeros((B, Pp, C_pad), jnp.bfloat16))
        stacked = jnp.stack(seg_feats, axis=0)           # [S_pad, B, Pp, C] bf16

        sid = jnp.asarray(scale_ids, jnp.int32)
        w_rows = jnp.zeros((n_scales, C_pad), jnp.float32)
        w_rows = w_rows.at[:, :feature_dim].set(
            jnp.asarray(params["attn_w"], jnp.float32))
        w_per_seg = jnp.zeros((S_pad, C_pad), jnp.float32).at[:S].set(w_rows[sid])
        # [G, C_pad, Sb]: each grid step's weight columns arrive MXU-ready
        # (no in-kernel transpose / broadcast of the weights).
        w_cols = jnp.transpose(
            w_per_seg.reshape(S_pad // Sb, Sb, C_pad), (0, 2, 1)
        ).astype(jnp.bfloat16)
        b_per_seg = jnp.zeros((S_pad,), jnp.float32).at[:S].set(
            jnp.asarray(params["attn_b"], jnp.float32)[sid])

        # NOTE: pooling uses the attention cast to bf16, so pooled is not a
        # bit-exact function of the returned f32 attention maps (tiny delta).
        pooled_all, attn_all = attention_and_pool(
            stacked, w_cols, b_per_seg, seg_block=Sb, npix=P)

        start = 0
        for i in range(n_scales):
            cnt = counts[i]
            if cnt > 0:
                # torch: stack per-segment pooled features and mean over segments
                scale_pool = pooled_all[start:start + cnt, :, :feature_dim]
                all_features.append(jnp.mean(scale_pool, axis=0))     # [B, Fd]
                attention_maps.append([
                    attn_all[s, :, :P].reshape(B, 1, feat_hw, feat_hw)
                    for s in range(start, start + cnt)
                ])
            else:
                all_features.append(jnp.zeros((B, feature_dim), jnp.float32))
            start += cnt
    else:
        all_features = [jnp.zeros((B, feature_dim), jnp.float32)
                        for _ in range(n_scales)]

    combined = jnp.concatenate(all_features, axis=1)                  # [B, Fd*n_scales]
    projected = linear_projection(combined, params["w_proj"], params["b_proj"])
    return projected, attention_maps


# ----------------------------------------------------------------------------
if __name__ == "__main__":
    key = jax.random.PRNGKey(0)
    B, Cin, H, W = 2, 3, 128, 128
    feature_dim = 32          # small stand-in for the 2048-dim backbone features
    projection_dim = 48       # small stand-in for projection_dim=1408
    segment_scales = [[1, 1], [2, 2], [4, 4]]
    n_scales = len(segment_scales)

    keys = jax.random.split(key, 8)
    x = jax.random.normal(keys[0], (B, Cin, H, W), jnp.float32)
    params = dict(
        w_bb=0.1 * jax.random.normal(keys[1], (Cin, feature_dim), jnp.float32),
        b_bb=0.01 * jax.random.normal(keys[2], (feature_dim,), jnp.float32),
        attn_w=0.1 * jax.random.normal(keys[3], (n_scales, feature_dim), jnp.float32),
        attn_b=0.01 * jax.random.normal(keys[4], (n_scales,), jnp.float32),
        # nn.Linear weight stored pre-transposed as [in_features, out_features]
        w_proj=0.05 * jax.random.normal(
            keys[5], (feature_dim * n_scales, projection_dim), jnp.float32),
        b_proj=0.01 * jax.random.normal(keys[6], (1, projection_dim), jnp.float32),
    )

    projected, attn_maps = tsn_forward(x, params, segment_scales, feature_dim)
    projected = jax.block_until_ready(projected)
    for scale_maps in attn_maps:
        for m in scale_maps:
            jax.block_until_ready(m)

    assert projected.shape == (B, projection_dim)
    assert len(attn_maps) == n_scales
    assert len(attn_maps[2]) == 16
    assert attn_maps[2][0].shape == (B, 1, 7, 7)
    assert bool(jnp.all(jnp.isfinite(projected)))
    print("KERNEL_OK")
</pallas_src>

<mosaic_0001>
module attributes {stable_mosaic.version = 11 : i64} {
  func.func @_attn_pool_kernel(%arg0: i32, %arg1: memref<8x2x56x128xbf16, #tpu.memory_space<vmem>>, %arg2: memref<1x128x8xbf16, #tpu.memory_space<vmem>>, %arg3: memref<24xf32, #tpu.memory_space<smem>>, %arg4: memref<8x2x128xf32, #tpu.memory_space<vmem>>, %arg5: memref<8x2x128xf32, #tpu.memory_space<vmem>>) attributes {dimension_semantics = [#tpu.dimension_semantics<parallel>], iteration_bounds = array<i64: 3>, scalar_prefetch = 0 : i64, scratch_operands = 0 : i64, tpu.core_type = #tpu.core_type<tc>, window_params = [{transform_indices = @transform_0, window_bounds = array<i64: 8, 2, 56, 128>}, {transform_indices = @transform_1, window_bounds = array<i64: 1, 128, 8>}, {transform_indices = @transform_2, window_bounds = array<i64: 24>}, {transform_indices = @transform_3, window_bounds = array<i64: 8, 2, 128>}, {transform_indices = @transform_4, window_bounds = array<i64: 8, 2, 128>}]} {
    %c0 = arith.constant 0 : index
    %c0_0 = arith.constant 0 : index
    %c0_1 = arith.constant 0 : index
    %c0_2 = arith.constant 0 : index
    %0 = vector.load %arg1[%c0, %c0_0, %c0_1, %c0_2] : memref<8x2x56x128xbf16, #tpu.memory_space<vmem>>, vector<8x2x56x128xbf16>
    %1 = vector.shape_cast %0 : vector<8x2x56x128xbf16> to vector<896x128xbf16>
    %c0_3 = arith.constant 0 : index
    %c0_4 = arith.constant 0 : index
    %c0_5 = arith.constant 0 : index
    %2 = vector.load %arg2[%c0_3, %c0_4, %c0_5] : memref<1x128x8xbf16, #tpu.memory_space<vmem>>, vector<1x128x8xbf16>
    %3 = vector.shape_cast %2 : vector<1x128x8xbf16> to vector<128x8xbf16>
    %cst = arith.constant dense<0.000000e+00> : vector<896x8xf32>
    %4 = tpu.matmul %1, %3, %cst {dimension_numbers = #tpu.dot_dimension_numbers<[1], [0], [0], [1], [0, 0, 1, 1], [], []>} : vector<896x128xbf16>, vector<128x8xbf16>, vector<896x8xf32> -> vector<896x8xf32>
    %cst_6 = arith.constant 0.000000e+00 : f32
    %5 = vector.broadcast %cst_6 : f32 to vector<2x72xf32>
    %c8_i32 = arith.constant 8 : i32
    %6 = arith.muli %arg0, %c8_i32 : i32
    %c0_i32 = arith.constant 0 : i32
    %7 = arith.addi %6, %c0_i32 : i32
    %8 = arith.index_cast %7 : i32 to index
    %9 = memref.load %arg3[%8] : memref<24xf32, #tpu.memory_space<smem>>
    %10 = vector.extract_strided_slice %4 {offsets = [0, 0], sizes = [112, 1], strides = [1, 1]} : vector<896x8xf32> to vector<112x1xf32>
    %11 = vector.shape_cast %10 : vector<112x1xf32> to vector<2x56xf32>
    %12 = vector.broadcast %9 : f32 to vector<2x56xf32>
    %13 = arith.addf %11, %12 : vector<2x56xf32>
    %14 = arith.negf %13 : vector<2x56xf32>
    %15 = math.exp %14 : vector<2x56xf32>
    %cst_7 = arith.constant 1.000000e+00 : f32
    %16 = vector.broadcast %cst_7 : f32 to vector<2x56xf32>
    %17 = arith.addf %16, %15 : vector<2x56xf32>
    %18 = arith.divf %16, %17 : vector<2x56xf32>
    %19 = tpu.concatenate %18, %5 in 1 : vector<2x56xf32>, vector<2x72xf32> -> vector<2x128xf32>
    %c0_8 = arith.constant 0 : index
    %c0_9 = arith.constant 0 : index
    %c0_10 = arith.constant 0 : index
    %20 = vector.load %arg5[%c0_8, %c0_9, %c0_10] : memref<8x2x128xf32, #tpu.memory_space<vmem>>, vector<1x2x128xf32>
    %21 = vector.shape_cast %20 : vector<1x2x128xf32> to vector<2x128xf32>
    %22 = vector.shape_cast %19 : vector<2x128xf32> to vector<1x2x128xf32>
    tpu.vector_store %arg5[%c0_8, %c0_9, %c0_10], %22 {strides = array<i32>} : memref<8x2x128xf32, #tpu.memory_space<vmem>>, vector<1x2x128xf32>,
    %23 = arith.truncf %18 : vector<2x56xf32> to vector<2x56xbf16>
    %24 = vector.shape_cast %23 : vector<2x56xbf16> to vector<2x1x56xbf16>
    %25 = vector.extract_strided_slice %0 {offsets = [0, 0, 0, 0], sizes = [1, 2, 56, 128], strides = [1, 1, 1, 1]} : vector<8x2x56x128xbf16> to vector<1x2x56x128xbf16>
    %26 = vector.shape_cast %25 : vector<1x2x56x128xbf16> to vector<2x56x128xbf16>
    %cst_11 = arith.constant dense<0.000000e+00> : vector<2x1x128xf32>
    %27 = tpu.matmul %24, %26, %cst_11 {dimension_numbers = #tpu.dot_dimension_numbers<[2], [1], [1], [2], [0, 0, 0, 1, 1, 2], [0], [0]>} : vector<2x1x56xbf16>, vector<2x56x128xbf16>, vector<2x1x128xf32> -> vector<2x1x128xf32>
    %28 = vector.shape_cast %27 : vector<2x1x128xf32> to vector<2x128xf32>
    %cst_12 = arith.constant 0.0204081628 : f32
    %29 = vector.broadcast %cst_12 : f32 to vector<2x128xf32>
    %30 = arith.mulf %28, %29 : vector<2x128xf32>
    %c0_13 = arith.constant 0 : index
    %c0_14 = arith.constant 0 : index
    %c0_15 = arith.constant 0 : index
    %31 = vector.load %arg4[%c0_13, %c0_14, %c0_15] : memref<8x2x128xf32, #tpu.memory_space<vmem>>, vector<1x2x128xf32>
    %32 = vector.shape_cast %31 : vector<1x2x128xf32> to vector<2x128xf32>
    %33 = vector.shape_cast %30 : vector<2x128xf32> to vector<1x2x128xf32>
    tpu.vector_store %arg4[%c0_13, %c0_14, %c0_15], %33 {strides = array<i32>} : memref<8x2x128xf32, #tpu.memory_space<vmem>>, vector<1x2x128xf32>,
    %c8_i32_16 = arith.constant 8 : i32
    %34 = arith.muli %arg0, %c8_i32_16 : i32
    %c1_i32 = arith.constant 1 : i32
    %35 = arith.addi %34, %c1_i32 : i32
    %36 = arith.index_cast %35 : i32 to index
    %37 = memref.load %arg3[%36] : memref<24xf32, #tpu.memory_space<smem>>
    %38 = vector.extract_strided_slice %4 {offsets = [112, 1], sizes = [112, 1], strides = [1, 1]} : vector<896x8xf32> to vector<112x1xf32>
    %39 = vector.shape_cast %38 : vector<112x1xf32> to vector<2x56xf32>
    %40 = vector.broadcast %37 : f32 to vector<2x56xf32>
    %41 = arith.addf %39, %40 : vector<2x56xf32>
    %42 = arith.negf %41 : vector<2x56xf32>
    %43 = math.exp %42 : vector<2x56xf32>
    %cst_17 = arith.constant 1.000000e+00 : f32
    %44 = vector.broadcast %cst_17 : f32 to vector<2x56xf32>
    %45 = arith.addf %44, %43 : vector<2x56xf32>
    %46 = arith.divf %44, %45 : vector<2x56xf32>
    %47 = tpu.concatenate %46, %5 in 1 : vector<2x56xf32>, vector<2x72xf32> -> vector<2x128xf32>
    %c1 = arith.constant 1 : index
    %c0_18 = arith.constant 0 : index
    %c0_19 = arith.constant 0 : index
    %48 = vector.load %arg5[%c1, %c0_18, %c0_19] : memref<8x2x128xf32, #tpu.memory_space<vmem>>, vector<1x2x128xf32>
    %49 = vector.shape_cast %48 : vector<1x2x128xf32> to vector<2x128xf32>
    %50 = vector.shape_cast %47 : vector<2x128xf32> to vector<1x2x128xf32>
    tpu.vector_store %arg5[%c1, %c0_18, %c0_19], %50 {strides = array<i32>} : memref<8x2x128xf32, #tpu.memory_space<vmem>>, vector<1x2x128xf32>,
    %51 = arith.truncf %46 : vector<2x56xf32> to vector<2x56xbf16>
    %52 = vector.shape_cast %51 : vector<2x56xbf16> to vector<2x1x56xbf16>
    %53 = vector.extract_strided_slice %0 {offsets = [1, 0, 0, 0], sizes = [1, 2, 56, 128], strides = [1, 1, 1, 1]} : vector<8x2x56x128xbf16> to vector<1x2x56x128xbf16>
    %54 = vector.shape_cast %53 : vector<1x2x56x128xbf16> to vector<2x56x128xbf16>
    %cst_20 = arith.constant dense<0.000000e+00> : vector<2x1x128xf32>
    %55 = tpu.matmul %52, %54, %cst_20 {dimension_numbers = #tpu.dot_dimension_numbers<[2], [1], [1], [2], [0, 0, 0, 1, 1, 2], [0], [0]>} : vector<2x1x56xbf16>, vector<2x56x128xbf16>, vector<2x1x128xf32> -> vector<2x1x128xf32>
    %56 = vector.shape_cast %55 : vector<2x1x128xf32> to vector<2x128xf32>
    %cst_21 = arith.constant 0.0204081628 : f32
    %57 = vector.broadcast %cst_21 : f32 to vector<2x128xf32>
    %58 = arith.mulf %56, %57 : vector<2x128xf32>
    %c1_22 = arith.constant 1 : index
    %c0_23 = arith.constant 0 : index
    %c0_24 = arith.constant 0 : index
    %59 = vector.load %arg4[%c1_22, %c0_23, %c0_24] : memref<8x2x128xf32, #tpu.memory_space<vmem>>, vector<1x2x128xf32>
    %60 = vector.shape_cast %59 : vector<1x2x128xf32> to vector<2x128xf32>
    %61 = vector.shape_cast %58 : vector<2x128xf32> to vector<1x2x128xf32>
    tpu.vector_store %arg4[%c1_22, %c0_23, %c0_24], %61 {strides = array<i32>} : memref<8x2x128xf32, #tpu.memory_space<vmem>>, vector<1x2x128xf32>,
    %c8_i32_25 = arith.constant 8 : i32
    %62 = arith.muli %arg0, %c8_i32_25 : i32
    %c2_i32 = arith.constant 2 : i32
    %63 = arith.addi %62, %c2_i32 : i32
    %64 = arith.index_cast %63 : i32 to index
    %65 = memref.load %arg3[%64] : memref<24xf32, #tpu.memory_space<smem>>
    %66 = vector.extract_strided_slice %4 {offsets = [224, 2], sizes = [112, 1], strides = [1, 1]} : vector<896x8xf32> to vector<112x1xf32>
    %67 = vector.shape_cast %66 : vector<112x1xf32> to vector<2x56xf32>
    %68 = vector.broadcast %65 : f32 to vector<2x56xf32>
    %69 = arith.addf %67, %68 : vector<2x56xf32>
    %70 = arith.negf %69 : vector<2x56xf32>
    %71 = math.exp %70 : vector<2x56xf32>
    %cst_26 = arith.constant 1.000000e+00 : f32
    %72 = vector.broadcast %cst_26 : f32 to vector<2x56xf32>
    %73 = arith.addf %72, %71 : vector<2x56xf32>
    %74 = arith.divf %72, %73 : vector<2x56xf32>
    %75 = tpu.concatenate %74, %5 in 1 : vector<2x56xf32>, vector<2x72xf32> -> vector<2x128xf32>
    %c2 = arith.constant 2 : index
    %c0_27 = arith.constant 0 : index
    %c0_28 = arith.constant 0 : index
    %76 = vector.load %arg5[%c2, %c0_27, %c0_28] : memref<8x2x128xf32, #tpu.memory_space<vmem>>, vector<1x2x128xf32>
    %77 = vector.shape_cast %76 : vector<1x2x128xf32> to vector<2x128xf32>
    %78 = vector.shape_cast %75 : vector<2x128xf32> to vector<1x2x128xf32>
    tpu.vector_store %arg5[%c2, %c0_27, %c0_28], %78 {strides = array<i32>} : memref<8x2x128xf32, #tpu.memory_space<vmem>>, vector<1x2x128xf32>,
    %79 = arith.truncf %74 : vector<2x56xf32> to vector<2x56xbf16>
    %80 = vector.shape_cast %79 : vector<2x56xbf16> to vector<2x1x56xbf16>
    %81 = vector.extract_strided_slice %0 {offsets = [2, 0, 0, 0], sizes = [1, 2, 56, 128], strides = [1, 1, 1, 1]} : vector<8x2x56x128xbf16> to vector<1x2x56x128xbf16>
    %82 = vector.shape_cast %81 : vector<1x2x56x128xbf16> to vector<2x56x128xbf16>
    %cst_29 = arith.constant dense<0.000000e+00> : vector<2x1x128xf32>
    %83 = tpu.matmul %80, %82, %cst_29 {dimension_numbers = #tpu.dot_dimension_numbers<[2], [1], [1], [2], [0, 0, 0, 1, 1, 2], [0], [0]>} : vector<2x1x56xbf16>, vector<2x56x128xbf16>, vector<2x1x128xf32> -> vector<2x1x128xf32>
    %84 = vector.shape_cast %83 : vector<2x1x128xf32> to vector<2x128xf32>
    %cst_30 = arith.constant 0.0204081628 : f32
    %85 = vector.broadcast %cst_30 : f32 to vector<2x128xf32>
    %86 = arith.mulf %84, %85 : vector<2x128xf32>
    %c2_31 = arith.constant 2 : index
    %c0_32 = arith.constant 0 : index
    %c0_33 = arith.constant 0 : index
    %87 = vector.load %arg4[%c2_31, %c0_32, %c0_33] : memref<8x2x128xf32, #tpu.memory_space<vmem>>, vector<1x2x128xf32>
    %88 = vector.shape_cast %87 : vector<1x2x128xf32> to vector<2x128xf32>
    %89 = vector.shape_cast %86 : vector<2x128xf32> to vector<1x2x128xf32>
    tpu.vector_store %arg4[%c2_31, %c0_32, %c0_33], %89 {strides = array<i32>} : memref<8x2x128xf32, #tpu.memory_space<vmem>>, vector<1x2x128xf32>,
    %c8_i32_34 = arith.constant 8 : i32
    %90 = arith.muli %arg0, %c8_i32_34 : i32
    %c3_i32 = arith.constant 3 : i32
    %91 = arith.addi %90, %c3_i32 : i32
    %92 = arith.index_cast %91 : i32 to index
    %93 = memref.load %arg3[%92] : memref<24xf32, #tpu.memory_space<smem>>
    %94 = vector.extract_strided_slice %4 {offsets = [336, 3], sizes = [112, 1], strides = [1, 1]} : vector<896x8xf32> to vector<112x1xf32>
    %95 = vector.shape_cast %94 : vector<112x1xf32> to vector<2x56xf32>
    %96 = vector.broadcast %93 : f32 to vector<2x56xf32>
    %97 = arith.addf %95, %96 : vector<2x56xf32>
    %98 = arith.negf %97 : vector<2x56xf32>
    %99 = math.exp %98 : vector<2x56xf32>
    %cst_35 = arith.constant 1.000000e+00 : f32
    %100 = vector.broadcast %cst_35 : f32 to vector<2x56xf32>
    %101 = arith.addf %100, %99 : vector<2x56xf32>
    %102 = arith.divf %100, %101 : vector<2x56xf32>
    %103 = tpu.concatenate %102, %5 in 1 : vector<2x56xf32>, vector<2x72xf32> -> vector<2x128xf32>
    %c3 = arith.constant 3 : index
    %c0_36 = arith.constant 0 : index
    %c0_37 = arith.constant 0 : index
    %104 = vector.load %arg5[%c3, %c0_36, %c0_37] : memref<8x2x128xf32, #tpu.memory_space<vmem>>, vector<1x2x128xf32>
    %105 = vector.shape_cast %104 : vector<1x2x128xf32> to vector<2x128xf32>
    %106 = vector.shape_cast %103 : vector<2x128xf32> to vector<1x2x128xf32>
    tpu.vector_store %arg5[%c3, %c0_36, %c0_37], %106 {strides = array<i32>} : memref<8x2x128xf32, #tpu.memory_space<vmem>>, vector<1x2x128xf32>,
    %107 = arith.truncf %102 : vector<2x56xf32> to vector<2x56xbf16>
    %108 = vector.shape_cast %107 : vector<2x56xbf16> to vector<2x1x56xbf16>
    %109 = vector.extract_strided_slice %0 {offsets = [3, 0, 0, 0], sizes = [1, 2, 56, 128], strides = [1, 1, 1, 1]} : vector<8x2x56x128xbf16> to vector<1x2x56x128xbf16>
    %110 = vector.shape_cast %109 : vector<1x2x56x128xbf16> to vector<2x56x128xbf16>
    %cst_38 = arith.constant dense<0.000000e+00> : vector<2x1x128xf32>
    %111 = tpu.matmul %108, %110, %cst_38 {dimension_numbers = #tpu.dot_dimension_numbers<[2], [1], [1], [2], [0, 0, 0, 1, 1, 2], [0], [0]>} : vector<2x1x56xbf16>, vector<2x56x128xbf16>, vector<2x1x128xf32> -> vector<2x1x128xf32>
    %112 = vector.shape_cast %111 : vector<2x1x128xf32> to vector<2x128xf32>
    %cst_39 = arith.constant 0.0204081628 : f32
    %113 = vector.broadcast %cst_39 : f32 to vector<2x128xf32>
    %114 = arith.mulf %112, %113 : vector<2x128xf32>
    %c3_40 = arith.constant 3 : index
    %c0_41 = arith.constant 0 : index
    %c0_42 = arith.constant 0 : index
    %115 = vector.load %arg4[%c3_40, %c0_41, %c0_42] : memref<8x2x128xf32, #tpu.memory_space<vmem>>, vector<1x2x128xf32>
    %116 = vector.shape_cast %115 : vector<1x2x128xf32> to vector<2x128xf32>
    %117 = vector.shape_cast %114 : vector<2x128xf32> to vector<1x2x128xf32>
    tpu.vector_store %arg4[%c3_40, %c0_41, %c0_42], %117 {strides = array<i32>} : memref<8x2x128xf32, #tpu.memory_space<vmem>>, vector<1x2x128xf32>,
    %c8_i32_43 = arith.constant 8 : i32
    %118 = arith.muli %arg0, %c8_i32_43 : i32
    %c4_i32 = arith.constant 4 : i32
    %119 = arith.addi %118, %c4_i32 : i32
    %120 = arith.index_cast %119 : i32 to index
    %121 = memref.load %arg3[%120] : memref<24xf32, #tpu.memory_space<smem>>
    %122 = vector.extract_strided_slice %4 {offsets = [448, 4], sizes = [112, 1], strides = [1, 1]} : vector<896x8xf32> to vector<112x1xf32>
    %123 = vector.shape_cast %122 : vector<112x1xf32> to vector<2x56xf32>
    %124 = vector.broadcast %121 : f32 to vector<2x56xf32>
    %125 = arith.addf %123, %124 : vector<2x56xf32>
    %126 = arith.negf %125 : vector<2x56xf32>
    %127 = math.exp %126 : vector<2x56xf32>
    %cst_44 = arith.constant 1.000000e+00 : f32
    %128 = vector.broadcast %cst_44 : f32 to vector<2x56xf32>
    %129 = arith.addf %128, %127 : vector<2x56xf32>
    %130 = arith.divf %128, %129 : vector<2x56xf32>
    %131 = tpu.concatenate %130, %5 in 1 : vector<2x56xf32>, vector<2x72xf32> -> vector<2x128xf32>
    %c4 = arith.constant 4 : index
    %c0_45 = arith.constant 0 : index
    %c0_46 = arith.constant 0 : index
    %132 = vector.load %arg5[%c4, %c0_45, %c0_46] : memref<8x2x128xf32, #tpu.memory_space<vmem>>, vector<1x2x128xf32>
    %133 = vector.shape_cast %132 : vector<1x2x128xf32> to vector<2x128xf32>
    %134 = vector.shape_cast %131 : vector<2x128xf32> to vector<1x2x128xf32>
    tpu.vector_store %arg5[%c4, %c0_45, %c0_46], %134 {strides = array<i32>} : memref<8x2x128xf32, #tpu.memory_space<vmem>>, vector<1x2x128xf32>,
    %135 = arith.truncf %130 : vector<2x56xf32> to vector<2x56xbf16>
    %136 = vector.shape_cast %135 : vector<2x56xbf16> to vector<2x1x56xbf16>
    %137 = vector.extract_strided_slice %0 {offsets = [4, 0, 0, 0], sizes = [1, 2, 56, 128], strides = [1, 1, 1, 1]} : vector<8x2x56x128xbf16> to vector<1x2x56x128xbf16>
    %138 = vector.shape_cast %137 : vector<1x2x56x128xbf16> to vector<2x56x128xbf16>
    %cst_47 = arith.constant dense<0.000000e+00> : vector<2x1x128xf32>
    %139 = tpu.matmul %136, %138, %cst_47 {dimension_numbers = #tpu.dot_dimension_numbers<[2], [1], [1], [2], [0, 0, 0, 1, 1, 2], [0], [0]>} : vector<2x1x56xbf16>, vector<2x56x128xbf16>, vector<2x1x128xf32> -> vector<2x1x128xf32>
    %140 = vector.shape_cast %139 : vector<2x1x128xf32> to vector<2x128xf32>
    %cst_48 = arith.constant 0.0204081628 : f32
    %141 = vector.broadcast %cst_48 : f32 to vector<2x128xf32>
    %142 = arith.mulf %140, %141 : vector<2x128xf32>
    %c4_49 = arith.constant 4 : index
    %c0_50 = arith.constant 0 : index
    %c0_51 = arith.constant 0 : index
    %143 = vector.load %arg4[%c4_49, %c0_50, %c0_51] : memref<8x2x128xf32, #tpu.memory_space<vmem>>, vector<1x2x128xf32>
    %144 = vector.shape_cast %143 : vector<1x2x128xf32> to vector<2x128xf32>
    %145 = vector.shape_cast %142 : vector<2x128xf32> to vector<1x2x128xf32>
    tpu.vector_store %arg4[%c4_49, %c0_50, %c0_51], %145 {strides = array<i32>} : memref<8x2x128xf32, #tpu.memory_space<vmem>>, vector<1x2x128xf32>,
    %c8_i32_52 = arith.constant 8 : i32
    %146 = arith.muli %arg0, %c8_i32_52 : i32
    %c5_i32 = arith.constant 5 : i32
    %147 = arith.addi %146, %c5_i32 : i32
    %148 = arith.index_cast %147 : i32 to index
    %149 = memref.load %arg3[%148] : memref<24xf32, #tpu.memory_space<smem>>
    %150 = vector.extract_strided_slice %4 {offsets = [560, 5], sizes = [112, 1], strides = [1, 1]} : vector<896x8xf32> to vector<112x1xf32>
    %151 = vector.shape_cast %150 : vector<112x1xf32> to vector<2x56xf32>
    %152 = vector.broadcast %149 : f32 to vector<2x56xf32>
    %153 = arith.addf %151, %152 : vector<2x56xf32>
    %154 = arith.negf %153 : vector<2x56xf32>
    %155 = math.exp %154 : vector<2x56xf32>
    %cst_53 = arith.constant 1.000000e+00 : f32
    %156 = vector.broadcast %cst_53 : f32 to vector<2x56xf32>
    %157 = arith.addf %156, %155 : vector<2x56xf32>
    %158 = arith.divf %156, %157 : vector<2x56xf32>
    %159 = tpu.concatenate %158, %5 in 1 : vector<2x56xf32>, vector<2x72xf32> -> vector<2x128xf32>
    %c5 = arith.constant 5 : index
    %c0_54 = arith.constant 0 : index
    %c0_55 = arith.constant 0 : index
    %160 = vector.load %arg5[%c5, %c0_54, %c0_55] : memref<8x2x128xf32, #tpu.memory_space<vmem>>, vector<1x2x128xf32>
    %161 = vector.shape_cast %160 : vector<1x2x128xf32> to vector<2x128xf32>
    %162 = vector.shape_cast %159 : vector<2x128xf32> to vector<1x2x128xf32>
    tpu.vector_store %arg5[%c5, %c0_54, %c0_55], %162 {strides = array<i32>} : memref<8x2x128xf32, #tpu.memory_space<vmem>>, vector<1x2x128xf32>,
    %163 = arith.truncf %158 : vector<2x56xf32> to vector<2x56xbf16>
    %164 = vector.shape_cast %163 : vector<2x56xbf16> to vector<2x1x56xbf16>
    %165 = vector.extract_strided_slice %0 {offsets = [5, 0, 0, 0], sizes = [1, 2, 56, 128], strides = [1, 1, 1, 1]} : vector<8x2x56x128xbf16> to vector<1x2x56x128xbf16>
    %166 = vector.shape_cast %165 : vector<1x2x56x128xbf16> to vector<2x56x128xbf16>
    %cst_56 = arith.constant dense<0.000000e+00> : vector<2x1x128xf32>
    %167 = tpu.matmul %164, %166, %cst_56 {dimension_numbers = #tpu.dot_dimension_numbers<[2], [1], [1], [2], [0, 0, 0, 1, 1, 2], [0], [0]>} : vector<2x1x56xbf16>, vector<2x56x128xbf16>, vector<2x1x128xf32> -> vector<2x1x128xf32>
    %168 = vector.shape_cast %167 : vector<2x1x128xf32> to vector<2x128xf32>
    %cst_57 = arith.constant 0.0204081628 : f32
    %169 = vector.broadcast %cst_57 : f32 to vector<2x128xf32>
    %170 = arith.mulf %168, %169 : vector<2x128xf32>
    %c5_58 = arith.constant 5 : index
    %c0_59 = arith.constant 0 : index
    %c0_60 = arith.constant 0 : index
    %171 = vector.load %arg4[%c5_58, %c0_59, %c0_60] : memref<8x2x128xf32, #tpu.memory_space<vmem>>, vector<1x2x128xf32>
    %172 = vector.shape_cast %171 : vector<1x2x128xf32> to vector<2x128xf32>
    %173 = vector.shape_cast %170 : vector<2x128xf32> to vector<1x2x128xf32>
    tpu.vector_store %arg4[%c5_58, %c0_59, %c0_60], %173 {strides = array<i32>} : memref<8x2x128xf32, #tpu.memory_space<vmem>>, vector<1x2x128xf32>,
    %c8_i32_61 = arith.constant 8 : i32
    %174 = arith.muli %arg0, %c8_i32_61 : i32
    %c6_i32 = arith.constant 6 : i32
    %175 = arith.addi %174, %c6_i32 : i32
    %176 = arith.index_cast %175 : i32 to index
    %177 = memref.load %arg3[%176] : memref<24xf32, #tpu.memory_space<smem>>
    %178 = vector.extract_strided_slice %4 {offsets = [672, 6], sizes = [112, 1], strides = [1, 1]} : vector<896x8xf32> to vector<112x1xf32>
    %179 = vector.shape_cast %178 : vector<112x1xf32> to vector<2x56xf32>
    %180 = vector.broadcast %177 : f32 to vector<2x56xf32>
    %181 = arith.addf %179, %180 : vector<2x56xf32>
    %182 = arith.negf %181 : vector<2x56xf32>
    %183 = math.exp %182 : vector<2x56xf32>
    %cst_62 = arith.constant 1.000000e+00 : f32
    %184 = vector.broadcast %cst_62 : f32 to vector<2x56xf32>
    %185 = arith.addf %184, %183 : vector<2x56xf32>
    %186 = arith.divf %184, %185 : vector<2x56xf32>
    %187 = tpu.concatenate %186, %5 in 1 : vector<2x56xf32>, vector<2x72xf32> -> vector<2x128xf32>
    %c6 = arith.constant 6 : index
    %c0_63 = arith.constant 0 : index
    %c0_64 = arith.constant 0 : index
    %188 = vector.load %arg5[%c6, %c0_63, %c0_64] : memref<8x2x128xf32, #tpu.memory_space<vmem>>, vector<1x2x128xf32>
    %189 = vector.shape_cast %188 : vector<1x2x128xf32> to vector<2x128xf32>
    %190 = vector.shape_cast %187 : vector<2x128xf32> to vector<1x2x128xf32>
    tpu.vector_store %arg5[%c6, %c0_63, %c0_64], %190 {strides = array<i32>} : memref<8x2x128xf32, #tpu.memory_space<vmem>>, vector<1x2x128xf32>,
    %191 = arith.truncf %186 : vector<2x56xf32> to vector<2x56xbf16>
    %192 = vector.shape_cast %191 : vector<2x56xbf16> to vector<2x1x56xbf16>
    %193 = vector.extract_strided_slice %0 {offsets = [6, 0, 0, 0], sizes = [1, 2, 56, 128], strides = [1, 1, 1, 1]} : vector<8x2x56x128xbf16> to vector<1x2x56x128xbf16>
    %194 = vector.shape_cast %193 : vector<1x2x56x128xbf16> to vector<2x56x128xbf16>
    %cst_65 = arith.constant dense<0.000000e+00> : vector<2x1x128xf32>
    %195 = tpu.matmul %192, %194, %cst_65 {dimension_numbers = #tpu.dot_dimension_numbers<[2], [1], [1], [2], [0, 0, 0, 1, 1, 2], [0], [0]>} : vector<2x1x56xbf16>, vector<2x56x128xbf16>, vector<2x1x128xf32> -> vector<2x1x128xf32>
    %196 = vector.shape_cast %195 : vector<2x1x128xf32> to vector<2x128xf32>
    %cst_66 = arith.constant 0.0204081628 : f32
    %197 = vector.broadcast %cst_66 : f32 to vector<2x128xf32>
    %198 = arith.mulf %196, %197 : vector<2x128xf32>
    %c6_67 = arith.constant 6 : index
    %c0_68 = arith.constant 0 : index
    %c0_69 = arith.constant 0 : index
    %199 = vector.load %arg4[%c6_67, %c0_68, %c0_69] : memref<8x2x128xf32, #tpu.memory_space<vmem>>, vector<1x2x128xf32>
    %200 = vector.shape_cast %199 : vector<1x2x128xf32> to vector<2x128xf32>
    %201 = vector.shape_cast %198 : vector<2x128xf32> to vector<1x2x128xf32>
    tpu.vector_store %arg4[%c6_67, %c0_68, %c0_69], %201 {strides = array<i32>} : memref<8x2x128xf32, #tpu.memory_space<vmem>>, vector<1x2x128xf32>,
    %c8_i32_70 = arith.constant 8 : i32
    %202 = arith.muli %arg0, %c8_i32_70 : i32
    %c7_i32 = arith.constant 7 : i32
    %203 = arith.addi %202, %c7_i32 : i32
    %204 = arith.index_cast %203 : i32 to index
    %205 = memref.load %arg3[%204] : memref<24xf32, #tpu.memory_space<smem>>
    %206 = vector.extract_strided_slice %4 {offsets = [784, 7], sizes = [112, 1], strides = [1, 1]} : vector<896x8xf32> to vector<112x1xf32>
    %207 = vector.shape_cast %206 : vector<112x1xf32> to vector<2x56xf32>
    %208 = vector.broadcast %205 : f32 to vector<2x56xf32>
    %209 = arith.addf %207, %208 : vector<2x56xf32>
    %210 = arith.negf %209 : vector<2x56xf32>
    %211 = math.exp %210 : vector<2x56xf32>
    %cst_71 = arith.constant 1.000000e+00 : f32
    %212 = vector.broadcast %cst_71 : f32 to vector<2x56xf32>
    %213 = arith.addf %212, %211 : vector<2x56xf32>
    %214 = arith.divf %212, %213 : vector<2x56xf32>
    %215 = tpu.concatenate %214, %5 in 1 : vector<2x56xf32>, vector<2x72xf32> -> vector<2x128xf32>
    %c7 = arith.constant 7 : index
    %c0_72 = arith.constant 0 : index
    %c0_73 = arith.constant 0 : index
    %216 = vector.load %arg5[%c7, %c0_72, %c0_73] : memref<8x2x128xf32, #tpu.memory_space<vmem>>, vector<1x2x128xf32>
    %217 = vector.shape_cast %216 : vector<1x2x128xf32> to vector<2x128xf32>
    %218 = vector.shape_cast %215 : vector<2x128xf32> to vector<1x2x128xf32>
    tpu.vector_store %arg5[%c7, %c0_72, %c0_73], %218 {strides = array<i32>} : memref<8x2x128xf32, #tpu.memory_space<vmem>>, vector<1x2x128xf32>,
    %219 = arith.truncf %214 : vector<2x56xf32> to vector<2x56xbf16>
    %220 = vector.shape_cast %219 : vector<2x56xbf16> to vector<2x1x56xbf16>
    %221 = vector.extract_strided_slice %0 {offsets = [7, 0, 0, 0], sizes = [1, 2, 56, 128], strides = [1, 1, 1, 1]} : vector<8x2x56x128xbf16> to vector<1x2x56x128xbf16>
    %222 = vector.shape_cast %221 : vector<1x2x56x128xbf16> to vector<2x56x128xbf16>
    %cst_74 = arith.constant dense<0.000000e+00> : vector<2x1x128xf32>
    %223 = tpu.matmul %220, %222, %cst_74 {dimension_numbers = #tpu.dot_dimension_numbers<[2], [1], [1], [2], [0, 0, 0, 1, 1, 2], [0], [0]>} : vector<2x1x56xbf16>, vector<2x56x128xbf16>, vector<2x1x128xf32> -> vector<2x1x128xf32>
    %224 = vector.shape_cast %223 : vector<2x1x128xf32> to vector<2x128xf32>
    %cst_75 = arith.constant 0.0204081628 : f32
    %225 = vector.broadcast %cst_75 : f32 to vector<2x128xf32>
    %226 = arith.mulf %224, %225 : vector<2x128xf32>
    %c7_76 = arith.constant 7 : index
    %c0_77 = arith.constant 0 : index
    %c0_78 = arith.constant 0 : index
    %227 = vector.load %arg4[%c7_76, %c0_77, %c0_78] : memref<8x2x128xf32, #tpu.memory_space<vmem>>, vector<1x2x128xf32>
    %228 = vector.shape_cast %227 : vector<1x2x128xf32> to vector<2x128xf32>
    %229 = vector.shape_cast %226 : vector<2x128xf32> to vector<1x2x128xf32>
    tpu.vector_store %arg4[%c7_76, %c0_77, %c0_78], %229 {strides = array<i32>} : memref<8x2x128xf32, #tpu.memory_space<vmem>>, vector<1x2x128xf32>,
    return
  }
  func.func @transform_0(%arg0: i32) -> (i32, i32, i32, i32) {
    %c0_i32 = arith.constant 0 : i32
    %c0_i32_0 = arith.constant 0 : i32
    %c0_i32_1 = arith.constant 0 : i32
    %c0_i32_2 = arith.constant 0 : i32
    return %arg0, %c0_i32, %c0_i32_0, %c0_i32_1 : i32, i32, i32, i32
  }
  func.func @transform_1(%arg0: i32) -> (i32, i32, i32) {
    %c0_i32 = arith.constant 0 : i32
    %c0_i32_0 = arith.constant 0 : i32
    %c0_i32_1 = arith.constant 0 : i32
    return %arg0, %c0_i32, %c0_i32_0 : i32, i32, i32
  }
  func.func @transform_2(%arg0: i32) -> i32 {
    %c0_i32 = arith.constant 0 : i32
    %c0_i32_0 = arith.constant 0 : i32
    return %c0_i32 : i32
  }
  func.func @transform_3(%arg0: i32) -> (i32, i32, i32) {
    %c0_i32 = arith.constant 0 : i32
    %c0_i32_0 = arith.constant 0 : i32
    %c0_i32_1 = arith.constant 0 : i32
    return %arg0, %c0_i32, %c0_i32_0 : i32, i32, i32
  }
  func.func @transform_4(%arg0: i32) -> (i32, i32, i32) {
    %c0_i32 = arith.constant 0 : i32
    %c0_i32_0 = arith.constant 0 : i32
    %c0_i32_1 = arith.constant 0 : i32
    return %arg0, %c0_i32, %c0_i32_0 : i32, i32, i32
  }
}

</mosaic_0001>

<llo_original>
// kernel: tpu_custom_call.1
$region0: #{tpu_custom_call.1}
  #allocation0 [shape = 'u32[]', space=smem, size = 0x4, offset = 0x4, fixed_abs, tag = 'smem constant byte address 0x4 - core index']
  #allocation1 [shape = 'u32[72,128]{1,0:T(1,128)}', space=vmem, size = 0x9000, scoped, tag = 'internal scratch']
  %s0 = inlined_call_operand.hbm [shape: bf16[24,2,56,128], index: 0, kind: input, shape index: {}]
  %s1 = inlined_call_operand.vmem [shape: bf16[3,128,8], index: 1, kind: input, shape index: {}]
  %s2 = inlined_call_operand.vmem [shape: f32[24], index: 2, kind: input, shape index: {}]
  %s3 = inlined_call_operand.hbm [shape: f32[24,2,128], index: 3, kind: output, shape index: {0}]
  %s4 = inlined_call_operand.hbm [shape: f32[24,2,128], index: 4, kind: output, shape index: {1}]
  %5 = xla_tuple %s3, %s4
  %s6 = sld [smem:[#allocation0]]
  $region61: #{tpu_custom_call.1} parent=0
    _
  %s8 = ssub.s32 1, %s6
  %s9 = scalar_select 0, %s8, %s6
  $region1: #{tpu_custom_call.1} parent=0
    #allocation2 [shape = 'u8[458752]{0}', space=vmem, size = 0x70000, scoped, tag = 'input window, operand 0']
    #allocation3 [shape = 's32[2]{0}', space=sflag, size = 0x8, scoped, tag = 'scoped memory for tpu_custom_call.1']
    #allocation4 [shape = 's32[2]{0}', space=sflag, size = 0x8, scoped, tag = 'scoped memory for tpu_custom_call.1']
    #allocation5 [shape = 's32[2]{0}', space=sflag, size = 0x8, scoped, tag = 'scoped memory for tpu_custom_call.1']
    #allocation6 [shape = 'u8[512]{0}', space=smem, size = 0x200, scoped, tag = 'input window, operand 2, single buffered']
    #allocation7 [shape = 'u8[16384]{0}', space=vmem, size = 0x4000, scoped, tag = 'output window, operand 0']
    #allocation8 [shape = 'u8[16384]{0}', space=vmem, size = 0x4000, scoped, tag = 'output window, operand 1']
    #allocation9 [shape = 's32[2]{0}', space=sflag, size = 0x8, scoped, tag = 'scoped memory for tpu_custom_call.1']
    %10 = vsyncpa [#allocation3], 0
    %s11 = scalar_lea.sflag [#allocation3], 1
    %12 = vsyncpa %s11, 0
    %13 = vsyncpa [#allocation5], 0
    %14 = vsyncpa [#allocation4], 0
    %s15 = scalar_lea.sflag [#allocation4], 1
    %16 = vsyncpa %s15, 0
    %17 = vsyncpa [#allocation9], 0
    %s18 = scalar_lea.sflag [#allocation9], 1
    %19 = vsyncpa %s18, 0
    loop: start=0, step=1, limit=5
    $region2: #{tpu_custom_call.1} parent=1 // loop_pre_header
      _
    $region3: #{tpu_custom_call.1} parent=1 // loop_header
      %s21 = sphi 0, %s25
      %p22 = scmp.ge.s32.totalorder %s21, 5
      %s31 = sphi 0, %s33
      %s34 = sphi 0, %s31
      %s35 = sphi 0, %s34
      %s51 = sphi 0, %s35
      %s57 = sphi 0, %s59
      %s60 = sphi 0, %s57
      %s61 = sphi 0, %s60
      %s77 = sphi 0, %s61
      %s81 = sphi 0, %s81
      %s83 = sphi 0, %s81
      %s84 = sphi 0, %s83
      %s98 = sphi 0, %s84
      %s104 = sphi 0, %s106
      %s107 = sphi 0, %s104
      %s108 = sphi 0, %s107
      %s124 = sphi 0, %s108
      %s130 = sphi 0, %s132
      %s133 = sphi 0, %s130
      %s134 = sphi 0, %s133
      %s150 = sphi 0, %s134
    $region4: #{tpu_custom_call.1} parent=1 // loop_header_branch
      %24 = sbr.rel (%p22) target = $region8
    $region5: #{tpu_custom_call.1} parent=1 // loop_body
      %s26 = ssub.s32 %s21, 1
      %s27 = ssub.s32 %s21, 2
      %s28 = sadd.s32 %s21, 1
      %s29 = ssub.s32 %s21, %s28
      %p30 = scmp.eq.s32.totalorder %s29, 0
      %s32 = sadd.s32 %s31, 1
      %s33 = scalar_select %p30, %s31, %s32
      %p36 = pneg %p30
      %p37 = scmp.eq.s32.totalorder %s21, 2
      %p38 = por %p36, %p37
      %p39 = scmp.ne.s32.totalorder %s31, %s34
      %p40 = scmp.eq.s32.totalorder %s21, 0
      %p41 = por %p39, %p40
      %p42 = scmp.ne.s32.totalorder %s31, %s34
      %p43 = scmp.eq.s32.totalorder %s26, 2
      %p44 = por %p42, %p43
      %p45 = scmp.ne.s32.totalorder %s34, %s35
      %p46 = scmp.eq.s32.totalorder %s26, 0
      %p47 = por %p45, %p46
      %p48 = scmp.ne.s32.totalorder %s34, %s35
      %p49 = scmp.eq.s32.totalorder %s27, 2
      %p50 = por %p48, %p49
      %p52 = scmp.ne.s32.totalorder %s35, %s51
      %p53 = scmp.eq.s32.totalorder %s27, 0
      %p54 = por %p52, %p53
      %s55 = ssub.s32 %s21, %s28
      %p56 = scmp.eq.s32.totalorder %s55, 0
      %s58 = sadd.s32 %s57, 1
      %s59 = scalar_select %p56, %s57, %s58
      %p62 = pneg %p56
      %p63 = scmp.eq.s32.totalorder %s21, 2
      %p64 = por %p62, %p63
      %p65 = scmp.ne.s32.totalorder %s57, %s60
      %p66 = scmp.eq.s32.totalorder %s21, 0
      %p67 = por %p65, %p66
      %p68 = scmp.ne.s32.totalorder %s57, %s60
      %p69 = scmp.eq.s32.totalorder %s26, 2
      %p70 = por %p68, %p69
      %p71 = scmp.ne.s32.totalorder %s60, %s61
      %p72 = scmp.eq.s32.totalorder %s26, 0
      %p73 = por %p71, %p72
      %p74 = scmp.ne.s32.totalorder %s60, %s61
      %p75 = scmp.eq.s32.totalorder %s27, 2
      %p76 = por %p74, %p75
      %p78 = scmp.ne.s32.totalorder %s61, %s77
      %p79 = scmp.eq.s32.totalorder %s27, 0
      %p80 = por %p78, %p79
      %s82 = sadd.s32 %s81, 1
      %p85 = scmp.eq.s32.totalorder %s21, 2
      %p86 = scmp.ne.s32.totalorder %s81, %s83
      %p87 = scmp.eq.s32.totalorder %s21, 0
      %p88 = por %p86, %p87
      %p89 = scmp.ne.s32.totalorder %s81, %s83
      %p90 = scmp.eq.s32.totalorder %s26, 2
      %p91 = por %p89, %p90
      %p92 = scmp.ne.s32.totalorder %s83, %s84
      %p93 = scmp.eq.s32.totalorder %s26, 0
      %p94 = por %p92, %p93
      %p95 = scmp.ne.s32.totalorder %s83, %s84
      %p96 = scmp.eq.s32.totalorder %s27, 2
      %p97 = por %p95, %p96
      %p99 = scmp.ne.s32.totalorder %s84, %s98
      %p100 = scmp.eq.s32.totalorder %s27, 0
      %p101 = por %p99, %p100
      %s102 = ssub.s32 %s21, %s28
      %p103 = scmp.eq.s32.totalorder %s102, 0
      %s105 = sadd.s32 %s104, 1
      %s106 = scalar_select %p103, %s104, %s105
      %p109 = pneg %p103
      %p110 = scmp.eq.s32.totalorder %s21, 2
      %p111 = por %p109, %p110
      %p112 = scmp.ne.s32.totalorder %s104, %s107
      %p113 = scmp.eq.s32.totalorder %s21, 0
      %p114 = por %p112, %p113
      %p115 = scmp.ne.s32.totalorder %s104, %s107
      %p116 = scmp.eq.s32.totalorder %s26, 2
      %p117 = por %p115, %p116
      %p118 = scmp.ne.s32.totalorder %s107, %s108
      %p119 = scmp.eq.s32.totalorder %s26, 0
      %p120 = por %p118, %p119
      %p121 = scmp.ne.s32.totalorder %s107, %s108
      %p122 = scmp.eq.s32.totalorder %s27, 2
      %p123 = por %p121, %p122
      %p125 = scmp.ne.s32.totalorder %s108, %s124
      %p126 = scmp.eq.s32.totalorder %s27, 0
      %p127 = por %p125, %p126
      %s128 = ssub.s32 %s21, %s28
      %p129 = scmp.eq.s32.totalorder %s128, 0
      %s131 = sadd.s32 %s130, 1
      %s132 = scalar_select %p129, %s130, %s131
      %p135 = pneg %p129
      %p136 = scmp.eq.s32.totalorder %s21, 2
      %p137 = por %p135, %p136
      %p138 = scmp.ne.s32.totalorder %s130, %s133
      %p139 = scmp.eq.s32.totalorder %s21, 0
      %p140 = por %p138, %p139
      %p141 = scmp.ne.s32.totalorder %s130, %s133
      %p142 = scmp.eq.s32.totalorder %s26, 2
      %p143 = por %p141, %p142
      %p144 = scmp.ne.s32.totalorder %s133, %s134
      %p145 = scmp.eq.s32.totalorder %s26, 0
      %p146 = por %p144, %p145
      %p147 = scmp.ne.s32.totalorder %s133, %s134
      %p148 = scmp.eq.s32.totalorder %s27, 2
      %p149 = por %p147, %p148
      %p151 = scmp.ne.s32.totalorder %s134, %s150
      %p152 = scmp.eq.s32.totalorder %s27, 0
      %p153 = por %p151, %p152
      %p154 = scmp.le.s32.totalorder 1, %s21
      %p155 = scmp.lt.s32.totalorder %s21, 4
      %p156 = pnand %p154, %p155
      %p157 = pneg %p156
      // Predicated region
      $region9: #{tpu_custom_call.1} parent=5 // pred_check
        _
      $region10: #{tpu_custom_call.1} parent=5 // pred_check_branch
        %159 = sbr.rel (%p156) target = $region12
      $region11: #{tpu_custom_call.1} parent=5 // pred_region
        %s160 = ssub.s32 %s21, 1
        // Predicated region
        $region13: #{tpu_custom_call.1} parent=11 // pred_check
          %p161 = pneg %p94
        $region14: #{tpu_custom_call.1} parent=11 // pred_check_branch
          %163 = sbr.rel (%p161) target = $region16
        $region15: #{tpu_custom_call.1} parent=11 // pred_region
          %165 = vsyncadd [#allocation5], 0
          %s167 = sshll.u32 %s2, 4
          %s168 = int_to_ptr.vmem [resolvable:$true] %s167
          %170 = dma.vmem_to_smem %s168, 16, [#allocation6], [#allocation5]
        $region16: #{tpu_custom_call.1} parent=11 // pred_fallthru
          _
      $region12: #{tpu_custom_call.1} parent=5 // pred_fallthru
        _
      %p171 = scmp.lt.s32.totalorder %s21, 3
      // Predicated region
      $region17: #{tpu_custom_call.1} parent=5 // pred_check
        %p172 = pneg %p171
      $region18: #{tpu_custom_call.1} parent=5 // pred_check_branch
        %174 = sbr.rel (%p172) target = $region20
      $region19: #{tpu_custom_call.1} parent=5 // pred_region
        // Predicated region
        $region21: #{tpu_custom_call.1} parent=19 // pred_check
          %p175 = pneg %p41
        $region22: #{tpu_custom_call.1} parent=19 // pred_check_branch
          %177 = sbr.rel (%p175) target = $region24
        $region23: #{tpu_custom_call.1} parent=19 // pred_region
          %s178 = sand.u32 %s31, 1
          %s179 = scalar_lea.sflag [#allocation3], %s178
          %s180 = sand.u32 %s31, 1
          %s181 = smul.addr %s180, 448
          %s182 = scalar_lea.vmem [#allocation2], %s181
          %s183 = smul.u32 8, %s21
          %185 = vsyncadd %s179, 0
          %s186 = smul.addr %s183, 14
          %s187 = smul.addr %s186, 4
          %s188 = scalar_lea.hbm %s0, %s187
          %s189 = sshll.u32 %s188, 4
          %s190 = int_to_ptr.hbm [resolvable:$true] %s189
          %s191 = sshll.u32 %s182, 4
          %s192 = int_to_ptr.vmem [resolvable:$true] %s191
          %197 = dma.hbm_to_vmem [thread:$0]  %s190, 7168, %s192, %s179, 64, 64, 4
        $region24: #{tpu_custom_call.1} parent=19 // pred_fallthru
          _
        // Predicated region
        $region25: #{tpu_custom_call.1} parent=19 // pred_check
          %p198 = pneg %p67
        $region26: #{tpu_custom_call.1} parent=19 // pred_check_branch
          %200 = sbr.rel (%p198) target = $region28
        $region27: #{tpu_custom_call.1} parent=19 // pred_region
          %p201 = scmp.lt.s32.totalorder %s21, 2
          %s202 = scalar_select %p201, %s21, 2
          %s203 = smul.addr %s202, 16
          %s204 = smul.addr %s203, 4
          %s205 = scalar_lea.vmem %s1, %s204
        $region28: #{tpu_custom_call.1} parent=19 // pred_fallthru
          _
      $region20: #{tpu_custom_call.1} parent=5 // pred_fallthru
        _
      %p206 = scmp.le.s32.totalorder 1, %s21
      %p207 = scmp.lt.s32.totalorder %s21, 4
      %p208 = pnand %p206, %p207
      %p209 = pneg %p208
      // Predicated region
      $region29: #{tpu_custom_call.1} parent=5 // pred_check
        _
      $region30: #{tpu_custom_call.1} parent=5 // pred_check_branch
        %211 = sbr.rel (%p208) target = $region32
      $region31: #{tpu_custom_call.1} parent=5 // pred_region
        %s212 = ssub.s32 %s21, 1
        %s213 = sand.u32 %s34, 1
        %s214 = scalar_lea.sflag [#allocation3], %s213
        %s215 = sand.u32 %s34, 1
        %s216 = smul.addr %s215, 448
        %s217 = scalar_lea.vmem [#allocation2], %s216
        // Predicated region
        $region33: #{tpu_custom_call.1} parent=31 // pred_check
          %p218 = pneg %p47
        $region34: #{tpu_custom_call.1} parent=31 // pred_check_branch
          %220 = sbr.rel (%p218) target = $region36
        $region35: #{tpu_custom_call.1} parent=31 // pred_region
          %222 = dma.done %s214, 7168
        $region36: #{tpu_custom_call.1} parent=31 // pred_fallthru
          _
        // Predicated region
        $region37: #{tpu_custom_call.1} parent=31 // pred_check
          %p223 = pneg %p94
        $region38: #{tpu_custom_call.1} parent=31 // pred_check_branch
          %225 = sbr.rel (%p223) target = $region40
        $region39: #{tpu_custom_call.1} parent=31 // pred_region
          %227 = dma.done [#allocation5], 16
        $region40: #{tpu_custom_call.1} parent=31 // pred_fallthru
          _
        %228 = sfence
        %s229 = sand.u32 %s34, 1
        %s230 = scalar_lea.sflag [#allocation3], %s229
        %s231 = sand.u32 %s34, 1
        %s232 = smul.addr %s231, 448
        %s233 = scalar_lea.vmem [#allocation2], %s232
        %p234 = pneg %p47
        %p235 = pneg %p44
        %p236 = scmp.lt.s32.totalorder %s26, 2
        %s237 = scalar_select %p236, %s26, 2
        %s238 = smul.addr %s237, 16
        %s239 = smul.addr %s238, 4
        %s240 = scalar_lea.vmem %s1, %s239
        %p241 = pneg %p73
        %p242 = pneg %p70
        %p243 = pneg %p94
        %p244 = pneg %p91
        %p245 = pneg %p120
        %p246 = pneg %p117
        %s247 = sand.u32 %s107, 1
        %s248 = scalar_lea.sflag [#allocation4], %s247
        %s249 = sand.u32 %s107, 1
        %s250 = smul.addr %s249, 16
        %s251 = scalar_lea.vmem [#allocation7], %s250
        %p252 = pneg %p146
        %p253 = pneg %p143
        %s254 = sand.u32 %s133, 1
        %s255 = scalar_lea.sflag [#allocation9], %s254
        %s256 = sand.u32 %s133, 1
        %s257 = smul.addr %s256, 16
        %s258 = scalar_lea.vmem [#allocation8], %s257
        %s259 = smul.u32 8, %s26
        %p260 = scmp.lt.s32.totalorder %s26, 2
        %s261 = scalar_select %p260, %s26, 2
        %s262 = smul.addr %s261, 16
        %s263 = smul.addr %s262, 4
        %s264 = scalar_lea.vmem %s1, %s263
        %s265 = smul.u32 8, %s26
        %s266 = smul.u32 8, %s26
        %v268 = vld [vmem:[%s217] sm:$0xf]
        %v269 = vld [vmem:[%s217 + $0x4] sm:$0xf]
        %v270 = vld [vmem:[%s217 + $0x8] sm:$0xf]
        %v271 = vld [vmem:[%s217 + $0xc] sm:$0xf]
        %v272 = vld [vmem:[%s217 + $0x10] sm:$0xf]
        %v273 = vld [vmem:[%s217 + $0x14] sm:$0xf]
        %v274 = vld [vmem:[%s217 + $0x18] sm:$0xf]
        %v275 = vld [vmem:[%s217 + $0x1c] sm:$0xf]
        %v276 = vld [vmem:[%s217 + $0x20] sm:$0xf]
        %v277 = vld [vmem:[%s217 + $0x24] sm:$0xf]
        %v278 = vld [vmem:[%s217 + $0x28] sm:$0xf]
        %v279 = vld [vmem:[%s217 + $0x2c] sm:$0xf]
        %v280 = vld [vmem:[%s217 + $0x30] sm:$0xf]
        %v281 = vld [vmem:[%s217 + $0x34] sm:$0xf]
        %v282 = vld [vmem:[%s217 + $0x38] sm:$0xf]
        %v283 = vld [vmem:[%s217 + $0x3c] sm:$0xf]
        %v284 = vld [vmem:[%s217 + $0x40] sm:$0xf]
        %v285 = vld [vmem:[%s217 + $0x44] sm:$0xf]
        %v286 = vld [vmem:[%s217 + $0x48] sm:$0xf]
        %v287 = vld [vmem:[%s217 + $0x4c] sm:$0xf]
        %v288 = vld [vmem:[%s217 + $0x50] sm:$0xf]
        %v289 = vld [vmem:[%s217 + $0x54] sm:$0xf]
        %v290 = vld [vmem:[%s217 + $0x58] sm:$0xf]
        %v291 = vld [vmem:[%s217 + $0x5c] sm:$0xf]
        %v292 = vld [vmem:[%s217 + $0x60] sm:$0xf]
        %v293 = vld [vmem:[%s217 + $0x64] sm:$0xf]
        %v294 = vld [vmem:[%s217 + $0x68] sm:$0xf]
        %v295 = vld [vmem:[%s217 + $0x6c] sm:$0xf]
        %v296 = vld [vmem:[%s217 + $0x70] sm:$0xf]
        %v297 = vld [vmem:[%s217 + $0x74] sm:$0xf]
        %v298 = vld [vmem:[%s217 + $0x78] sm:$0xf]
        %v299 = vld [vmem:[%s217 + $0x7c] sm:$0xf]
        %v300 = vld [vmem:[%s217 + $0x80] sm:$0xf]
        %v301 = vld [vmem:[%s217 + $0x84] sm:$0xf]
        %v302 = vld [vmem:[%s217 + $0x88] sm:$0xf]
        %v303 = vld [vmem:[%s217 + $0x8c] sm:$0xf]
        %v304 = vld [vmem:[%s217 + $0x90] sm:$0xf]
        %v305 = vld [vmem:[%s217 + $0x94] sm:$0xf]
        %v306 = vld [vmem:[%s217 + $0x98] sm:$0xf]
        %v307 = vld [vmem:[%s217 + $0x9c] sm:$0xf]
        %v308 = vld [vmem:[%s217 + $0xa0] sm:$0xf]
        %v309 = vld [vmem:[%s217 + $0xa4] sm:$0xf]
        %v310 = vld [vmem:[%s217 + $0xa8] sm:$0xf]
        %v311 = vld [vmem:[%s217 + $0xac] sm:$0xf]
        %v312 = vld [vmem:[%s217 + $0xb0] sm:$0xf]
        %v313 = vld [vmem:[%s217 + $0xb4] sm:$0xf]
        %v314 = vld [vmem:[%s217 + $0xb8] sm:$0xf]
        %v315 = vld [vmem:[%s217 + $0xbc] sm:$0xf]
        %v316 = vld [vmem:[%s217 + $0xc0] sm:$0xf]
        %v317 = vld [vmem:[%s217 + $0xc4] sm:$0xf]
        %v318 = vld [vmem:[%s217 + $0xc8] sm:$0xf]
        %v319 = vld [vmem:[%s217 + $0xcc] sm:$0xf]
        %v320 = vld [vmem:[%s217 + $0xd0] sm:$0xf]
        %v321 = vld [vmem:[%s217 + $0xd4] sm:$0xf]
        %v322 = vld [vmem:[%s217 + $0xd8] sm:$0xf]
        %v323 = vld [vmem:[%s217 + $0xdc] sm:$0xf]
        %v324 = vld [vmem:[%s217 + $0xe0] sm:$0xf]
        %v325 = vld [vmem:[%s217 + $0xe4] sm:$0xf]
        %v326 = vld [vmem:[%s217 + $0xe8] sm:$0xf]
        %v327 = vld [vmem:[%s217 + $0xec] sm:$0xf]
        %v328 = vld [vmem:[%s217 + $0xf0] sm:$0xf]
        %v329 = vld [vmem:[%s217 + $0xf4] sm:$0xf]
        %v330 = vld [vmem:[%s217 + $0xf8] sm:$0xf]
        %v331 = vld [vmem:[%s217 + $0xfc] sm:$0xf]
        %v332 = vld [vmem:[%s217 + $0x100] sm:$0xf]
        %v333 = vld [vmem:[%s217 + $0x104] sm:$0xf]
        %v334 = vld [vmem:[%s217 + $0x108] sm:$0xf]
        %v335 = vld [vmem:[%s217 + $0x10c] sm:$0xf]
        %v336 = vld [vmem:[%s217 + $0x110] sm:$0xf]
        %v337 = vld [vmem:[%s217 + $0x114] sm:$0xf]
        %v338 = vld [vmem:[%s217 + $0x118] sm:$0xf]
        %v339 = vld [vmem:[%s217 + $0x11c] sm:$0xf]
        %v340 = vld [vmem:[%s217 + $0x120] sm:$0xf]
        %v341 = vld [vmem:[%s217 + $0x124] sm:$0xf]
        %v342 = vld [vmem:[%s217 + $0x128] sm:$0xf]
        %v343 = vld [vmem:[%s217 + $0x12c] sm:$0xf]
        %v344 = vld [vmem:[%s217 + $0x130] sm:$0xf]
        %v345 = vld [vmem:[%s217 + $0x134] sm:$0xf]
        %v346 = vld [vmem:[%s217 + $0x138] sm:$0xf]
        %v347 = vld [vmem:[%s217 + $0x13c] sm:$0xf]
        %v348 = vld [vmem:[%s217 + $0x140] sm:$0xf]
        %v349 = vld [vmem:[%s217 + $0x144] sm:$0xf]
        %v350 = vld [vmem:[%s217 + $0x148] sm:$0xf]
        %v351 = vld [vmem:[%s217 + $0x14c] sm:$0xf]
        %v352 = vld [vmem:[%s217 + $0x150] sm:$0xf]
        %v353 = vld [vmem:[%s217 + $0x154] sm:$0xf]
        %v354 = vld [vmem:[%s217 + $0x158] sm:$0xf]
        %v355 = vld [vmem:[%s217 + $0x15c] sm:$0xf]
        %v356 = vld [vmem:[%s217 + $0x160] sm:$0xf]
        %v357 = vld [vmem:[%s217 + $0x164] sm:$0xf]
        %v358 = vld [vmem:[%s217 + $0x168] sm:$0xf]
        %v359 = vld [vmem:[%s217 + $0x16c] sm:$0xf]
        %v360 = vld [vmem:[%s217 + $0x170] sm:$0xf]
        %v361 = vld [vmem:[%s217 + $0x174] sm:$0xf]
        %v362 = vld [vmem:[%s217 + $0x178] sm:$0xf]
        %v363 = vld [vmem:[%s217 + $0x17c] sm:$0xf]
        %v364 = vld [vmem:[%s217 + $0x180] sm:$0xf]
        %v365 = vld [vmem:[%s217 + $0x184] sm:$0xf]
        %v366 = vld [vmem:[%s217 + $0x188] sm:$0xf]
        %v367 = vld [vmem:[%s217 + $0x18c] sm:$0xf]
        %v368 = vld [vmem:[%s217 + $0x190] sm:$0xf]
        %v369 = vld [vmem:[%s217 + $0x194] sm:$0xf]
        %v370 = vld [vmem:[%s217 + $0x198] sm:$0xf]
        %v371 = vld [vmem:[%s217 + $0x19c] sm:$0xf]
        %v372 = vld [vmem:[%s217 + $0x1a0] sm:$0xf]
        %v373 = vld [vmem:[%s217 + $0x1a4] sm:$0xf]
        %v374 = vld [vmem:[%s217 + $0x1a8] sm:$0xf]
        %v375 = vld [vmem:[%s217 + $0x1ac] sm:$0xf]
        %v376 = vld [vmem:[%s217 + $0x1b0] sm:$0xf]
        %v377 = vld [vmem:[%s217 + $0x1b4] sm:$0xf]
        %v378 = vld [vmem:[%s217 + $0x1b8] sm:$0xf]
        %v379 = vld [vmem:[%s217 + $0x1bc] sm:$0xf]
        %v380 = vld [vmem:[%s264] sm:$0xf]
        %v381 = vld [vmem:[%s264 + $0x4] sm:$0xf]
        %v382 = vld [vmem:[%s264 + $0x8] sm:$0xf]
        %v383 = vld [vmem:[%s264 + $0xc] sm:$0xf]
        %v384 = vld [vmem:[%s264 + $0x10] sm:$0xf]
        %v385 = vld [vmem:[%s264 + $0x14] sm:$0xf]
        %v386 = vld [vmem:[%s264 + $0x18] sm:$0xf]
        %v387 = vld [vmem:[%s264 + $0x1c] sm:$0xf]
        %v388 = vld [vmem:[%s264 + $0x20] sm:$0xf]
        %v389 = vld [vmem:[%s264 + $0x24] sm:$0xf]
        %v390 = vld [vmem:[%s264 + $0x28] sm:$0xf]
        %v391 = vld [vmem:[%s264 + $0x2c] sm:$0xf]
        %v392 = vld [vmem:[%s264 + $0x30] sm:$0xf]
        %v393 = vld [vmem:[%s264 + $0x34] sm:$0xf]
        %v394 = vld [vmem:[%s264 + $0x38] sm:$0xf]
        %v395 = vld [vmem:[%s264 + $0x3c] sm:$0xf]
        %v508 = vunpack.c.l.b16 %v268
        %v509 = vunpack.c.l.b16 %v269
        %v510 = vunpack.c.l.b16 %v270
        %v511 = vunpack.c.l.b16 %v271
        %v512 = vunpack.c.l.b16 %v272
        %v513 = vunpack.c.l.b16 %v273
        %v514 = vunpack.c.l.b16 %v274
        %v515 = vunpack.c.l.b16 %v275
        %v516 = vunpack.c.l.b16 %v276
        %v517 = vunpack.c.l.b16 %v277
        %v518 = vunpack.c.l.b16 %v278
        %v519 = vunpack.c.l.b16 %v279
        %v520 = vunpack.c.l.b16 %v280
        %v521 = vunpack.c.l.b16 %v281
        %v522 = vunpack.c.l.b16 %v282
        %v523 = vunpack.c.l.b16 %v283
        %v524 = vunpack.c.l.b16 %v284
        %v525 = vunpack.c.l.b16 %v285
        %v526 = vunpack.c.l.b16 %v286
        %v527 = vunpack.c.l.b16 %v287
        %v528 = vunpack.c.l.b16 %v288
        %v529 = vunpack.c.l.b16 %v289
        %v530 = vunpack.c.l.b16 %v290
        %v531 = vunpack.c.l.b16 %v291
        %v532 = vunpack.c.l.b16 %v292
        %v533 = vunpack.c.l.b16 %v293
        %v534 = vunpack.c.l.b16 %v294
        %v535 = vunpack.c.l.b16 %v295
        %v536 = vunpack.c.l.b16 %v296
        %v537 = vunpack.c.l.b16 %v297
        %v538 = vunpack.c.l.b16 %v298
        %v539 = vunpack.c.l.b16 %v299
        %v540 = vunpack.c.l.b16 %v300
        %v541 = vunpack.c.l.b16 %v301
        %v542 = vunpack.c.l.b16 %v302
        %v543 = vunpack.c.l.b16 %v303
        %v544 = vunpack.c.l.b16 %v304
        %v545 = vunpack.c.l.b16 %v305
        %v546 = vunpack.c.l.b16 %v306
        %v547 = vunpack.c.l.b16 %v307
        %v548 = vunpack.c.l.b16 %v308
        %v549 = vunpack.c.l.b16 %v309
        %v550 = vunpack.c.l.b16 %v310
        %v551 = vunpack.c.l.b16 %v311
        %v552 = vunpack.c.l.b16 %v312
        %v553 = vunpack.c.l.b16 %v313
        %v554 = vunpack.c.l.b16 %v314
        %v555 = vunpack.c.l.b16 %v315
        %v556 = vunpack.c.l.b16 %v316
        %v557 = vunpack.c.l.b16 %v317
        %v558 = vunpack.c.l.b16 %v318
        %v559 = vunpack.c.l.b16 %v319
        %v560 = vunpack.c.l.b16 %v320
        %v561 = vunpack.c.l.b16 %v321
        %v562 = vunpack.c.l.b16 %v322
        %v563 = vunpack.c.l.b16 %v323
        %v564 = vunpack.c.l.b16 %v324
        %v565 = vunpack.c.l.b16 %v325
        %v566 = vunpack.c.l.b16 %v326
        %v567 = vunpack.c.l.b16 %v327
        %v568 = vunpack.c.l.b16 %v328
        %v569 = vunpack.c.l.b16 %v329
        %v570 = vunpack.c.l.b16 %v330
        %v571 = vunpack.c.l.b16 %v331
        %v572 = vunpack.c.l.b16 %v332
        %v573 = vunpack.c.l.b16 %v333
        %v574 = vunpack.c.l.b16 %v334
        %v575 = vunpack.c.l.b16 %v335
        %v576 = vunpack.c.l.b16 %v336
        %v577 = vunpack.c.l.b16 %v337
        %v578 = vunpack.c.l.b16 %v338
        %v579 = vunpack.c.l.b16 %v339
        %v580 = vunpack.c.l.b16 %v340
        %v581 = vunpack.c.l.b16 %v341
        %v582 = vunpack.c.l.b16 %v342
        %v583 = vunpack.c.l.b16 %v343
        %v584 = vunpack.c.l.b16 %v344
        %v585 = vunpack.c.l.b16 %v345
        %v586 = vunpack.c.l.b16 %v346
        %v587 = vunpack.c.l.b16 %v347
        %v588 = vunpack.c.l.b16 %v348
        %v589 = vunpack.c.l.b16 %v349
        %v590 = vunpack.c.l.b16 %v350
        %v591 = vunpack.c.l.b16 %v351
        %v592 = vunpack.c.l.b16 %v352
        %v593 = vunpack.c.l.b16 %v353
        %v594 = vunpack.c.l.b16 %v354
        %v595 = vunpack.c.l.b16 %v355
        %v596 = vunpack.c.l.b16 %v356
        %v597 = vunpack.c.l.b16 %v357
        %v598 = vunpack.c.l.b16 %v358
        %v599 = vunpack.c.l.b16 %v359
        %v600 = vunpack.c.l.b16 %v360
        %v601 = vunpack.c.l.b16 %v361
        %v602 = vunpack.c.l.b16 %v362
        %v603 = vunpack.c.l.b16 %v363
        %v604 = vunpack.c.l.b16 %v364
        %v605 = vunpack.c.l.b16 %v365
        %v606 = vunpack.c.l.b16 %v366
        %v607 = vunpack.c.l.b16 %v367
        %v608 = vunpack.c.l.b16 %v368
        %v609 = vunpack.c.l.b16 %v369
        %v610 = vunpack.c.l.b16 %v370
        %v611 = vunpack.c.l.b16 %v371
        %v612 = vunpack.c.l.b16 %v372
        %v613 = vunpack.c.l.b16 %v373
        %v614 = vunpack.c.l.b16 %v374
        %v615 = vunpack.c.l.b16 %v375
        %v616 = vunpack.c.l.b16 %v376
        %v617 = vunpack.c.l.b16 %v377
        %v618 = vunpack.c.l.b16 %v378
        %v619 = vunpack.c.l.b16 %v379
        %v620 = vpack.c.b16 %v509, %v508
        %v621 = vpack.c.b16 %v511, %v510
        %v622 = vpack.c.b16 %v513, %v512
        %v623 = vpack.c.b16 %v515, %v514
        %v624 = vpack.c.b16 %v517, %v516
        %v625 = vpack.c.b16 %v519, %v518
        %v626 = vpack.c.b16 %v521, %v520
        %v627 = vpack.c.b16 %v523, %v522
        %v628 = vpack.c.b16 %v525, %v524
        %v629 = vpack.c.b16 %v527, %v526
        %v630 = vpack.c.b16 %v529, %v528
        %v631 = vpack.c.b16 %v531, %v530
        %v632 = vpack.c.b16 %v533, %v532
        %v633 = vpack.c.b16 %v535, %v534
        %v634 = vpack.c.b16 %v537, %v536
        %v635 = vpack.c.b16 %v539, %v538
        %v636 = vpack.c.b16 %v541, %v540
        %v637 = vpack.c.b16 %v543, %v542
        %v638 = vpack.c.b16 %v545, %v544
        %v639 = vpack.c.b16 %v547, %v546
        %v640 = vpack.c.b16 %v549, %v548
        %v641 = vpack.c.b16 %v551, %v550
        %v642 = vpack.c.b16 %v553, %v552
        %v643 = vpack.c.b16 %v555, %v554
        %v644 = vpack.c.b16 %v557, %v556
        %v645 = vpack.c.b16 %v559, %v558
        %v646 = vpack.c.b16 %v561, %v560
        %v647 = vpack.c.b16 %v563, %v562
        %v648 = vpack.c.b16 %v565, %v564
        %v649 = vpack.c.b16 %v567, %v566
        %v650 = vpack.c.b16 %v569, %v568
        %v651 = vpack.c.b16 %v571, %v570
        %v652 = vpack.c.b16 %v573, %v572
        %v653 = vpack.c.b16 %v575, %v574
        %v654 = vpack.c.b16 %v577, %v576
        %v655 = vpack.c.b16 %v579, %v578
        %v656 = vpack.c.b16 %v581, %v580
        %v657 = vpack.c.b16 %v583, %v582
        %v658 = vpack.c.b16 %v585, %v584
        %v659 = vpack.c.b16 %v587, %v586
        %v660 = vpack.c.b16 %v589, %v588
        %v661 = vpack.c.b16 %v591, %v590
        %v662 = vpack.c.b16 %v593, %v592
        %v663 = vpack.c.b16 %v595, %v594
        %v664 = vpack.c.b16 %v597, %v596
        %v665 = vpack.c.b16 %v599, %v598
        %v666 = vpack.c.b16 %v601, %v600
        %v667 = vpack.c.b16 %v603, %v602
        %v668 = vpack.c.b16 %v605, %v604
        %v669 = vpack.c.b16 %v607, %v606
        %v670 = vpack.c.b16 %v609, %v608
        %v671 = vpack.c.b16 %v611, %v610
        %v672 = vpack.c.b16 %v613, %v612
        %v673 = vpack.c.b16 %v615, %v614
        %v674 = vpack.c.b16 %v617, %v616
        %v675 = vpack.c.b16 %v619, %v618
        %v748 = vunpack.c.l.b16 %v380
        %v749 = vunpack.c.l.b16 %v381
        %v750 = vunpack.c.l.b16 %v382
        %v751 = vunpack.c.l.b16 %v383
        %v752 = vunpack.c.l.b16 %v384
        %v753 = vunpack.c.l.b16 %v385
        %v754 = vunpack.c.l.b16 %v386
        %v755 = vunpack.c.l.b16 %v387
        %v756 = vunpack.c.l.b16 %v388
        %v757 = vunpack.c.l.b16 %v389
        %v758 = vunpack.c.l.b16 %v390
        %v759 = vunpack.c.l.b16 %v391
        %v760 = vunpack.c.l.b16 %v392
        %v761 = vunpack.c.l.b16 %v393
        %v762 = vunpack.c.l.b16 %v394
        %v763 = vunpack.c.l.b16 %v395
        %v764 = vpack.c.b16 %v749, %v748
        %v765 = vpack.c.b16 %v751, %v750
        %v766 = vpack.c.b16 %v753, %v752
        %v767 = vpack.c.b16 %v755, %v754
        %v768 = vpack.c.b16 %v757, %v756
        %v769 = vpack.c.b16 %v759, %v758
        %v770 = vpack.c.b16 %v761, %v760
        %v771 = vpack.c.b16 %v763, %v762
        %780 = vmatpush.bf16.msra.mxu0 %v771
        %781 = vmatpush.bf16.msra.mxu0 %v770
        %782 = vmatpush.bf16.msra.mxu0 %v769
        %783 = vmatpush.bf16.msra.mxu0 %v768
        %784 = vmatpush.bf16.msra.mxu0 %v767
        %785 = vmatpush.bf16.msra.mxu0 %v766
        %786 = vmatpush.bf16.msra.mxu0 %v765
        %787 = vmatpush.bf16.msra.mxu0 %v764
        %788 = vmatmul.bf16.gmra.mxu0 %v620
        %v789 = vpop.f32.mrf.mxu0
        %v790 = vadd.f32 0.0, %v789
        %v791 = vpop.f32.mrf.mxu0
        %v792 = vadd.f32 0.0, %v791
        %793 = vmatmul.bf16.gmra.mxu0 %v621
        %v794 = vpop.f32.mrf.mxu0
        %v795 = vadd.f32 0.0, %v794
        %v796 = vpop.f32.mrf.mxu0
        %v797 = vadd.f32 0.0, %v796
        %798 = vmatmul.bf16.gmra.mxu0 %v622
        %v799 = vpop.f32.mrf.mxu0
        %v800 = vadd.f32 0.0, %v799
        %v801 = vpop.f32.mrf.mxu0
        %v802 = vadd.f32 0.0, %v801
        %803 = vmatmul.bf16.gmra.mxu0 %v623
        %v804 = vpop.f32.mrf.mxu0
        %v805 = vadd.f32 0.0, %v804
        %v806 = vpop.f32.mrf.mxu0
        %v807 = vadd.f32 0.0, %v806
        %808 = vmatmul.bf16.gmra.mxu0 %v624
        %v809 = vpop.f32.mrf.mxu0
        %v810 = vadd.f32 0.0, %v809
        %v811 = vpop.f32.mrf.mxu0
        %v812 = vadd.f32 0.0, %v811
        %813 = vmatmul.bf16.gmra.mxu0 %v625
        %v814 = vpop.f32.mrf.mxu0
        %v815 = vadd.f32 0.0, %v814
        %v816 = vpop.f32.mrf.mxu0
        %v817 = vadd.f32 0.0, %v816
        %818 = vmatmul.bf16.gmra.mxu0 %v626
        %v819 = vpop.f32.mrf.mxu0
        %v820 = vadd.f32 0.0, %v819
        %v821 = vpop.f32.mrf.mxu0
        %v822 = vadd.f32 0.0, %v821
        %823 = vmatmul.bf16.gmra.mxu0 %v627
        %v824 = vpop.f32.mrf.mxu0
        %v825 = vadd.f32 0.0, %v824
        %v826 = vpop.f32.mrf.mxu0
        %v827 = vadd.f32 0.0, %v826
        %828 = vmatmul.bf16.gmra.mxu0 %v628
        %v829 = vpop.f32.mrf.mxu0
        %v830 = vadd.f32 0.0, %v829
        %v831 = vpop.f32.mrf.mxu0
        %v832 = vadd.f32 0.0, %v831
        %833 = vmatmul.bf16.gmra.mxu0 %v629
        %v834 = vpop.f32.mrf.mxu0
        %v835 = vadd.f32 0.0, %v834
        %v836 = vpop.f32.mrf.mxu0
        %v837 = vadd.f32 0.0, %v836
        %838 = vmatmul.bf16.gmra.mxu0 %v630
        %v839 = vpop.f32.mrf.mxu0
        %v840 = vadd.f32 0.0, %v839
        %v841 = vpop.f32.mrf.mxu0
        %v842 = vadd.f32 0.0, %v841
        %843 = vmatmul.bf16.gmra.mxu0 %v631
        %v844 = vpop.f32.mrf.mxu0
        %v845 = vadd.f32 0.0, %v844
        %v846 = vpop.f32.mrf.mxu0
        %v847 = vadd.f32 0.0, %v846
        %848 = vmatmul.bf16.gmra.mxu0 %v632
        %v849 = vpop.f32.mrf.mxu0
        %v850 = vadd.f32 0.0, %v849
        %v851 = vpop.f32.mrf.mxu0
        %v852 = vadd.f32 0.0, %v851
        %853 = vmatmul.bf16.gmra.mxu0 %v633
        %v854 = vpop.f32.mrf.mxu0
        %v855 = vadd.f32 0.0, %v854
        %v856 = vpop.f32.mrf.mxu0
        %v857 = vadd.f32 0.0, %v856
        %858 = vmatmul.bf16.gmra.mxu0 %v634
        %v859 = vpop.f32.mrf.mxu0
        %v860 = vadd.f32 0.0, %v859
        %v861 = vpop.f32.mrf.mxu0
        %v862 = vadd.f32 0.0, %v861
        %863 = vmatmul.bf16.gmra.mxu0 %v635
        %v864 = vpop.f32.mrf.mxu0
        %v865 = vadd.f32 0.0, %v864
        %v866 = vpop.f32.mrf.mxu0
        %v867 = vadd.f32 0.0, %v866
        %868 = vmatmul.bf16.gmra.mxu0 %v636
        %v869 = vpop.f32.mrf.mxu0
        %v870 = vadd.f32 0.0, %v869
        %v871 = vpop.f32.mrf.mxu0
        %v872 = vadd.f32 0.0, %v871
        %873 = vmatmul.bf16.gmra.mxu0 %v637
        %v874 = vpop.f32.mrf.mxu0
        %v875 = vadd.f32 0.0, %v874
        %v876 = vpop.f32.mrf.mxu0
        %v877 = vadd.f32 0.0, %v876
        %878 = vmatmul.bf16.gmra.mxu0 %v638
        %v879 = vpop.f32.mrf.mxu0
        %v880 = vadd.f32 0.0, %v879
        %v881 = vpop.f32.mrf.mxu0
        %v882 = vadd.f32 0.0, %v881
        %883 = vmatmul.bf16.gmra.mxu0 %v639
        %v884 = vpop.f32.mrf.mxu0
        %v885 = vadd.f32 0.0, %v884
        %v886 = vpop.f32.mrf.mxu0
        %v887 = vadd.f32 0.0, %v886
        %888 = vmatmul.bf16.gmra.mxu0 %v640
        %v889 = vpop.f32.mrf.mxu0
        %v890 = vadd.f32 0.0, %v889
        %v891 = vpop.f32.mrf.mxu0
        %v892 = vadd.f32 0.0, %v891
        %893 = vmatmul.bf16.gmra.mxu0 %v641
        %v894 = vpop.f32.mrf.mxu0
        %v895 = vadd.f32 0.0, %v894
        %v896 = vpop.f32.mrf.mxu0
        %v897 = vadd.f32 0.0, %v896
        %898 = vmatmul.bf16.gmra.mxu0 %v642
        %v899 = vpop.f32.mrf.mxu0
        %v900 = vadd.f32 0.0, %v899
        %v901 = vpop.f32.mrf.mxu0
        %v902 = vadd.f32 0.0, %v901
        %903 = vmatmul.bf16.gmra.mxu0 %v643
        %v904 = vpop.f32.mrf.mxu0
        %v905 = vadd.f32 0.0, %v904
        %v906 = vpop.f32.mrf.mxu0
        %v907 = vadd.f32 0.0, %v906
        %908 = vmatmul.bf16.gmra.mxu0 %v644
        %v909 = vpop.f32.mrf.mxu0
        %v910 = vadd.f32 0.0, %v909
        %v911 = vpop.f32.mrf.mxu0
        %v912 = vadd.f32 0.0, %v911
        %913 = vmatmul.bf16.gmra.mxu0 %v645
        %v914 = vpop.f32.mrf.mxu0
        %v915 = vadd.f32 0.0, %v914
        %v916 = vpop.f32.mrf.mxu0
        %v917 = vadd.f32 0.0, %v916
        %918 = vmatmul.bf16.gmra.mxu0 %v646
        %v919 = vpop.f32.mrf.mxu0
        %v920 = vadd.f32 0.0, %v919
        %v921 = vpop.f32.mrf.mxu0
        %v922 = vadd.f32 0.0, %v921
        %923 = vmatmul.bf16.gmra.mxu0 %v647
        %v924 = vpop.f32.mrf.mxu0
        %v925 = vadd.f32 0.0, %v924
        %v926 = vpop.f32.mrf.mxu0
        %v927 = vadd.f32 0.0, %v926
        %928 = vmatmul.bf16.gmra.mxu0 %v648
        %v929 = vpop.f32.mrf.mxu0
        %v930 = vadd.f32 0.0, %v929
        %v931 = vpop.f32.mrf.mxu0
        %v932 = vadd.f32 0.0, %v931
        %933 = vmatmul.bf16.gmra.mxu0 %v649
        %v934 = vpop.f32.mrf.mxu0
        %v935 = vadd.f32 0.0, %v934
        %v936 = vpop.f32.mrf.mxu0
        %v937 = vadd.f32 0.0, %v936
        %938 = vmatmul.bf16.gmra.mxu0 %v650
        %v939 = vpop.f32.mrf.mxu0
        %v940 = vadd.f32 0.0, %v939
        %v941 = vpop.f32.mrf.mxu0
        %v942 = vadd.f32 0.0, %v941
        %943 = vmatmul.bf16.gmra.mxu0 %v651
        %v944 = vpop.f32.mrf.mxu0
        %v945 = vadd.f32 0.0, %v944
        %v946 = vpop.f32.mrf.mxu0
        %v947 = vadd.f32 0.0, %v946
        %948 = vmatmul.bf16.gmra.mxu0 %v652
        %v949 = vpop.f32.mrf.mxu0
        %v950 = vadd.f32 0.0, %v949
        %v951 = vpop.f32.mrf.mxu0
        %v952 = vadd.f32 0.0, %v951
        %953 = vmatmul.bf16.gmra.mxu0 %v653
        %v954 = vpop.f32.mrf.mxu0
        %v955 = vadd.f32 0.0, %v954
        %v956 = vpop.f32.mrf.mxu0
        %v957 = vadd.f32 0.0, %v956
        %958 = vmatmul.bf16.gmra.mxu0 %v654
        %v959 = vpop.f32.mrf.mxu0
        %v960 = vadd.f32 0.0, %v959
        %v961 = vpop.f32.mrf.mxu0
        %v962 = vadd.f32 0.0, %v961
        %963 = vmatmul.bf16.gmra.mxu0 %v655
        %v964 = vpop.f32.mrf.mxu0
        %v965 = vadd.f32 0.0, %v964
        %v966 = vpop.f32.mrf.mxu0
        %v967 = vadd.f32 0.0, %v966
        %968 = vmatmul.bf16.gmra.mxu0 %v656
        %v969 = vpop.f32.mrf.mxu0
        %v970 = vadd.f32 0.0, %v969
        %v971 = vpop.f32.mrf.mxu0
        %v972 = vadd.f32 0.0, %v971
        %973 = vmatmul.bf16.gmra.mxu0 %v657
        %v974 = vpop.f32.mrf.mxu0
        %v975 = vadd.f32 0.0, %v974
        %v976 = vpop.f32.mrf.mxu0
        %v977 = vadd.f32 0.0, %v976
        %978 = vmatmul.bf16.gmra.mxu0 %v658
        %v979 = vpop.f32.mrf.mxu0
        %v980 = vadd.f32 0.0, %v979
        %v981 = vpop.f32.mrf.mxu0
        %v982 = vadd.f32 0.0, %v981
        %983 = vmatmul.bf16.gmra.mxu0 %v659
        %v984 = vpop.f32.mrf.mxu0
        %v985 = vadd.f32 0.0, %v984
        %v986 = vpop.f32.mrf.mxu0
        %v987 = vadd.f32 0.0, %v986
        %988 = vmatmul.bf16.gmra.mxu0 %v660
        %v989 = vpop.f32.mrf.mxu0
        %v990 = vadd.f32 0.0, %v989
        %v991 = vpop.f32.mrf.mxu0
        %v992 = vadd.f32 0.0, %v991
        %993 = vmatmul.bf16.gmra.mxu0 %v661
        %v994 = vpop.f32.mrf.mxu0
        %v995 = vadd.f32 0.0, %v994
        %v996 = vpop.f32.mrf.mxu0
        %v997 = vadd.f32 0.0, %v996
        %998 = vmatmul.bf16.gmra.mxu0 %v662
        %v999 = vpop.f32.mrf.mxu0
        %v1000 = vadd.f32 0.0, %v999
        %v1001 = vpop.f32.mrf.mxu0
        %v1002 = vadd.f32 0.0, %v1001
        %1003 = vmatmul.bf16.gmra.mxu0 %v663
        %v1004 = vpop.f32.mrf.mxu0
        %v1005 = vadd.f32 0.0, %v1004
        %v1006 = vpop.f32.mrf.mxu0
        %v1007 = vadd.f32 0.0, %v1006
        %1008 = vmatmul.bf16.gmra.mxu0 %v664
        %v1009 = vpop.f32.mrf.mxu0
        %v1010 = vadd.f32 0.0, %v1009
        %v1011 = vpop.f32.mrf.mxu0
        %v1012 = vadd.f32 0.0, %v1011
        %1013 = vmatmul.bf16.gmra.mxu0 %v665
        %v1014 = vpop.f32.mrf.mxu0
        %v1015 = vadd.f32 0.0, %v1014
        %v1016 = vpop.f32.mrf.mxu0
        %v1017 = vadd.f32 0.0, %v1016
        %1018 = vmatmul.bf16.gmra.mxu0 %v666
        %v1019 = vpop.f32.mrf.mxu0
        %v1020 = vadd.f32 0.0, %v1019
        %v1021 = vpop.f32.mrf.mxu0
        %v1022 = vadd.f32 0.0, %v1021
        %1023 = vmatmul.bf16.gmra.mxu0 %v667
        %v1024 = vpop.f32.mrf.mxu0
        %v1025 = vadd.f32 0.0, %v1024
        %v1026 = vpop.f32.mrf.mxu0
        %v1027 = vadd.f32 0.0, %v1026
        %1028 = vmatmul.bf16.gmra.mxu0 %v668
        %v1029 = vpop.f32.mrf.mxu0
        %v1030 = vadd.f32 0.0, %v1029
        %v1031 = vpop.f32.mrf.mxu0
        %v1032 = vadd.f32 0.0, %v1031
        %1033 = vmatmul.bf16.gmra.mxu0 %v669
        %v1034 = vpop.f32.mrf.mxu0
        %v1035 = vadd.f32 0.0, %v1034
        %v1036 = vpop.f32.mrf.mxu0
        %v1037 = vadd.f32 0.0, %v1036
        %1038 = vmatmul.bf16.gmra.mxu0 %v670
        %v1039 = vpop.f32.mrf.mxu0
        %v1040 = vadd.f32 0.0, %v1039
        %v1041 = vpop.f32.mrf.mxu0
        %v1042 = vadd.f32 0.0, %v1041
        %1043 = vmatmul.bf16.gmra.mxu0 %v671
        %v1044 = vpop.f32.mrf.mxu0
        %v1045 = vadd.f32 0.0, %v1044
        %v1046 = vpop.f32.mrf.mxu0
        %v1047 = vadd.f32 0.0, %v1046
        %1048 = vmatmul.bf16.gmra.mxu0 %v672
        %v1049 = vpop.f32.mrf.mxu0
        %v1050 = vadd.f32 0.0, %v1049
        %v1051 = vpop.f32.mrf.mxu0
        %v1052 = vadd.f32 0.0, %v1051
        %1053 = vmatmul.bf16.gmra.mxu0 %v673
        %v1054 = vpop.f32.mrf.mxu0
        %v1055 = vadd.f32 0.0, %v1054
        %v1056 = vpop.f32.mrf.mxu0
        %v1057 = vadd.f32 0.0, %v1056
        %1058 = vmatmul.bf16.gmra.mxu0 %v674
        %v1059 = vpop.f32.mrf.mxu0
        %v1060 = vadd.f32 0.0, %v1059
        %v1061 = vpop.f32.mrf.mxu0
        %v1062 = vadd.f32 0.0, %v1061
        %1063 = vmatmul.bf16.gmra.mxu0 %v675
        %v1064 = vpop.f32.mrf.mxu0
        %v1065 = vadd.f32 0.0, %v1064
        %v1066 = vpop.f32.mrf.mxu0
        %v1067 = vadd.f32 0.0, %v1066
        %1068 = vdwg.mxu0
        %s1069 = smul.u32 %s26, 8
        %s1070 = sld [smem:[#allocation6 + %s1069]]
        %v1071 = vstv %s1070
        %v1072 = vadd.f32 %v790, %v1071
        %v1073 = vadd.f32 %v792, %v1071
        %v1074 = vadd.f32 %v795, %v1071
        %v1075 = vadd.f32 %v797, %v1071
        %v1076 = vadd.f32 %v800, %v1071
        %v1077 = vadd.f32 %v802, %v1071
        %v1078 = vadd.f32 %v805, %v1071
        %v1079 = vadd.f32 %v807, %v1071
        %v1080 = vadd.f32 %v810, %v1071
        %v1081 = vadd.f32 %v812, %v1071
        %v1082 = vadd.f32 %v815, %v1071
        %v1083 = vadd.f32 %v817, %v1071
        %v1084 = vadd.f32 %v820, %v1071
        %v1085 = vadd.f32 %v822, %v1071
        %v1086 = vxor.u32 %v1072, 2147483648
        %v1087 = vxor.u32 %v1073, 2147483648
        %v1088 = vxor.u32 %v1074, 2147483648
        %v1089 = vxor.u32 %v1075, 2147483648
        %v1090 = vxor.u32 %v1076, 2147483648
        %v1091 = vxor.u32 %v1077, 2147483648
        %v1092 = vxor.u32 %v1078, 2147483648
        %v1093 = vxor.u32 %v1079, 2147483648
        %v1094 = vxor.u32 %v1080, 2147483648
        %v1095 = vxor.u32 %v1081, 2147483648
        %v1096 = vxor.u32 %v1082, 2147483648
        %v1097 = vxor.u32 %v1083, 2147483648
        %v1098 = vxor.u32 %v1084, 2147483648
        %v1099 = vxor.u32 %v1085, 2147483648
        %v1100 = vmul.f32 %v1086, 1.442695
        %v1101 = vpow.pop %v1100
        %v1102 = vmul.f32 %v1087, 1.442695
        %v1103 = vpow.pop %v1102
        %v1104 = vmul.f32 %v1088, 1.442695
        %v1105 = vpow.pop %v1104
        %v1106 = vmul.f32 %v1089, 1.442695
        %v1107 = vpow.pop %v1106
        %v1108 = vmul.f32 %v1090, 1.442695
        %v1109 = vpow.pop %v1108
        %v1110 = vmul.f32 %v1091, 1.442695
        %v1111 = vpow.pop %v1110
        %v1112 = vmul.f32 %v1092, 1.442695
        %v1113 = vpow.pop %v1112
        %v1114 = vmul.f32 %v1093, 1.442695
        %v1115 = vpow.pop %v1114
        %v1116 = vmul.f32 %v1094, 1.442695
        %v1117 = vpow.pop %v1116
        %v1118 = vmul.f32 %v1095, 1.442695
        %v1119 = vpow.pop %v1118
        %v1120 = vmul.f32 %v1096, 1.442695
        %v1121 = vpow.pop %v1120
        %v1122 = vmul.f32 %v1097, 1.442695
        %v1123 = vpow.pop %v1122
        %v1124 = vmul.f32 %v1098, 1.442695
        %v1125 = vpow.pop %v1124
        %v1126 = vmul.f32 %v1099, 1.442695
        %v1127 = vpow.pop %v1126
        %v1128 = vadd.f32 %v1101, 1.0
        %v1129 = vadd.f32 %v1103, 1.0
        %v1130 = vadd.f32 %v1105, 1.0
        %v1131 = vadd.f32 %v1107, 1.0
        %v1132 = vadd.f32 %v1109, 1.0
        %v1133 = vadd.f32 %v1111, 1.0
        %v1134 = vadd.f32 %v1113, 1.0
        %v1135 = vadd.f32 %v1115, 1.0
        %v1136 = vadd.f32 %v1117, 1.0
        %v1137 = vadd.f32 %v1119, 1.0
        %v1138 = vadd.f32 %v1121, 1.0
        %v1139 = vadd.f32 %v1123, 1.0
        %v1140 = vadd.f32 %v1125, 1.0
        %v1141 = vadd.f32 %v1127, 1.0
        %v1142 = vrcp.pop %v1128
        %v1143 = vmul.f32 %v1128, %v1142
        %v1144 = vsub.f32 1.0, %v1143
        %v1145 = vmul.f32 %v1142, %v1144
        %v1146 = vadd.f32 %v1142, %v1145
        %vm1147 = vweird.f32 %v1128
        %vm1148 = vweird.f32 %v1142
        %vm1149 = vmor %vm1147, %vm1148
        %v1150 = vsel %vm1149, %v1142, %v1146
        %v1151 = vand.u32 2147483647, %v1128
        %vm1152 = vcmp.eq.f32.partialorder %v1151, 8.507059e+37
        %v1153 = vand.u32 %v1128, 2147483648
        %v1154 = vor.u32 1.1754944e-38, %v1153
        %v1155 = vsel %vm1152, %v1154, %v1150
        %v1156 = vmul.f32 1.0, %v1155
        %v1157 = vrcp.pop %v1129
        %v1158 = vmul.f32 %v1129, %v1157
        %v1159 = vsub.f32 1.0, %v1158
        %v1160 = vmul.f32 %v1157, %v1159
        %v1161 = vadd.f32 %v1157, %v1160
        %vm1162 = vweird.f32 %v1129
        %vm1163 = vweird.f32 %v1157
        %vm1164 = vmor %vm1162, %vm1163
        %v1165 = vsel %vm1164, %v1157, %v1161
        %v1166 = vand.u32 2147483647, %v1129
        %vm1167 = vcmp.eq.f32.partialorder %v1166, 8.507059e+37
        %v1168 = vand.u32 %v1129, 2147483648
        %v1169 = vor.u32 1.1754944e-38, %v1168
        %v1170 = vsel %vm1167, %v1169, %v1165
        %v1171 = vmul.f32 1.0, %v1170
        %v1172 = vrcp.pop %v1130
        %v1173 = vmul.f32 %v1130, %v1172
        %v1174 = vsub.f32 1.0, %v1173
        %v1175 = vmul.f32 %v1172, %v1174
        %v1176 = vadd.f32 %v1172, %v1175
        %vm1177 = vweird.f32 %v1130
        %vm1178 = vweird.f32 %v1172
        %vm1179 = vmor %vm1177, %vm1178
        %v1180 = vsel %vm1179, %v1172, %v1176
        %v1181 = vand.u32 2147483647, %v1130
        %vm1182 = vcmp.eq.f32.partialorder %v1181, 8.507059e+37
        %v1183 = vand.u32 %v1130, 2147483648
        %v1184 = vor.u32 1.1754944e-38, %v1183
        %v1185 = vsel %vm1182, %v1184, %v1180
        %v1186 = vmul.f32 1.0, %v1185
        %v1187 = vrcp.pop %v1131
        %v1188 = vmul.f32 %v1131, %v1187
        %v1189 = vsub.f32 1.0, %v1188
        %v1190 = vmul.f32 %v1187, %v1189
        %v1191 = vadd.f32 %v1187, %v1190
        %vm1192 = vweird.f32 %v1131
        %vm1193 = vweird.f32 %v1187
        %vm1194 = vmor %vm1192, %vm1193
        %v1195 = vsel %vm1194, %v1187, %v1191
        %v1196 = vand.u32 2147483647, %v1131
        %vm1197 = vcmp.eq.f32.partialorder %v1196, 8.507059e+37
        %v1198 = vand.u32 %v1131, 2147483648
        %v1199 = vor.u32 1.1754944e-38, %v1198
        %v1200 = vsel %vm1197, %v1199, %v1195
        %v1201 = vmul.f32 1.0, %v1200
        %v1202 = vrcp.pop %v1132
        %v1203 = vmul.f32 %v1132, %v1202
        %v1204 = vsub.f32 1.0, %v1203
        %v1205 = vmul.f32 %v1202, %v1204
        %v1206 = vadd.f32 %v1202, %v1205
        %vm1207 = vweird.f32 %v1132
        %vm1208 = vweird.f32 %v1202
        %vm1209 = vmor %vm1207, %vm1208
        %v1210 = vsel %vm1209, %v1202, %v1206
        %v1211 = vand.u32 2147483647, %v1132
        %vm1212 = vcmp.eq.f32.partialorder %v1211, 8.507059e+37
        %v1213 = vand.u32 %v1132, 2147483648
        %v1214 = vor.u32 1.1754944e-38, %v1213
        %v1215 = vsel %vm1212, %v1214, %v1210
        %v1216 = vmul.f32 1.0, %v1215
        %v1217 = vrcp.pop %v1133
        %v1218 = vmul.f32 %v1133, %v1217
        %v1219 = vsub.f32 1.0, %v1218
        %v1220 = vmul.f32 %v1217, %v1219
        %v1221 = vadd.f32 %v1217, %v1220
        %vm1222 = vweird.f32 %v1133
        %vm1223 = vweird.f32 %v1217
        %vm1224 = vmor %vm1222, %vm1223
        %v1225 = vsel %vm1224, %v1217, %v1221
        %v1226 = vand.u32 2147483647, %v1133
        %vm1227 = vcmp.eq.f32.partialorder %v1226, 8.507059e+37
        %v1228 = vand.u32 %v1133, 2147483648
        %v1229 = vor.u32 1.1754944e-38, %v1228
        %v1230 = vsel %vm1227, %v1229, %v1225
        %v1231 = vmul.f32 1.0, %v1230
        %v1232 = vrcp.pop %v1134
        %v1233 = vmul.f32 %v1134, %v1232
        %v1234 = vsub.f32 1.0, %v1233
        %v1235 = vmul.f32 %v1232, %v1234
        %v1236 = vadd.f32 %v1232, %v1235
        %vm1237 = vweird.f32 %v1134
        %vm1238 = vweird.f32 %v1232
        %vm1239 = vmor %vm1237, %vm1238
        %v1240 = vsel %vm1239, %v1232, %v1236
        %v1241 = vand.u32 2147483647, %v1134
        %vm1242 = vcmp.eq.f32.partialorder %v1241, 8.507059e+37
        %v1243 = vand.u32 %v1134, 2147483648
        %v1244 = vor.u32 1.1754944e-38, %v1243
        %v1245 = vsel %vm1242, %v1244, %v1240
        %v1246 = vmul.f32 1.0, %v1245
        %v1247 = vrcp.pop %v1135
        %v1248 = vmul.f32 %v1135, %v1247
        %v1249 = vsub.f32 1.0, %v1248
        %v1250 = vmul.f32 %v1247, %v1249
        %v1251 = vadd.f32 %v1247, %v1250
        %vm1252 = vweird.f32 %v1135
        %vm1253 = vweird.f32 %v1247
        %vm1254 = vmor %vm1252, %vm1253
        %v1255 = vsel %vm1254, %v1247, %v1251
        %v1256 = vand.u32 2147483647, %v1135
        %vm1257 = vcmp.eq.f32.partialorder %v1256, 8.507059e+37
        %v1258 = vand.u32 %v1135, 2147483648
        %v1259 = vor.u32 1.1754944e-38, %v1258
        %v1260 = vsel %vm1257, %v1259, %v1255
        %v1261 = vmul.f32 1.0, %v1260
        %v1262 = vrcp.pop %v1136
        %v1263 = vmul.f32 %v1136, %v1262
        %v1264 = vsub.f32 1.0, %v1263
        %v1265 = vmul.f32 %v1262, %v1264
        %v1266 = vadd.f32 %v1262, %v1265
        %vm1267 = vweird.f32 %v1136
        %vm1268 = vweird.f32 %v1262
        %vm1269 = vmor %vm1267, %vm1268
        %v1270 = vsel %vm1269, %v1262, %v1266
        %v1271 = vand.u32 2147483647, %v1136
        %vm1272 = vcmp.eq.f32.partialorder %v1271, 8.507059e+37
        %v1273 = vand.u32 %v1136, 2147483648
        %v1274 = vor.u32 1.1754944e-38, %v1273
        %v1275 = vsel %vm1272, %v1274, %v1270
        %v1276 = vmul.f32 1.0, %v1275
        %v1277 = vrcp.pop %v1137
        %v1278 = vmul.f32 %v1137, %v1277
        %v1279 = vsub.f32 1.0, %v1278
        %v1280 = vmul.f32 %v1277, %v1279
        %v1281 = vadd.f32 %v1277, %v1280
        %vm1282 = vweird.f32 %v1137
        %vm1283 = vweird.f32 %v1277
        %vm1284 = vmor %vm1282, %vm1283
        %v1285 = vsel %vm1284, %v1277, %v1281
        %v1286 = vand.u32 2147483647, %v1137
        %vm1287 = vcmp.eq.f32.partialorder %v1286, 8.507059e+37
        %v1288 = vand.u32 %v1137, 2147483648
        %v1289 = vor.u32 1.1754944e-38, %v1288
        %v1290 = vsel %vm1287, %v1289, %v1285
        %v1291 = vmul.f32 1.0, %v1290
        %v1292 = vrcp.pop %v1138
        %v1293 = vmul.f32 %v1138, %v1292
        %v1294 = vsub.f32 1.0, %v1293
        %v1295 = vmul.f32 %v1292, %v1294
        %v1296 = vadd.f32 %v1292, %v1295
        %vm1297 = vweird.f32 %v1138
        %vm1298 = vweird.f32 %v1292
        %vm1299 = vmor %vm1297, %vm1298
        %v1300 = vsel %vm1299, %v1292, %v1296
        %v1301 = vand.u32 2147483647, %v1138
        %vm1302 = vcmp.eq.f32.partialorder %v1301, 8.507059e+37
        %v1303 = vand.u32 %v1138, 2147483648
        %v1304 = vor.u32 1.1754944e-38, %v1303
        %v1305 = vsel %vm1302, %v1304, %v1300
        %v1306 = vmul.f32 1.0, %v1305
        %v1307 = vrcp.pop %v1139
        %v1308 = vmul.f32 %v1139, %v1307
        %v1309 = vsub.f32 1.0, %v1308
        %v1310 = vmul.f32 %v1307, %v1309
        %v1311 = vadd.f32 %v1307, %v1310
        %vm1312 = vweird.f32 %v1139
        %vm1313 = vweird.f32 %v1307
        %vm1314 = vmor %vm1312, %vm1313
        %v1315 = vsel %vm1314, %v1307, %v1311
        %v1316 = vand.u32 2147483647, %v1139
        %vm1317 = vcmp.eq.f32.partialorder %v1316, 8.507059e+37
        %v1318 = vand.u32 %v1139, 2147483648
        %v1319 = vor.u32 1.1754944e-38, %v1318
        %v1320 = vsel %vm1317, %v1319, %v1315
        %v1321 = vmul.f32 1.0, %v1320
        %v1322 = vrcp.pop %v1140
        %v1323 = vmul.f32 %v1140, %v1322
        %v1324 = vsub.f32 1.0, %v1323
        %v1325 = vmul.f32 %v1322, %v1324
        %v1326 = vadd.f32 %v1322, %v1325
        %vm1327 = vweird.f32 %v1140
        %vm1328 = vweird.f32 %v1322
        %vm1329 = vmor %vm1327, %vm1328
        %v1330 = vsel %vm1329, %v1322, %v1326
        %v1331 = vand.u32 2147483647, %v1140
        %vm1332 = vcmp.eq.f32.partialorder %v1331, 8.507059e+37
        %v1333 = vand.u32 %v1140, 2147483648
        %v1334 = vor.u32 1.1754944e-38, %v1333
        %v1335 = vsel %vm1332, %v1334, %v1330
        %v1336 = vmul.f32 1.0, %v1335
        %v1337 = vrcp.pop %v1141
        %v1338 = vmul.f32 %v1141, %v1337
        %v1339 = vsub.f32 1.0, %v1338
        %v1340 = vmul.f32 %v1337, %v1339
        %v1341 = vadd.f32 %v1337, %v1340
        %vm1342 = vweird.f32 %v1141
        %vm1343 = vweird.f32 %v1337
        %vm1344 = vmor %vm1342, %vm1343
        %v1345 = vsel %vm1344, %v1337, %v1341
        %v1346 = vand.u32 2147483647, %v1141
        %vm1347 = vcmp.eq.f32.partialorder %v1346, 8.507059e+37
        %v1348 = vand.u32 %v1141, 2147483648
        %v1349 = vor.u32 1.1754944e-38, %v1348
        %v1350 = vsel %vm1347, %v1349, %v1345
        %v1351 = vmul.f32 1.0, %v1350
        %1366 = vset.pattern.permute.xlu0 0
        %1367 = vperm.xlu0 %1366, %v1156
        %v1368 = vpop.permute.xlu0 %1367
        %1369 = vset.pattern.permute.xlu0 0
        %1370 = vperm.xlu0 %1369, %v1171
        %v1371 = vpop.permute.xlu0 %1370
        %1372 = vset.pattern.permute.xlu0 0
        %1373 = vperm.xlu0 %1372, %v1186
        %v1374 = vpop.permute.xlu0 %1373
        %1375 = vset.pattern.permute.xlu0 0
        %1376 = vperm.xlu0 %1375, %v1201
        %v1377 = vpop.permute.xlu0 %1376
        %1378 = vset.pattern.permute.xlu0 0
        %1379 = vperm.xlu0 %1378, %v1216
        %v1380 = vpop.permute.xlu0 %1379
        %1381 = vset.pattern.permute.xlu0 0
        %1382 = vperm.xlu0 %1381, %v1231
        %v1383 = vpop.permute.xlu0 %1382
        %1384 = vset.pattern.permute.xlu0 0
        %1385 = vperm.xlu0 %1384, %v1246
        %v1386 = vpop.permute.xlu0 %1385
        %1387 = vset.pattern.permute.xlu0 0
        %1388 = vperm.xlu0 %1387, %v1261
        %v1389 = vpop.permute.xlu0 %1388
        %1390 = vset.pattern.permute.xlu0 0
        %1391 = vperm.xlu0 %1390, %v1276
        %v1392 = vpop.permute.xlu0 %1391
        %1393 = vset.pattern.permute.xlu0 0
        %1394 = vperm.xlu0 %1393, %v1291
        %v1395 = vpop.permute.xlu0 %1394
        %1396 = vset.pattern.permute.xlu0 0
        %1397 = vperm.xlu0 %1396, %v1306
        %v1398 = vpop.permute.xlu0 %1397
        %1399 = vset.pattern.permute.xlu0 0
        %1400 = vperm.xlu0 %1399, %v1321
        %v1401 = vpop.permute.xlu0 %1400
        %1402 = vset.pattern.permute.xlu0 0
        %1403 = vperm.xlu0 %1402, %v1336
        %v1404 = vpop.permute.xlu0 %1403
        %1405 = vset.pattern.permute.xlu0 0
        %1406 = vperm.xlu0 %1405, %v1351
        %v1407 = vpop.permute.xlu0 %1406
        %v1408 = vlaneseq
        %v1409 = vand.u32 %v1408, 127
        %v1410 = vperm.slane %v1368, %v1409
        %v1411 = vadd.s32 %v1409, 4294967288
        %v1412 = vperm.slane %v1371, %v1411
        %vm1413 = vcmask 130112
        %v1414 = vsel %vm1413, %v1412, %v1410
        %v1415 = vadd.s32 %v1409, 4294967280
        %v1416 = vperm.slane %v1374, %v1415
        %vm1417 = vcmask 195712
        %v1418 = vsel %vm1417, %v1416, %v1414
        %v1419 = vadd.s32 %v1409, 4294967272
        %v1420 = vperm.slane %v1377, %v1419
        %vm1421 = vcmask 261312
        %v1422 = vsel %vm1421, %v1420, %v1418
        %v1423 = vadd.s32 %v1409, 4294967264
        %v1424 = vperm.slane %v1380, %v1423
        %vm1425 = vcmask 326912
        %v1426 = vsel %vm1425, %v1424, %v1422
        %v1427 = vadd.s32 %v1409, 4294967256
        %v1428 = vperm.slane %v1383, %v1427
        %vm1429 = vcmask 392512
        %v1430 = vsel %vm1429, %v1428, %v1426
        %v1431 = vadd.s32 %v1409, 4294967248
        %v1432 = vperm.slane %v1386, %v1431
        %vm1433 = vcmask 458112
        %v1434 = vsel %vm1433, %v1432, %v1430
        %v1435 = vperm.slane %v1389, %v1409
        %v1436 = vperm.slane %v1392, %v1411
        %v1437 = vsel %vm1413, %v1436, %v1435
        %v1438 = vperm.slane %v1395, %v1415
        %v1439 = vsel %vm1417, %v1438, %v1437
        %v1440 = vperm.slane %v1398, %v1419
        %v1441 = vsel %vm1421, %v1440, %v1439
        %v1442 = vperm.slane %v1401, %v1423
        %v1443 = vsel %vm1425, %v1442, %v1441
        %v1444 = vperm.slane %v1404, %v1427
        %v1445 = vsel %vm1429, %v1444, %v1443
        %v1446 = vperm.slane %v1407, %v1431
        %v1447 = vsel %vm1433, %v1446, %v1445
        %vm1448 = vcmask 1041409
        %v1449 = vsel %vm1448, %v1447, %v1434
        %vm1451 = vcmask 457728
        %v1452 = vsel %vm1451, %v1449, 0.0
        %1453 = vst [vmem:[%s258] sm:$0x3] %v1452
        %v1454 = vpack.c.bf16 %v1156, %v1156
        %v1455 = vpack.c.bf16 %v1171, %v1171
        %v1456 = vpack.c.bf16 %v1186, %v1186
        %v1457 = vpack.c.bf16 %v1201, %v1201
        %v1458 = vpack.c.bf16 %v1216, %v1216
        %v1459 = vpack.c.bf16 %v1231, %v1231
        %v1460 = vpack.c.bf16 %v1246, %v1246
        %v1461 = vpack.c.bf16 %v1261, %v1261
        %v1462 = vpack.c.bf16 %v1276, %v1276
        %v1463 = vpack.c.bf16 %v1291, %v1291
        %v1464 = vpack.c.bf16 %v1306, %v1306
        %v1465 = vpack.c.bf16 %v1321, %v1321
        %v1466 = vpack.c.bf16 %v1336, %v1336
        %v1467 = vpack.c.bf16 %v1351, %v1351
        %v1475 = vunpack.c.l.b16 %v1454
        %v1476 = vunpack.c.l.b16 %v1455
        %v1477 = vunpack.c.l.b16 %v1456
        %v1478 = vunpack.c.l.b16 %v1457
        %v1479 = vunpack.c.l.b16 %v1458
        %v1480 = vunpack.c.l.b16 %v1459
        %v1481 = vunpack.c.l.b16 %v1460
        %v1482 = vpack.c.b16 %v1476, %v1475
        %v1483 = vpack.c.b16 %v1478, %v1477
        %v1484 = vpack.c.b16 %v1480, %v1479
        %v1485 = vpack.c.b16 %v1481, %v1481
        %v1486 = vunpack.c.l.b16 %v1482
        %v1487 = vunpack.c.h.b16 %v1482
        %v1488 = vunpack.c.l.b16 %v1483
        %v1489 = vunpack.c.h.b16 %v1483
        %v1490 = vunpack.c.l.b16 %v1484
        %v1491 = vunpack.c.h.b16 %v1484
        %v1492 = vunpack.c.l.b16 %v1485
        %1493 = vset.pattern.permute.xlu0 0
        %1494 = vperm.xlu0 %1493, %v1486
        %v1495 = vpop.permute.xlu0 %1494
        %1496 = vset.pattern.permute.xlu0 0
        %1497 = vperm.xlu0 %1496, %v1487
        %v1498 = vpop.permute.xlu0 %1497
        %1499 = vset.pattern.permute.xlu0 0
        %1500 = vperm.xlu0 %1499, %v1488
        %v1501 = vpop.permute.xlu0 %1500
        %1502 = vset.pattern.permute.xlu0 0
        %1503 = vperm.xlu0 %1502, %v1489
        %v1504 = vpop.permute.xlu0 %1503
        %1505 = vset.pattern.permute.xlu0 0
        %1506 = vperm.xlu0 %1505, %v1490
        %v1507 = vpop.permute.xlu0 %1506
        %1508 = vset.pattern.permute.xlu0 0
        %1509 = vperm.xlu0 %1508, %v1491
        %v1510 = vpop.permute.xlu0 %1509
        %1511 = vset.pattern.permute.xlu0 0
        %1512 = vperm.xlu0 %1511, %v1492
        %v1513 = vpop.permute.xlu0 %1512
        %v1514 = vperm.slane %v1495, %v1409
        %v1515 = vperm.slane %v1498, %v1411
        %v1516 = vsel %vm1413, %v1515, %v1514
        %v1517 = vperm.slane %v1501, %v1415
        %v1518 = vsel %vm1417, %v1517, %v1516
        %v1519 = vperm.slane %v1504, %v1419
        %v1520 = vsel %vm1421, %v1519, %v1518
        %v1521 = vperm.slane %v1507, %v1423
        %v1522 = vsel %vm1425, %v1521, %v1520
        %v1523 = vperm.slane %v1510, %v1427
        %v1524 = vsel %vm1429, %v1523, %v1522
        %v1525 = vperm.slane %v1513, %v1431
        %v1526 = vsel %vm1433, %v1525, %v1524
        %v1527 = vpack.c.b16 %v1526, %v1526
        %v1528 = vpack.c.b16 %v514, %v514
        %v1530 = vsel %vm1451, %v1527, 0
        %vm1532 = vcmask 1043456
        %v1534 = vsel %vm1532, %v1528, 0
        %1536 = vmatpush.bf16.msra.mxu0 0
        %1537 = vmatpush.bf16.msra.mxu0 0
        %1538 = vmatpush.bf16.msra.mxu0 0
        %1539 = vmatpush.bf16.msra.mxu0 0
        %1540 = vmatpush.bf16.msra.mxu0 %v1534
        %1541 = vmatpush.bf16.msra.mxu0 %v622
        %1542 = vmatpush.bf16.msra.mxu0 %v621
        %1543 = vmatpush.bf16.msra.mxu0 %v620
        %1544 = vmatmul.bf16.gmra.mxu0 %v1530
        %v1545 = vpop.f32.mrf.mxu0
        %v1546 = vadd.f32 0.0, %v1545
        %v1547 = vpop.f32.mrf.mxu0
        %1548 = vdwg.mxu0
        %v1556 = vunpack.c.l.b16 %v1461
        %v1557 = vunpack.c.l.b16 %v1462
        %v1558 = vunpack.c.l.b16 %v1463
        %v1559 = vunpack.c.l.b16 %v1464
        %v1560 = vunpack.c.l.b16 %v1465
        %v1561 = vunpack.c.l.b16 %v1466
        %v1562 = vunpack.c.l.b16 %v1467
        %v1563 = vpack.c.b16 %v1557, %v1556
        %v1564 = vpack.c.b16 %v1559, %v1558
        %v1565 = vpack.c.b16 %v1561, %v1560
        %v1566 = vpack.c.b16 %v1562, %v1562
        %v1567 = vunpack.c.l.b16 %v1563
        %v1568 = vunpack.c.h.b16 %v1563
        %v1569 = vunpack.c.l.b16 %v1564
        %v1570 = vunpack.c.h.b16 %v1564
        %v1571 = vunpack.c.l.b16 %v1565
        %v1572 = vunpack.c.h.b16 %v1565
        %v1573 = vunpack.c.l.b16 %v1566
        %1574 = vset.pattern.permute.xlu0 0
        %1575 = vperm.xlu0 %1574, %v1567
        %v1576 = vpop.permute.xlu0 %1575
        %1577 = vset.pattern.permute.xlu0 0
        %1578 = vperm.xlu0 %1577, %v1568
        %v1579 = vpop.permute.xlu0 %1578
        %1580 = vset.pattern.permute.xlu0 0
        %1581 = vperm.xlu0 %1580, %v1569
        %v1582 = vpop.permute.xlu0 %1581
        %1583 = vset.pattern.permute.xlu0 0
        %1584 = vperm.xlu0 %1583, %v1570
        %v1585 = vpop.permute.xlu0 %1584
        %1586 = vset.pattern.permute.xlu0 0
        %1587 = vperm.xlu0 %1586, %v1571
        %v1588 = vpop.permute.xlu0 %1587
        %1589 = vset.pattern.permute.xlu0 0
        %1590 = vperm.xlu0 %1589, %v1572
        %v1591 = vpop.permute.xlu0 %1590
        %1592 = vset.pattern.permute.xlu0 0
        %1593 = vperm.xlu0 %1592, %v1573
        %v1594 = vpop.permute.xlu0 %1593
        %v1595 = vperm.slane %v1576, %v1409
        %v1596 = vperm.slane %v1579, %v1411
        %v1597 = vsel %vm1413, %v1596, %v1595
        %v1598 = vperm.slane %v1582, %v1415
        %v1599 = vsel %vm1417, %v1598, %v1597
        %v1600 = vperm.slane %v1585, %v1419
        %v1601 = vsel %vm1421, %v1600, %v1599
        %v1602 = vperm.slane %v1588, %v1423
        %v1603 = vsel %vm1425, %v1602, %v1601
        %v1604 = vperm.slane %v1591, %v1427
        %v1605 = vsel %vm1429, %v1604, %v1603
        %v1606 = vperm.slane %v1594, %v1431
        %v1607 = vsel %vm1433, %v1606, %v1605
        %v1608 = vpack.c.b16 %v1607, %v1607
        %v1609 = vpack.c.b16 %v516, %v515
        %v1610 = vpack.c.b16 %v518, %v517
        %v1611 = vpack.c.b16 %v520, %v519
        %v1612 = vpack.c.b16 %v521, %v521
        %v1617 = vsel %vm1451, %v1608, 0
        %v1620 = vsel %vm1532, %v1612, 0
        %1622 = vmatpush.bf16.msra.mxu0 0
        %1623 = vmatpush.bf16.msra.mxu0 0
        %1624 = vmatpush.bf16.msra.mxu0 0
        %1625 = vmatpush.bf16.msra.mxu0 0
        %1626 = vmatpush.bf16.msra.mxu0 %v1620
        %1627 = vmatpush.bf16.msra.mxu0 %v1611
        %1628 = vmatpush.bf16.msra.mxu0 %v1610
        %1629 = vmatpush.bf16.msra.mxu0 %v1609
        %1630 = vmatmul.bf16.gmra.mxu0 %v1617
        %v1631 = vpop.f32.mrf.mxu0
        %v1632 = vadd.f32 0.0, %v1631
        %v1633 = vpop.f32.mrf.mxu0
        %1634 = vdwg.mxu0
        %v1635 = vmul.f32 %v1546, 0.020408163
        %v1636 = vmul.f32 %v1632, 0.020408163
        %v1639 = vrot.slane %v1636, 7
        %v1640 = vsel %vm1448, %v1639, %v1635
        %1642 = vst [vmem:[%s251] sm:$0x3] %v1640
        %s1643 = sadd.s32 %s1069, 1
        %s1644 = sld [smem:[#allocation6 + %s1643]]
        %v1645 = vstv %s1644
        %v1646 = vadd.f32 %v825, %v1645
        %v1647 = vadd.f32 %v827, %v1645
        %v1648 = vadd.f32 %v830, %v1645
        %v1649 = vadd.f32 %v832, %v1645
        %v1650 = vadd.f32 %v835, %v1645
        %v1651 = vadd.f32 %v837, %v1645
        %v1652 = vadd.f32 %v840, %v1645
        %v1653 = vadd.f32 %v842, %v1645
        %v1654 = vadd.f32 %v845, %v1645
        %v1655 = vadd.f32 %v847, %v1645
        %v1656 = vadd.f32 %v850, %v1645
        %v1657 = vadd.f32 %v852, %v1645
        %v1658 = vadd.f32 %v855, %v1645
        %v1659 = vadd.f32 %v857, %v1645
        %v1660 = vxor.u32 %v1646, 2147483648
        %v1661 = vxor.u32 %v1647, 2147483648
        %v1662 = vxor.u32 %v1648, 2147483648
        %v1663 = vxor.u32 %v1649, 2147483648
        %v1664 = vxor.u32 %v1650, 2147483648
        %v1665 = vxor.u32 %v1651, 2147483648
        %v1666 = vxor.u32 %v1652, 2147483648
        %v1667 = vxor.u32 %v1653, 2147483648
        %v1668 = vxor.u32 %v1654, 2147483648
        %v1669 = vxor.u32 %v1655, 2147483648
        %v1670 = vxor.u32 %v1656, 2147483648
        %v1671 = vxor.u32 %v1657, 2147483648
        %v1672 = vxor.u32 %v1658, 2147483648
        %v1673 = vxor.u32 %v1659, 2147483648
        %v1674 = vmul.f32 %v1660, 1.442695
        %v1675 = vpow.pop %v1674
        %v1676 = vmul.f32 %v1661, 1.442695
        %v1677 = vpow.pop %v1676
        %v1678 = vmul.f32 %v1662, 1.442695
        %v1679 = vpow.pop %v1678
        %v1680 = vmul.f32 %v1663, 1.442695
        %v1681 = vpow.pop %v1680
        %v1682 = vmul.f32 %v1664, 1.442695
        %v1683 = vpow.pop %v1682
        %v1684 = vmul.f32 %v1665, 1.442695
        %v1685 = vpow.pop %v1684
        %v1686 = vmul.f32 %v1666, 1.442695
        %v1687 = vpow.pop %v1686
        %v1688 = vmul.f32 %v1667, 1.442695
        %v1689 = vpow.pop %v1688
        %v1690 = vmul.f32 %v1668, 1.442695
        %v1691 = vpow.pop %v1690
        %v1692 = vmul.f32 %v1669, 1.442695
        %v1693 = vpow.pop %v1692
        %v1694 = vmul.f32 %v1670, 1.442695
        %v1695 = vpow.pop %v1694
        %v1696 = vmul.f32 %v1671, 1.442695
        %v1697 = vpow.pop %v1696
        %v1698 = vmul.f32 %v1672, 1.442695
        %v1699 = vpow.pop %v1698
        %v1700 = vmul.f32 %v1673, 1.442695
        %v1701 = vpow.pop %v1700
        %v1702 = vadd.f32 %v1675, 1.0
        %v1703 = vadd.f32 %v1677, 1.0
        %v1704 = vadd.f32 %v1679, 1.0
        %v1705 = vadd.f32 %v1681, 1.0
        %v1706 = vadd.f32 %v1683, 1.0
        %v1707 = vadd.f32 %v1685, 1.0
        %v1708 = vadd.f32 %v1687, 1.0
        %v1709 = vadd.f32 %v1689, 1.0
        %v1710 = vadd.f32 %v1691, 1.0
        %v1711 = vadd.f32 %v1693, 1.0
        %v1712 = vadd.f32 %v1695, 1.0
        %v1713 = vadd.f32 %v1697, 1.0
        %v1714 = vadd.f32 %v1699, 1.0
        %v1715 = vadd.f32 %v1701, 1.0
        %v1716 = vrcp.pop %v1702
        %v1717 = vmul.f32 %v1702, %v1716
        %v1718 = vsub.f32 1.0, %v1717
        %v1719 = vmul.f32 %v1716, %v1718
        %v1720 = vadd.f32 %v1716, %v1719
        %vm1721 = vweird.f32 %v1702
        %vm1722 = vweird.f32 %v1716
        %vm1723 = vmor %vm1721, %vm1722
        %v1724 = vsel %vm1723, %v1716, %v1720
        %v1725 = vand.u32 2147483647, %v1702
        %vm1726 = vcmp.eq.f32.partialorder %v1725, 8.507059e+37
        %v1727 = vand.u32 %v1702, 2147483648
        %v1728 = vor.u32 1.1754944e-38, %v1727
        %v1729 = vsel %vm1726, %v1728, %v1724
        %v1730 = vmul.f32 1.0, %v1729
        %v1731 = vrcp.pop %v1703
        %v1732 = vmul.f32 %v1703, %v1731
        %v1733 = vsub.f32 1.0, %v1732
        %v1734 = vmul.f32 %v1731, %v1733
        %v1735 = vadd.f32 %v1731, %v1734
        %vm1736 = vweird.f32 %v1703
        %vm1737 = vweird.f32 %v1731
        %vm1738 = vmor %vm1736, %vm1737
        %v1739 = vsel %vm1738, %v1731, %v1735
        %v1740 = vand.u32 2147483647, %v1703
        %vm1741 = vcmp.eq.f32.partialorder %v1740, 8.507059e+37
        %v1742 = vand.u32 %v1703, 2147483648
        %v1743 = vor.u32 1.1754944e-38, %v1742
        %v1744 = vsel %vm1741, %v1743, %v1739
        %v1745 = vmul.f32 1.0, %v1744
        %v1746 = vrcp.pop %v1704
        %v1747 = vmul.f32 %v1704, %v1746
        %v1748 = vsub.f32 1.0, %v1747
        %v1749 = vmul.f32 %v1746, %v1748
        %v1750 = vadd.f32 %v1746, %v1749
        %vm1751 = vweird.f32 %v1704
        %vm1752 = vweird.f32 %v1746
        %vm1753 = vmor %vm1751, %vm1752
        %v1754 = vsel %vm1753, %v1746, %v1750
        %v1755 = vand.u32 2147483647, %v1704
        %vm1756 = vcmp.eq.f32.partialorder %v1755, 8.507059e+37
        %v1757 = vand.u32 %v1704, 2147483648
        %v1758 = vor.u32 1.1754944e-38, %v1757
        %v1759 = vsel %vm1756, %v1758, %v1754
        %v1760 = vmul.f32 1.0, %v1759
        %v1761 = vrcp.pop %v1705
        %v1762 = vmul.f32 %v1705, %v1761
        %v1763 = vsub.f32 1.0, %v1762
        %v1764 = vmul.f32 %v1761, %v1763
        %v1765 = vadd.f32 %v1761, %v1764
        %vm1766 = vweird.f32 %v1705
        %vm1767 = vweird.f32 %v1761
        %vm1768 = vmor %vm1766, %vm1767
        %v1769 = vsel %vm1768, %v1761, %v1765
        %v1770 = vand.u32 2147483647, %v1705
        %vm1771 = vcmp.eq.f32.partialorder %v1770, 8.507059e+37
        %v1772 = vand.u32 %v1705, 2147483648
        %v1773 = vor.u32 1.1754944e-38, %v1772
        %v1774 = vsel %vm1771, %v1773, %v1769
        %v1775 = vmul.f32 1.0, %v1774
        %v1776 = vrcp.pop %v1706
        %v1777 = vmul.f32 %v1706, %v1776
        %v1778 = vsub.f32 1.0, %v1777
        %v1779 = vmul.f32 %v1776, %v1778
        %v1780 = vadd.f32 %v1776, %v1779
        %vm1781 = vweird.f32 %v1706
        %vm1782 = vweird.f32 %v1776
        %vm1783 = vmor %vm1781, %vm1782
        %v1784 = vsel %vm1783, %v1776, %v1780
        %v1785 = vand.u32 2147483647, %v1706
        %vm1786 = vcmp.eq.f32.partialorder %v1785, 8.507059e+37
        %v1787 = vand.u32 %v1706, 2147483648
        %v1788 = vor.u32 1.1754944e-38, %v1787
        %v1789 = vsel %vm1786, %v1788, %v1784
        %v1790 = vmul.f32 1.0, %v1789
        %v1791 = vrcp.pop %v1707
        %v1792 = vmul.f32 %v1707, %v1791
        %v1793 = vsub.f32 1.0, %v1792
        %v1794 = vmul.f32 %v1791, %v1793
        %v1795 = vadd.f32 %v1791, %v1794
        %vm1796 = vweird.f32 %v1707
        %vm1797 = vweird.f32 %v1791
        %vm1798 = vmor %vm1796, %vm1797
        %v1799 = vsel %vm1798, %v1791, %v1795
        %v1800 = vand.u32 2147483647, %v1707
        %vm1801 = vcmp.eq.f32.partialorder %v1800, 8.507059e+37
        %v1802 = vand.u32 %v1707, 2147483648
        %v1803 = vor.u32 1.1754944e-38, %v1802
        %v1804 = vsel %vm1801, %v1803, %v1799
        %v1805 = vmul.f32 1.0, %v1804
        %v1806 = vrcp.pop %v1708
        %v1807 = vmul.f32 %v1708, %v1806
        %v1808 = vsub.f32 1.0, %v1807
        %v1809 = vmul.f32 %v1806, %v1808
        %v1810 = vadd.f32 %v1806, %v1809
        %vm1811 = vweird.f32 %v1708
        %vm1812 = vweird.f32 %v1806
        %vm1813 = vmor %vm1811, %vm1812
        %v1814 = vsel %vm1813, %v1806, %v1810
        %v1815 = vand.u32 2147483647, %v1708
        %vm1816 = vcmp.eq.f32.partialorder %v1815, 8.507059e+37
        %v1817 = vand.u32 %v1708, 2147483648
        %v1818 = vor.u32 1.1754944e-38, %v1817
        %v1819 = vsel %vm1816, %v1818, %v1814
        %v1820 = vmul.f32 1.0, %v1819
        %v1821 = vrcp.pop %v1709
        %v1822 = vmul.f32 %v1709, %v1821
        %v1823 = vsub.f32 1.0, %v1822
        %v1824 = vmul.f32 %v1821, %v1823
        %v1825 = vadd.f32 %v1821, %v1824
        %vm1826 = vweird.f32 %v1709
        %vm1827 = vweird.f32 %v1821
        %vm1828 = vmor %vm1826, %vm1827
        %v1829 = vsel %vm1828, %v1821, %v1825
        %v1830 = vand.u32 2147483647, %v1709
        %vm1831 = vcmp.eq.f32.partialorder %v1830, 8.507059e+37
        %v1832 = vand.u32 %v1709, 2147483648
        %v1833 = vor.u32 1.1754944e-38, %v1832
        %v1834 = vsel %vm1831, %v1833, %v1829
        %v1835 = vmul.f32 1.0, %v1834
        %v1836 = vrcp.pop %v1710
        %v1837 = vmul.f32 %v1710, %v1836
        %v1838 = vsub.f32 1.0, %v1837
        %v1839 = vmul.f32 %v1836, %v1838
        %v1840 = vadd.f32 %v1836, %v1839
        %vm1841 = vweird.f32 %v1710
        %vm1842 = vweird.f32 %v1836
        %vm1843 = vmor %vm1841, %vm1842
        %v1844 = vsel %vm1843, %v1836, %v1840
        %v1845 = vand.u32 2147483647, %v1710
        %vm1846 = vcmp.eq.f32.partialorder %v1845, 8.507059e+37
        %v1847 = vand.u32 %v1710, 2147483648
        %v1848 = vor.u32 1.1754944e-38, %v1847
        %v1849 = vsel %vm1846, %v1848, %v1844
        %v1850 = vmul.f32 1.0, %v1849
        %v1851 = vrcp.pop %v1711
        %v1852 = vmul.f32 %v1711, %v1851
        %v1853 = vsub.f32 1.0, %v1852
        %v1854 = vmul.f32 %v1851, %v1853
        %v1855 = vadd.f32 %v1851, %v1854
        %vm1856 = vweird.f32 %v1711
        %vm1857 = vweird.f32 %v1851
        %vm1858 = vmor %vm1856, %vm1857
        %v1859 = vsel %vm1858, %v1851, %v1855
        %v1860 = vand.u32 2147483647, %v1711
        %vm1861 = vcmp.eq.f32.partialorder %v1860, 8.507059e+37
        %v1862 = vand.u32 %v1711, 2147483648
        %v1863 = vor.u32 1.1754944e-38, %v1862
        %v1864 = vsel %vm1861, %v1863, %v1859
        %v1865 = vmul.f32 1.0, %v1864
        %v1866 = vrcp.pop %v1712
        %v1867 = vmul.f32 %v1712, %v1866
        %v1868 = vsub.f32 1.0, %v1867
        %v1869 = vmul.f32 %v1866, %v1868
        %v1870 = vadd.f32 %v1866, %v1869
        %vm1871 = vweird.f32 %v1712
        %vm1872 = vweird.f32 %v1866
        %vm1873 = vmor %vm1871, %vm1872
        %v1874 = vsel %vm1873, %v1866, %v1870
        %v1875 = vand.u32 2147483647, %v1712
        %vm1876 = vcmp.eq.f32.partialorder %v1875, 8.507059e+37
        %v1877 = vand.u32 %v1712, 2147483648
        %v1878 = vor.u32 1.1754944e-38, %v1877
        %v1879 = vsel %vm1876, %v1878, %v1874
        %v1880 = vmul.f32 1.0, %v1879
        %v1881 = vrcp.pop %v1713
        %v1882 = vmul.f32 %v1713, %v1881
        %v1883 = vsub.f32 1.0, %v1882
        %v1884 = vmul.f32 %v1881, %v1883
        %v1885 = vadd.f32 %v1881, %v1884
        %vm1886 = vweird.f32 %v1713
        %vm1887 = vweird.f32 %v1881
        %vm1888 = vmor %vm1886, %vm1887
        %v1889 = vsel %vm1888, %v1881, %v1885
        %v1890 = vand.u32 2147483647, %v1713
        %vm1891 = vcmp.eq.f32.partialorder %v1890, 8.507059e+37
        %v1892 = vand.u32 %v1713, 2147483648
        %v1893 = vor.u32 1.1754944e-38, %v1892
        %v1894 = vsel %vm1891, %v1893, %v1889
        %v1895 = vmul.f32 1.0, %v1894
        %v1896 = vrcp.pop %v1714
        %v1897 = vmul.f32 %v1714, %v1896
        %v1898 = vsub.f32 1.0, %v1897
        %v1899 = vmul.f32 %v1896, %v1898
        %v1900 = vadd.f32 %v1896, %v1899
        %vm1901 = vweird.f32 %v1714
        %vm1902 = vweird.f32 %v1896
        %vm1903 = vmor %vm1901, %vm1902
        %v1904 = vsel %vm1903, %v1896, %v1900
        %v1905 = vand.u32 2147483647, %v1714
        %vm1906 = vcmp.eq.f32.partialorder %v1905, 8.507059e+37
        %v1907 = vand.u32 %v1714, 2147483648
        %v1908 = vor.u32 1.1754944e-38, %v1907
        %v1909 = vsel %vm1906, %v1908, %v1904
        %v1910 = vmul.f32 1.0, %v1909
        %v1911 = vrcp.pop %v1715
        %v1912 = vmul.f32 %v1715, %v1911
        %v1913 = vsub.f32 1.0, %v1912
        %v1914 = vmul.f32 %v1911, %v1913
        %v1915 = vadd.f32 %v1911, %v1914
        %vm1916 = vweird.f32 %v1715
        %vm1917 = vweird.f32 %v1911
        %vm1918 = vmor %vm1916, %vm1917
        %v1919 = vsel %vm1918, %v1911, %v1915
        %v1920 = vand.u32 2147483647, %v1715
        %vm1921 = vcmp.eq.f32.partialorder %v1920, 8.507059e+37
        %v1922 = vand.u32 %v1715, 2147483648
        %v1923 = vor.u32 1.1754944e-38, %v1922
        %v1924 = vsel %vm1921, %v1923, %v1919
        %v1925 = vmul.f32 1.0, %v1924
        %1940 = vset.pattern.permute.xlu0 1
        %1941 = vperm.xlu0 %1940, %v1730
        %v1942 = vpop.permute.xlu0 %1941
        %1943 = vset.pattern.permute.xlu0 1
        %1944 = vperm.xlu0 %1943, %v1745
        %v1945 = vpop.permute.xlu0 %1944
        %1946 = vset.pattern.permute.xlu0 1
        %1947 = vperm.xlu0 %1946, %v1760
        %v1948 = vpop.permute.xlu0 %1947
        %1949 = vset.pattern.permute.xlu0 1
        %1950 = vperm.xlu0 %1949, %v1775
        %v1951 = vpop.permute.xlu0 %1950
        %1952 = vset.pattern.permute.xlu0 1
        %1953 = vperm.xlu0 %1952, %v1790
        %v1954 = vpop.permute.xlu0 %1953
        %1955 = vset.pattern.permute.xlu0 1
        %1956 = vperm.xlu0 %1955, %v1805
        %v1957 = vpop.permute.xlu0 %1956
        %1958 = vset.pattern.permute.xlu0 1
        %1959 = vperm.xlu0 %1958, %v1820
        %v1960 = vpop.permute.xlu0 %1959
        %1961 = vset.pattern.permute.xlu0 1
        %1962 = vperm.xlu0 %1961, %v1835
        %v1963 = vpop.permute.xlu0 %1962
        %1964 = vset.pattern.permute.xlu0 1
        %1965 = vperm.xlu0 %1964, %v1850
        %v1966 = vpop.permute.xlu0 %1965
        %1967 = vset.pattern.permute.xlu0 1
        %1968 = vperm.xlu0 %1967, %v1865
        %v1969 = vpop.permute.xlu0 %1968
        %1970 = vset.pattern.permute.xlu0 1
        %1971 = vperm.xlu0 %1970, %v1880
        %v1972 = vpop.permute.xlu0 %1971
        %1973 = vset.pattern.permute.xlu0 1
        %1974 = vperm.xlu0 %1973, %v1895
        %v1975 = vpop.permute.xlu0 %1974
        %1976 = vset.pattern.permute.xlu0 1
        %1977 = vperm.xlu0 %1976, %v1910
        %v1978 = vpop.permute.xlu0 %1977
        %1979 = vset.pattern.permute.xlu0 1
        %1980 = vperm.xlu0 %1979, %v1925
        %v1981 = vpop.permute.xlu0 %1980
        %v1982 = vperm.slane %v1942, %v1409
        %v1983 = vperm.slane %v1945, %v1411
        %v1984 = vsel %vm1413, %v1983, %v1982
        %v1985 = vperm.slane %v1948, %v1415
        %v1986 = vsel %vm1417, %v1985, %v1984
        %v1987 = vperm.slane %v1951, %v1419
        %v1988 = vsel %vm1421, %v1987, %v1986
        %v1989 = vperm.slane %v1954, %v1423
        %v1990 = vsel %vm1425, %v1989, %v1988
        %v1991 = vperm.slane %v1957, %v1427
        %v1992 = vsel %vm1429, %v1991, %v1990
        %v1993 = vperm.slane %v1960, %v1431
        %v1994 = vsel %vm1433, %v1993, %v1992
        %v1995 = vperm.slane %v1963, %v1409
        %v1996 = vperm.slane %v1966, %v1411
        %v1997 = vsel %vm1413, %v1996, %v1995
        %v1998 = vperm.slane %v1969, %v1415
        %v1999 = vsel %vm1417, %v1998, %v1997
        %v2000 = vperm.slane %v1972, %v1419
        %v2001 = vsel %vm1421, %v2000, %v1999
        %v2002 = vperm.slane %v1975, %v1423
        %v2003 = vsel %vm1425, %v2002, %v2001
        %v2004 = vperm.slane %v1978, %v1427
        %v2005 = vsel %vm1429, %v2004, %v2003
        %v2006 = vperm.slane %v1981, %v1431
        %v2007 = vsel %vm1433, %v2006, %v2005
        %v2008 = vsel %vm1448, %v2007, %v1994
        %v2010 = vsel %vm1451, %v2008, 0.0
        %s2011 = scalar_lea.vmem %s258, 2 [#allocation8]
        %2012 = vst [vmem:[%s2011] sm:$0x3] %v2010
        %v2013 = vpack.c.bf16 %v1730, %v1730
        %v2014 = vpack.c.bf16 %v1745, %v1745
        %v2015 = vpack.c.bf16 %v1760, %v1760
        %v2016 = vpack.c.bf16 %v1775, %v1775
        %v2017 = vpack.c.bf16 %v1790, %v1790
        %v2018 = vpack.c.bf16 %v1805, %v1805
        %v2019 = vpack.c.bf16 %v1820, %v1820
        %v2020 = vpack.c.bf16 %v1835, %v1835
        %v2021 = vpack.c.bf16 %v1850, %v1850
        %v2022 = vpack.c.bf16 %v1865, %v1865
        %v2023 = vpack.c.bf16 %v1880, %v1880
        %v2024 = vpack.c.bf16 %v1895, %v1895
        %v2025 = vpack.c.bf16 %v1910, %v1910
        %v2026 = vpack.c.bf16 %v1925, %v1925
        %v2034 = vunpack.c.l.b16 %v2013
        %v2035 = vunpack.c.l.b16 %v2014
        %v2036 = vunpack.c.l.b16 %v2015
        %v2037 = vunpack.c.l.b16 %v2016
        %v2038 = vunpack.c.l.b16 %v2017
        %v2039 = vunpack.c.l.b16 %v2018
        %v2040 = vunpack.c.l.b16 %v2019
        %v2041 = vpack.c.b16 %v2035, %v2034
        %v2042 = vpack.c.b16 %v2037, %v2036
        %v2043 = vpack.c.b16 %v2039, %v2038
        %v2044 = vpack.c.b16 %v2040, %v2040
        %v2045 = vunpack.c.l.b16 %v2041
        %v2046 = vunpack.c.h.b16 %v2041
        %v2047 = vunpack.c.l.b16 %v2042
        %v2048 = vunpack.c.h.b16 %v2042
        %v2049 = vunpack.c.l.b16 %v2043
        %v2050 = vunpack.c.h.b16 %v2043
        %v2051 = vunpack.c.l.b16 %v2044
        %2052 = vset.pattern.permute.xlu0 1
        %2053 = vperm.xlu0 %2052, %v2045
        %v2054 = vpop.permute.xlu0 %2053
        %2055 = vset.pattern.permute.xlu0 1
        %2056 = vperm.xlu0 %2055, %v2046
        %v2057 = vpop.permute.xlu0 %2056
        %2058 = vset.pattern.permute.xlu0 1
        %2059 = vperm.xlu0 %2058, %v2047
        %v2060 = vpop.permute.xlu0 %2059
        %2061 = vset.pattern.permute.xlu0 1
        %2062 = vperm.xlu0 %2061, %v2048
        %v2063 = vpop.permute.xlu0 %2062
        %2064 = vset.pattern.permute.xlu0 1
        %2065 = vperm.xlu0 %2064, %v2049
        %v2066 = vpop.permute.xlu0 %2065
        %2067 = vset.pattern.permute.xlu0 1
        %2068 = vperm.xlu0 %2067, %v2050
        %v2069 = vpop.permute.xlu0 %2068
        %2070 = vset.pattern.permute.xlu0 1
        %2071 = vperm.xlu0 %2070, %v2051
        %v2072 = vpop.permute.xlu0 %2071
        %v2073 = vperm.slane %v2054, %v1409
        %v2074 = vperm.slane %v2057, %v1411
        %v2075 = vsel %vm1413, %v2074, %v2073
        %v2076 = vperm.slane %v2060, %v1415
        %v2077 = vsel %vm1417, %v2076, %v2075
        %v2078 = vperm.slane %v2063, %v1419
        %v2079 = vsel %vm1421, %v2078, %v2077
        %v2080 = vperm.slane %v2066, %v1423
        %v2081 = vsel %vm1425, %v2080, %v2079
        %v2082 = vperm.slane %v2069, %v1427
        %v2083 = vsel %vm1429, %v2082, %v2081
        %v2084 = vperm.slane %v2072, %v1431
        %v2085 = vsel %vm1433, %v2084, %v2083
        %v2086 = vpack.c.b16 %v2085, %v2085
        %v2087 = vpack.c.b16 %v528, %v528
        %v2089 = vsel %vm1451, %v2086, 0
        %v2092 = vsel %vm1532, %v2087, 0
        %2094 = vmatpush.bf16.msra.mxu0 0
        %2095 = vmatpush.bf16.msra.mxu0 0
        %2096 = vmatpush.bf16.msra.mxu0 0
        %2097 = vmatpush.bf16.msra.mxu0 0
        %2098 = vmatpush.bf16.msra.mxu0 %v2092
        %2099 = vmatpush.bf16.msra.mxu0 %v629
        %2100 = vmatpush.bf16.msra.mxu0 %v628
        %2101 = vmatpush.bf16.msra.mxu0 %v627
        %2102 = vmatmul.bf16.gmra.mxu0 %v2089
        %v2103 = vpop.f32.mrf.mxu0
        %v2104 = vadd.f32 0.0, %v2103
        %v2105 = vpop.f32.mrf.mxu0
        %2106 = vdwg.mxu0
        %v2114 = vunpack.c.l.b16 %v2020
        %v2115 = vunpack.c.l.b16 %v2021
        %v2116 = vunpack.c.l.b16 %v2022
        %v2117 = vunpack.c.l.b16 %v2023
        %v2118 = vunpack.c.l.b16 %v2024
        %v2119 = vunpack.c.l.b16 %v2025
        %v2120 = vunpack.c.l.b16 %v2026
        %v2121 = vpack.c.b16 %v2115, %v2114
        %v2122 = vpack.c.b16 %v2117, %v2116
        %v2123 = vpack.c.b16 %v2119, %v2118
        %v2124 = vpack.c.b16 %v2120, %v2120
        %v2125 = vunpack.c.l.b16 %v2121
        %v2126 = vunpack.c.h.b16 %v2121
        %v2127 = vunpack.c.l.b16 %v2122
        %v2128 = vunpack.c.h.b16 %v2122
        %v2129 = vunpack.c.l.b16 %v2123
        %v2130 = vunpack.c.h.b16 %v2123
        %v2131 = vunpack.c.l.b16 %v2124
        %2132 = vset.pattern.permute.xlu0 1
        %2133 = vperm.xlu0 %2132, %v2125
        %v2134 = vpop.permute.xlu0 %2133
        %2135 = vset.pattern.permute.xlu0 1
        %2136 = vperm.xlu0 %2135, %v2126
        %v2137 = vpop.permute.xlu0 %2136
        %2138 = vset.pattern.permute.xlu0 1
        %2139 = vperm.xlu0 %2138, %v2127
        %v2140 = vpop.permute.xlu0 %2139
        %2141 = vset.pattern.permute.xlu0 1
        %2142 = vperm.xlu0 %2141, %v2128
        %v2143 = vpop.permute.xlu0 %2142
        %2144 = vset.pattern.permute.xlu0 1
        %2145 = vperm.xlu0 %2144, %v2129
        %v2146 = vpop.permute.xlu0 %2145
        %2147 = vset.pattern.permute.xlu0 1
        %2148 = vperm.xlu0 %2147, %v2130
        %v2149 = vpop.permute.xlu0 %2148
        %2150 = vset.pattern.permute.xlu0 1
        %2151 = vperm.xlu0 %2150, %v2131
        %v2152 = vpop.permute.xlu0 %2151
        %v2153 = vperm.slane %v2134, %v1409
        %v2154 = vperm.slane %v2137, %v1411
        %v2155 = vsel %vm1413, %v2154, %v2153
        %v2156 = vperm.slane %v2140, %v1415
        %v2157 = vsel %vm1417, %v2156, %v2155
        %v2158 = vperm.slane %v2143, %v1419
        %v2159 = vsel %vm1421, %v2158, %v2157
        %v2160 = vperm.slane %v2146, %v1423
        %v2161 = vsel %vm1425, %v2160, %v2159
        %v2162 = vperm.slane %v2149, %v1427
        %v2163 = vsel %vm1429, %v2162, %v2161
        %v2164 = vperm.slane %v2152, %v1431
        %v2165 = vsel %vm1433, %v2164, %v2163
        %v2166 = vpack.c.b16 %v2165, %v2165
        %v2167 = vpack.c.b16 %v530, %v529
        %v2168 = vpack.c.b16 %v532, %v531
        %v2169 = vpack.c.b16 %v534, %v533
        %v2170 = vpack.c.b16 %v535, %v535
        %v2175 = vsel %vm1451, %v2166, 0
        %v2178 = vsel %vm1532, %v2170, 0
        %2180 = vmatpush.bf16.msra.mxu0 0
        %2181 = vmatpush.bf16.msra.mxu0 0
        %2182 = vmatpush.bf16.msra.mxu0 0
        %2183 = vmatpush.bf16.msra.mxu0 0
        %2184 = vmatpush.bf16.msra.mxu0 %v2178
        %2185 = vmatpush.bf16.msra.mxu0 %v2169
        %2186 = vmatpush.bf16.msra.mxu0 %v2168
        %2187 = vmatpush.bf16.msra.mxu0 %v2167
        %2188 = vmatmul.bf16.gmra.mxu0 %v2175
        %v2189 = vpop.f32.mrf.mxu0
        %v2190 = vadd.f32 0.0, %v2189
        %v2191 = vpop.f32.mrf.mxu0
        %2192 = vdwg.mxu0
        %v2193 = vmul.f32 %v2104, 0.020408163
        %v2194 = vmul.f32 %v2190, 0.020408163
        %v2197 = vrot.slane %v2194, 7
        %v2198 = vsel %vm1448, %v2197, %v2193
        %s2200 = scalar_lea.vmem %s251, 2 [#allocation7]
        %2201 = vst [vmem:[%s2200] sm:$0x3] %v2198
        %s2202 = sadd.s32 %s1069, 2
        %s2203 = sld [smem:[#allocation6 + %s2202]]
        %v2204 = vstv %s2203
        %v2205 = vadd.f32 %v860, %v2204
        %v2206 = vadd.f32 %v862, %v2204
        %v2207 = vadd.f32 %v865, %v2204
        %v2208 = vadd.f32 %v867, %v2204
        %v2209 = vadd.f32 %v870, %v2204
        %v2210 = vadd.f32 %v872, %v2204
        %v2211 = vadd.f32 %v875, %v2204
        %v2212 = vadd.f32 %v877, %v2204
        %v2213 = vadd.f32 %v880, %v2204
        %v2214 = vadd.f32 %v882, %v2204
        %v2215 = vadd.f32 %v885, %v2204
        %v2216 = vadd.f32 %v887, %v2204
        %v2217 = vadd.f32 %v890, %v2204
        %v2218 = vadd.f32 %v892, %v2204
        %v2219 = vxor.u32 %v2205, 2147483648
        %v2220 = vxor.u32 %v2206, 2147483648
        %v2221 = vxor.u32 %v2207, 2147483648
        %v2222 = vxor.u32 %v2208, 2147483648
        %v2223 = vxor.u32 %v2209, 2147483648
        %v2224 = vxor.u32 %v2210, 2147483648
        %v2225 = vxor.u32 %v2211, 2147483648
        %v2226 = vxor.u32 %v2212, 2147483648
        %v2227 = vxor.u32 %v2213, 2147483648
        %v2228 = vxor.u32 %v2214, 2147483648
        %v2229 = vxor.u32 %v2215, 2147483648
        %v2230 = vxor.u32 %v2216, 2147483648
        %v2231 = vxor.u32 %v2217, 2147483648
        %v2232 = vxor.u32 %v2218, 2147483648
        %v2233 = vmul.f32 %v2219, 1.442695
        %v2234 = vpow.pop %v2233
        %v2235 = vmul.f32 %v2220, 1.442695
        %v2236 = vpow.pop %v2235
        %v2237 = vmul.f32 %v2221, 1.442695
        %v2238 = vpow.pop %v2237
        %v2239 = vmul.f32 %v2222, 1.442695
        %v2240 = vpow.pop %v2239
        %v2241 = vmul.f32 %v2223, 1.442695
        %v2242 = vpow.pop %v2241
        %v2243 = vmul.f32 %v2224, 1.442695
        %v2244 = vpow.pop %v2243
        %v2245 = vmul.f32 %v2225, 1.442695
        %v2246 = vpow.pop %v2245
        %v2247 = vmul.f32 %v2226, 1.442695
        %v2248 = vpow.pop %v2247
        %v2249 = vmul.f32 %v2227, 1.442695
        %v2250 = vpow.pop %v2249
        %v2251 = vmul.f32 %v2228, 1.442695
        %v2252 = vpow.pop %v2251
        %v2253 = vmul.f32 %v2229, 1.442695
        %v2254 = vpow.pop %v2253
        %v2255 = vmul.f32 %v2230, 1.442695
        %v2256 = vpow.pop %v2255
        %v2257 = vmul.f32 %v2231, 1.442695
        %v2258 = vpow.pop %v2257
        %v2259 = vmul.f32 %v2232, 1.442695
        %v2260 = vpow.pop %v2259
        %v2261 = vadd.f32 %v2234, 1.0
        %v2262 = vadd.f32 %v2236, 1.0
        %v2263 = vadd.f32 %v2238, 1.0
        %v2264 = vadd.f32 %v2240, 1.0
        %v2265 = vadd.f32 %v2242, 1.0
        %v2266 = vadd.f32 %v2244, 1.0
        %v2267 = vadd.f32 %v2246, 1.0
        %v2268 = vadd.f32 %v2248, 1.0
        %v2269 = vadd.f32 %v2250, 1.0
        %v2270 = vadd.f32 %v2252, 1.0
        %v2271 = vadd.f32 %v2254, 1.0
        %v2272 = vadd.f32 %v2256, 1.0
        %v2273 = vadd.f32 %v2258, 1.0
        %v2274 = vadd.f32 %v2260, 1.0
        %v2275 = vrcp.pop %v2261
        %v2276 = vmul.f32 %v2261, %v2275
        %v2277 = vsub.f32 1.0, %v2276
        %v2278 = vmul.f32 %v2275, %v2277
        %v2279 = vadd.f32 %v2275, %v2278
        %vm2280 = vweird.f32 %v2261
        %vm2281 = vweird.f32 %v2275
        %vm2282 = vmor %vm2280, %vm2281
        %v2283 = vsel %vm2282, %v2275, %v2279
        %v2284 = vand.u32 2147483647, %v2261
        %vm2285 = vcmp.eq.f32.partialorder %v2284, 8.507059e+37
        %v2286 = vand.u32 %v2261, 2147483648
        %v2287 = vor.u32 1.1754944e-38, %v2286
        %v2288 = vsel %vm2285, %v2287, %v2283
        %v2289 = vmul.f32 1.0, %v2288
        %v2290 = vrcp.pop %v2262
        %v2291 = vmul.f32 %v2262, %v2290
        %v2292 = vsub.f32 1.0, %v2291
        %v2293 = vmul.f32 %v2290, %v2292
        %v2294 = vadd.f32 %v2290, %v2293
        %vm2295 = vweird.f32 %v2262
        %vm2296 = vweird.f32 %v2290
        %vm2297 = vmor %vm2295, %vm2296
        %v2298 = vsel %vm2297, %v2290, %v2294
        %v2299 = vand.u32 2147483647, %v2262
        %vm2300 = vcmp.eq.f32.partialorder %v2299, 8.507059e+37
        %v2301 = vand.u32 %v2262, 2147483648
        %v2302 = vor.u32 1.1754944e-38, %v2301
        %v2303 = vsel %vm2300, %v2302, %v2298
        %v2304 = vmul.f32 1.0, %v2303
        %v2305 = vrcp.pop %v2263
        %v2306 = vmul.f32 %v2263, %v2305
        %v2307 = vsub.f32 1.0, %v2306
        %v2308 = vmul.f32 %v2305, %v2307
        %v2309 = vadd.f32 %v2305, %v2308
        %vm2310 = vweird.f32 %v2263
        %vm2311 = vweird.f32 %v2305
        %vm2312 = vmor %vm2310, %vm2311
        %v2313 = vsel %vm2312, %v2305, %v2309
        %v2314 = vand.u32 2147483647, %v2263
        %vm2315 = vcmp.eq.f32.partialorder %v2314, 8.507059e+37
        %v2316 = vand.u32 %v2263, 2147483648
        %v2317 = vor.u32 1.1754944e-38, %v2316
        %v2318 = vsel %vm2315, %v2317, %v2313
        %v2319 = vmul.f32 1.0, %v2318
        %v2320 = vrcp.pop %v2264
        %v2321 = vmul.f32 %v2264, %v2320
        %v2322 = vsub.f32 1.0, %v2321
        %v2323 = vmul.f32 %v2320, %v2322
        %v2324 = vadd.f32 %v2320, %v2323
        %vm2325 = vweird.f32 %v2264
        %vm2326 = vweird.f32 %v2320
        %vm2327 = vmor %vm2325, %vm2326
        %v2328 = vsel %vm2327, %v2320, %v2324
        %v2329 = vand.u32 2147483647, %v2264
        %vm2330 = vcmp.eq.f32.partialorder %v2329, 8.507059e+37
        %v2331 = vand.u32 %v2264, 2147483648
        %v2332 = vor.u32 1.1754944e-38, %v2331
        %v2333 = vsel %vm2330, %v2332, %v2328
        %v2334 = vmul.f32 1.0, %v2333
        %v2335 = vrcp.pop %v2265
        %v2336 = vmul.f32 %v2265, %v2335
        %v2337 = vsub.f32 1.0, %v2336
        %v2338 = vmul.f32 %v2335, %v2337
        %v2339 = vadd.f32 %v2335, %v2338
        %vm2340 = vweird.f32 %v2265
        %vm2341 = vweird.f32 %v2335
        %vm2342 = vmor %vm2340, %vm2341
        %v2343 = vsel %vm2342, %v2335, %v2339
        %v2344 = vand.u32 2147483647, %v2265
        %vm2345 = vcmp.eq.f32.partialorder %v2344, 8.507059e+37
        %v2346 = vand.u32 %v2265, 2147483648
        %v2347 = vor.u32 1.1754944e-38, %v2346
        %v2348 = vsel %vm2345, %v2347, %v2343
        %v2349 = vmul.f32 1.0, %v2348
        %v2350 = vrcp.pop %v2266
        %v2351 = vmul.f32 %v2266, %v2350
        %v2352 = vsub.f32 1.0, %v2351
        %v2353 = vmul.f32 %v2350, %v2352
        %v2354 = vadd.f32 %v2350, %v2353
        %vm2355 = vweird.f32 %v2266
        %vm2356 = vweird.f32 %v2350
        %vm2357 = vmor %vm2355, %vm2356
        %v2358 = vsel %vm2357, %v2350, %v2354
        %v2359 = vand.u32 2147483647, %v2266
        %vm2360 = vcmp.eq.f32.partialorder %v2359, 8.507059e+37
        %v2361 = vand.u32 %v2266, 2147483648
        %v2362 = vor.u32 1.1754944e-38, %v2361
        %v2363 = vsel %vm2360, %v2362, %v2358
        %v2364 = vmul.f32 1.0, %v2363
        %v2365 = vrcp.pop %v2267
        %v2366 = vmul.f32 %v2267, %v2365
        %v2367 = vsub.f32 1.0, %v2366
        %v2368 = vmul.f32 %v2365, %v2367
        %v2369 = vadd.f32 %v2365, %v2368
        %vm2370 = vweird.f32 %v2267
        %vm2371 = vweird.f32 %v2365
        %vm2372 = vmor %vm2370, %vm2371
        %v2373 = vsel %vm2372, %v2365, %v2369
        %v2374 = vand.u32 2147483647, %v2267
        %vm2375 = vcmp.eq.f32.partialorder %v2374, 8.507059e+37
        %v2376 = vand.u32 %v2267, 2147483648
        %v2377 = vor.u32 1.1754944e-38, %v2376
        %v2378 = vsel %vm2375, %v2377, %v2373
        %v2379 = vmul.f32 1.0, %v2378
        %v2380 = vrcp.pop %v2268
        %v2381 = vmul.f32 %v2268, %v2380
        %v2382 = vsub.f32 1.0, %v2381
        %v2383 = vmul.f32 %v2380, %v2382
        %v2384 = vadd.f32 %v2380, %v2383
        %vm2385 = vweird.f32 %v2268
        %vm2386 = vweird.f32 %v2380
        %vm2387 = vmor %vm2385, %vm2386
        %v2388 = vsel %vm2387, %v2380, %v2384
        %v2389 = vand.u32 2147483647, %v2268
        %vm2390 = vcmp.eq.f32.partialorder %v2389, 8.507059e+37
        %v2391 = vand.u32 %v2268, 2147483648
        %v2392 = vor.u32 1.1754944e-38, %v2391
        %v2393 = vsel %vm2390, %v2392, %v2388
        %v2394 = vmul.f32 1.0, %v2393
        %v2395 = vrcp.pop %v2269
        %v2396 = vmul.f32 %v2269, %v2395
        %v2397 = vsub.f32 1.0, %v2396
        %v2398 = vmul.f32 %v2395, %v2397
        %v2399 = vadd.f32 %v2395, %v2398
        %vm2400 = vweird.f32 %v2269
        %vm2401 = vweird.f32 %v2395
        %vm2402 = vmor %vm2400, %vm2401
        %v2403 = vsel %vm2402, %v2395, %v2399
        %v2404 = vand.u32 2147483647, %v2269
        %vm2405 = vcmp.eq.f32.partialorder %v2404, 8.507059e+37
        %v2406 = vand.u32 %v2269, 2147483648
        %v2407 = vor.u32 1.1754944e-38, %v2406
        %v2408 = vsel %vm2405, %v2407, %v2403
        %v2409 = vmul.f32 1.0, %v2408
        %v2410 = vrcp.pop %v2270
        %v2411 = vmul.f32 %v2270, %v2410
        %v2412 = vsub.f32 1.0, %v2411
        %v2413 = vmul.f32 %v2410, %v2412
        %v2414 = vadd.f32 %v2410, %v2413
        %vm2415 = vweird.f32 %v2270
        %vm2416 = vweird.f32 %v2410
        %vm2417 = vmor %vm2415, %vm2416
        %v2418 = vsel %vm2417, %v2410, %v2414
        %v2419 = vand.u32 2147483647, %v2270
        %vm2420 = vcmp.eq.f32.partialorder %v2419, 8.507059e+37
        %v2421 = vand.u32 %v2270, 2147483648
        %v2422 = vor.u32 1.1754944e-38, %v2421
        %v2423 = vsel %vm2420, %v2422, %v2418
        %v2424 = vmul.f32 1.0, %v2423
        %v2425 = vrcp.pop %v2271
        %v2426 = vmul.f32 %v2271, %v2425
        %v2427 = vsub.f32 1.0, %v2426
        %v2428 = vmul.f32 %v2425, %v2427
        %v2429 = vadd.f32 %v2425, %v2428
        %vm2430 = vweird.f32 %v2271
        %vm2431 = vweird.f32 %v2425
        %vm2432 = vmor %vm2430, %vm2431
        %v2433 = vsel %vm2432, %v2425, %v2429
        %v2434 = vand.u32 2147483647, %v2271
        %vm2435 = vcmp.eq.f32.partialorder %v2434, 8.507059e+37
        %v2436 = vand.u32 %v2271, 2147483648
        %v2437 = vor.u32 1.1754944e-38, %v2436
        %v2438 = vsel %vm2435, %v2437, %v2433
        %v2439 = vmul.f32 1.0, %v2438
        %v2440 = vrcp.pop %v2272
        %v2441 = vmul.f32 %v2272, %v2440
        %v2442 = vsub.f32 1.0, %v2441
        %v2443 = vmul.f32 %v2440, %v2442
        %v2444 = vadd.f32 %v2440, %v2443
        %vm2445 = vweird.f32 %v2272
        %vm2446 = vweird.f32 %v2440
        %vm2447 = vmor %vm2445, %vm2446
        %v2448 = vsel %vm2447, %v2440, %v2444
        %v2449 = vand.u32 2147483647, %v2272
        %vm2450 = vcmp.eq.f32.partialorder %v2449, 8.507059e+37
        %v2451 = vand.u32 %v2272, 2147483648
        %v2452 = vor.u32 1.1754944e-38, %v2451
        %v2453 = vsel %vm2450, %v2452, %v2448
        %v2454 = vmul.f32 1.0, %v2453
        %v2455 = vrcp.pop %v2273
        %v2456 = vmul.f32 %v2273, %v2455
        %v2457 = vsub.f32 1.0, %v2456
        %v2458 = vmul.f32 %v2455, %v2457
        %v2459 = vadd.f32 %v2455, %v2458
        %vm2460 = vweird.f32 %v2273
        %vm2461 = vweird.f32 %v2455
        %vm2462 = vmor %vm2460, %vm2461
        %v2463 = vsel %vm2462, %v2455, %v2459
        %v2464 = vand.u32 2147483647, %v2273
        %vm2465 = vcmp.eq.f32.partialorder %v2464, 8.507059e+37
        %v2466 = vand.u32 %v2273, 2147483648
        %v2467 = vor.u32 1.1754944e-38, %v2466
        %v2468 = vsel %vm2465, %v2467, %v2463
        %v2469 = vmul.f32 1.0, %v2468
        %v2470 = vrcp.pop %v2274
        %v2471 = vmul.f32 %v2274, %v2470
        %v2472 = vsub.f32 1.0, %v2471
        %v2473 = vmul.f32 %v2470, %v2472
        %v2474 = vadd.f32 %v2470, %v2473
        %vm2475 = vweird.f32 %v2274
        %vm2476 = vweird.f32 %v2470
        %vm2477 = vmor %vm2475, %vm2476
        %v2478 = vsel %vm2477, %v2470, %v2474
        %v2479 = vand.u32 2147483647, %v2274
        %vm2480 = vcmp.eq.f32.partialorder %v2479, 8.507059e+37
        %v2481 = vand.u32 %v2274, 2147483648
        %v2482 = vor.u32 1.1754944e-38, %v2481
        %v2483 = vsel %vm2480, %v2482, %v2478
        %v2484 = vmul.f32 1.0, %v2483
        %2499 = vset.pattern.permute.xlu0 2
        %2500 = vperm.xlu0 %2499, %v2289
        %v2501 = vpop.permute.xlu0 %2500
        %2502 = vset.pattern.permute.xlu0 2
        %2503 = vperm.xlu0 %2502, %v2304
        %v2504 = vpop.permute.xlu0 %2503
        %2505 = vset.pattern.permute.xlu0 2
        %2506 = vperm.xlu0 %2505, %v2319
        %v2507 = vpop.permute.xlu0 %2506
        %2508 = vset.pattern.permute.xlu0 2
        %2509 = vperm.xlu0 %2508, %v2334
        %v2510 = vpop.permute.xlu0 %2509
        %2511 = vset.pattern.permute.xlu0 2
        %2512 = vperm.xlu0 %2511, %v2349
        %v2513 = vpop.permute.xlu0 %2512
        %2514 = vset.pattern.permute.xlu0 2
        %2515 = vperm.xlu0 %2514, %v2364
        %v2516 = vpop.permute.xlu0 %2515
        %2517 = vset.pattern.permute.xlu0 2
        %2518 = vperm.xlu0 %2517, %v2379
        %v2519 = vpop.permute.xlu0 %2518
        %2520 = vset.pattern.permute.xlu0 2
        %2521 = vperm.xlu0 %2520, %v2394
        %v2522 = vpop.permute.xlu0 %2521
        %2523 = vset.pattern.permute.xlu0 2
        %2524 = vperm.xlu0 %2523, %v2409
        %v2525 = vpop.permute.xlu0 %2524
        %2526 = vset.pattern.permute.xlu0 2
        %2527 = vperm.xlu0 %2526, %v2424
        %v2528 = vpop.permute.xlu0 %2527
        %2529 = vset.pattern.permute.xlu0 2
        %2530 = vperm.xlu0 %2529, %v2439
        %v2531 = vpop.permute.xlu0 %2530
        %2532 = vset.pattern.permute.xlu0 2
        %2533 = vperm.xlu0 %2532, %v2454
        %v2534 = vpop.permute.xlu0 %2533
        %2535 = vset.pattern.permute.xlu0 2
        %2536 = vperm.xlu0 %2535, %v2469
        %v2537 = vpop.permute.xlu0 %2536
        %2538 = vset.pattern.permute.xlu0 2
        %2539 = vperm.xlu0 %2538, %v2484
        %v2540 = vpop.permute.xlu0 %2539
        %v2541 = vperm.slane %v2501, %v1409
        %v2542 = vperm.slane %v2504, %v1411
        %v2543 = vsel %vm1413, %v2542, %v2541
        %v2544 = vperm.slane %v2507, %v1415
        %v2545 = vsel %vm1417, %v2544, %v2543
        %v2546 = vperm.slane %v2510, %v1419
        %v2547 = vsel %vm1421, %v2546, %v2545
        %v2548 = vperm.slane %v2513, %v1423
        %v2549 = vsel %vm1425, %v2548, %v2547
        %v2550 = vperm.slane %v2516, %v1427
        %v2551 = vsel %vm1429, %v2550, %v2549
        %v2552 = vperm.slane %v2519, %v1431
        %v2553 = vsel %vm1433, %v2552, %v2551
        %v2554 = vperm.slane %v2522, %v1409
        %v2555 = vperm.slane %v2525, %v1411
        %v2556 = vsel %vm1413, %v2555, %v2554
        %v2557 = vperm.slane %v2528, %v1415
        %v2558 = vsel %vm1417, %v2557, %v2556
        %v2559 = vperm.slane %v2531, %v1419
        %v2560 = vsel %vm1421, %v2559, %v2558
        %v2561 = vperm.slane %v2534, %v1423
        %v2562 = vsel %vm1425, %v2561, %v2560
        %v2563 = vperm.slane %v2537, %v1427
        %v2564 = vsel %vm1429, %v2563, %v2562
        %v2565 = vperm.slane %v2540, %v1431
        %v2566 = vsel %vm1433, %v2565, %v2564
        %v2567 = vsel %vm1448, %v2566, %v2553
        %v2569 = vsel %vm1451, %v2567, 0.0
        %s2570 = scalar_lea.vmem %s258, 4 [#allocation8]
        %2571 = vst [vmem:[%s2570] sm:$0x3] %v2569
        %v2572 = vpack.c.bf16 %v2289, %v2289
        %v2573 = vpack.c.bf16 %v2304, %v2304
        %v2574 = vpack.c.bf16 %v2319, %v2319
        %v2575 = vpack.c.bf16 %v2334, %v2334
        %v2576 = vpack.c.bf16 %v2349, %v2349
        %v2577 = vpack.c.bf16 %v2364, %v2364
        %v2578 = vpack.c.bf16 %v2379, %v2379
        %v2579 = vpack.c.bf16 %v2394, %v2394
        %v2580 = vpack.c.bf16 %v2409, %v2409
        %v2581 = vpack.c.bf16 %v2424, %v2424
        %v2582 = vpack.c.bf16 %v2439, %v2439
        %v2583 = vpack.c.bf16 %v2454, %v2454
        %v2584 = vpack.c.bf16 %v2469, %v2469
        %v2585 = vpack.c.bf16 %v2484, %v2484
        %v2593 = vunpack.c.l.b16 %v2572
        %v2594 = vunpack.c.l.b16 %v2573
        %v2595 = vunpack.c.l.b16 %v2574
        %v2596 = vunpack.c.l.b16 %v2575
        %v2597 = vunpack.c.l.b16 %v2576
        %v2598 = vunpack.c.l.b16 %v2577
        %v2599 = vunpack.c.l.b16 %v2578
        %v2600 = vpack.c.b16 %v2594, %v2593
        %v2601 = vpack.c.b16 %v2596, %v2595
        %v2602 = vpack.c.b16 %v2598, %v2597
        %v2603 = vpack.c.b16 %v2599, %v2599
        %v2604 = vunpack.c.l.b16 %v2600
        %v2605 = vunpack.c.h.b16 %v2600
        %v2606 = vunpack.c.l.b16 %v2601
        %v2607 = vunpack.c.h.b16 %v2601
        %v2608 = vunpack.c.l.b16 %v2602
        %v2609 = vunpack.c.h.b16 %v2602
        %v2610 = vunpack.c.l.b16 %v2603
        %2611 = vset.pattern.permute.xlu0 2
        %2612 = vperm.xlu0 %2611, %v2604
        %v2613 = vpop.permute.xlu0 %2612
        %2614 = vset.pattern.permute.xlu0 2
        %2615 = vperm.xlu0 %2614, %v2605
        %v2616 = vpop.permute.xlu0 %2615
        %2617 = vset.pattern.permute.xlu0 2
        %2618 = vperm.xlu0 %2617, %v2606
        %v2619 = vpop.permute.xlu0 %2618
        %2620 = vset.pattern.permute.xlu0 2
        %2621 = vperm.xlu0 %2620, %v2607
        %v2622 = vpop.permute.xlu0 %2621
        %2623 = vset.pattern.permute.xlu0 2
        %2624 = vperm.xlu0 %2623, %v2608
        %v2625 = vpop.permute.xlu0 %2624
        %2626 = vset.pattern.permute.xlu0 2
        %2627 = vperm.xlu0 %2626, %v2609
        %v2628 = vpop.permute.xlu0 %2627
        %2629 = vset.pattern.permute.xlu0 2
        %2630 = vperm.xlu0 %2629, %v2610
        %v2631 = vpop.permute.xlu0 %2630
        %v2632 = vperm.slane %v2613, %v1409
        %v2633 = vperm.slane %v2616, %v1411
        %v2634 = vsel %vm1413, %v2633, %v2632
        %v2635 = vperm.slane %v2619, %v1415
        %v2636 = vsel %vm1417, %v2635, %v2634
        %v2637 = vperm.slane %v2622, %v1419
        %v2638 = vsel %vm1421, %v2637, %v2636
        %v2639 = vperm.slane %v2625, %v1423
        %v2640 = vsel %vm1425, %v2639, %v2638
        %v2641 = vperm.slane %v2628, %v1427
        %v2642 = vsel %vm1429, %v2641, %v2640
        %v2643 = vperm.slane %v2631, %v1431
        %v2644 = vsel %vm1433, %v2643, %v2642
        %v2645 = vpack.c.b16 %v2644, %v2644
        %v2646 = vpack.c.b16 %v542, %v542
        %v2648 = vsel %vm1451, %v2645, 0
        %v2651 = vsel %vm1532, %v2646, 0
        %2653 = vmatpush.bf16.msra.mxu0 0
        %2654 = vmatpush.bf16.msra.mxu0 0
        %2655 = vmatpush.bf16.msra.mxu0 0
        %2656 = vmatpush.bf16.msra.mxu0 0
        %2657 = vmatpush.bf16.msra.mxu0 %v2651
        %2658 = vmatpush.bf16.msra.mxu0 %v636
        %2659 = vmatpush.bf16.msra.mxu0 %v635
        %2660 = vmatpush.bf16.msra.mxu0 %v634
        %2661 = vmatmul.bf16.gmra.mxu0 %v2648
        %v2662 = vpop.f32.mrf.mxu0
        %v2663 = vadd.f32 0.0, %v2662
        %v2664 = vpop.f32.mrf.mxu0
        %2665 = vdwg.mxu0
        %v2673 = vunpack.c.l.b16 %v2579
        %v2674 = vunpack.c.l.b16 %v2580
        %v2675 = vunpack.c.l.b16 %v2581
        %v2676 = vunpack.c.l.b16 %v2582
        %v2677 = vunpack.c.l.b16 %v2583
        %v2678 = vunpack.c.l.b16 %v2584
        %v2679 = vunpack.c.l.b16 %v2585
        %v2680 = vpack.c.b16 %v2674, %v2673
        %v2681 = vpack.c.b16 %v2676, %v2675
        %v2682 = vpack.c.b16 %v2678, %v2677
        %v2683 = vpack.c.b16 %v2679, %v2679
        %v2684 = vunpack.c.l.b16 %v2680
        %v2685 = vunpack.c.h.b16 %v2680
        %v2686 = vunpack.c.l.b16 %v2681
        %v2687 = vunpack.c.h.b16 %v2681
        %v2688 = vunpack.c.l.b16 %v2682
        %v2689 = vunpack.c.h.b16 %v2682
        %v2690 = vunpack.c.l.b16 %v2683
        %2691 = vset.pattern.permute.xlu0 2
        %2692 = vperm.xlu0 %2691, %v2684
        %v2693 = vpop.permute.xlu0 %2692
        %2694 = vset.pattern.permute.xlu0 2
        %2695 = vperm.xlu0 %2694, %v2685
        %v2696 = vpop.permute.xlu0 %2695
        %2697 = vset.pattern.permute.xlu0 2
        %2698 = vperm.xlu0 %2697, %v2686
        %v2699 = vpop.permute.xlu0 %2698
        %2700 = vset.pattern.permute.xlu0 2
        %2701 = vperm.xlu0 %2700, %v2687
        %v2702 = vpop.permute.xlu0 %2701
        %2703 = vset.pattern.permute.xlu0 2
        %2704 = vperm.xlu0 %2703, %v2688
        %v2705 = vpop.permute.xlu0 %2704
        %2706 = vset.pattern.permute.xlu0 2
        %2707 = vperm.xlu0 %2706, %v2689
        %v2708 = vpop.permute.xlu0 %2707
        %2709 = vset.pattern.permute.xlu0 2
        %2710 = vperm.xlu0 %2709, %v2690
        %v2711 = vpop.permute.xlu0 %2710
        %v2712 = vperm.slane %v2693, %v1409
        %v2713 = vperm.slane %v2696, %v1411
        %v2714 = vsel %vm1413, %v2713, %v2712
        %v2715 = vperm.slane %v2699, %v1415
        %v2716 = vsel %vm1417, %v2715, %v2714
        %v2717 = vperm.slane %v2702, %v1419
        %v2718 = vsel %vm1421, %v2717, %v2716
        %v2719 = vperm.slane %v2705, %v1423
        %v2720 = vsel %vm1425, %v2719, %v2718
        %v2721 = vperm.slane %v2708, %v1427
        %v2722 = vsel %vm1429, %v2721, %v2720
        %v2723 = vperm.slane %v2711, %v1431
        %v2724 = vsel %vm1433, %v2723, %v2722
        %v2725 = vpack.c.b16 %v2724, %v2724
        %v2726 = vpack.c.b16 %v544, %v543
        %v2727 = vpack.c.b16 %v546, %v545
        %v2728 = vpack.c.b16 %v548, %v547
        %v2729 = vpack.c.b16 %v549, %v549
        %v2734 = vsel %vm1451, %v2725, 0
        %v2737 = vsel %vm1532, %v2729, 0
        %2739 = vmatpush.bf16.msra.mxu0 0
        %2740 = vmatpush.bf16.msra.mxu0 0
        %2741 = vmatpush.bf16.msra.mxu0 0
        %2742 = vmatpush.bf16.msra.mxu0 0
        %2743 = vmatpush.bf16.msra.mxu0 %v2737
        %2744 = vmatpush.bf16.msra.mxu0 %v2728
        %2745 = vmatpush.bf16.msra.mxu0 %v2727
        %2746 = vmatpush.bf16.msra.mxu0 %v2726
        %2747 = vmatmul.bf16.gmra.mxu0 %v2734
        %v2748 = vpop.f32.mrf.mxu0
        %v2749 = vadd.f32 0.0, %v2748
        %v2750 = vpop.f32.mrf.mxu0
        %2751 = vdwg.mxu0
        %v2752 = vmul.f32 %v2663, 0.020408163
        %v2753 = vmul.f32 %v2749, 0.020408163
        %v2756 = vrot.slane %v2753, 7
        %v2757 = vsel %vm1448, %v2756, %v2752
        %s2759 = scalar_lea.vmem %s251, 4 [#allocation7]
        %2760 = vst [vmem:[%s2759] sm:$0x3] %v2757
        %s2761 = sadd.s32 %s1069, 3
        %s2762 = sld [smem:[#allocation6 + %s2761]]
        %v2763 = vstv %s2762
        %v2764 = vadd.f32 %v895, %v2763
        %v2765 = vadd.f32 %v897, %v2763
        %v2766 = vadd.f32 %v900, %v2763
        %v2767 = vadd.f32 %v902, %v2763
        %v2768 = vadd.f32 %v905, %v2763
        %v2769 = vadd.f32 %v907, %v2763
        %v2770 = vadd.f32 %v910, %v2763
        %v2771 = vadd.f32 %v912, %v2763
        %v2772 = vadd.f32 %v915, %v2763
        %v2773 = vadd.f32 %v917, %v2763
        %v2774 = vadd.f32 %v920, %v2763
        %v2775 = vadd.f32 %v922, %v2763
        %v2776 = vadd.f32 %v925, %v2763
        %v2777 = vadd.f32 %v927, %v2763
        %v2778 = vxor.u32 %v2764, 2147483648
        %v2779 = vxor.u32 %v2765, 2147483648
        %v2780 = vxor.u32 %v2766, 2147483648
        %v2781 = vxor.u32 %v2767, 2147483648
        %v2782 = vxor.u32 %v2768, 2147483648
        %v2783 = vxor.u32 %v2769, 2147483648
        %v2784 = vxor.u32 %v2770, 2147483648
        %v2785 = vxor.u32 %v2771, 2147483648
        %v2786 = vxor.u32 %v2772, 2147483648
        %v2787 = vxor.u32 %v2773, 2147483648
        %v2788 = vxor.u32 %v2774, 2147483648
        %v2789 = vxor.u32 %v2775, 2147483648
        %v2790 = vxor.u32 %v2776, 2147483648
        %v2791 = vxor.u32 %v2777, 2147483648
        %v2792 = vmul.f32 %v2778, 1.442695
        %v2793 = vpow.pop %v2792
        %v2794 = vmul.f32 %v2779, 1.442695
        %v2795 = vpow.pop %v2794
        %v2796 = vmul.f32 %v2780, 1.442695
        %v2797 = vpow.pop %v2796
        %v2798 = vmul.f32 %v2781, 1.442695
        %v2799 = vpow.pop %v2798
        %v2800 = vmul.f32 %v2782, 1.442695
        %v2801 = vpow.pop %v2800
        %v2802 = vmul.f32 %v2783, 1.442695
        %v2803 = vpow.pop %v2802
        %v2804 = vmul.f32 %v2784, 1.442695
        %v2805 = vpow.pop %v2804
        %v2806 = vmul.f32 %v2785, 1.442695
        %v2807 = vpow.pop %v2806
        %v2808 = vmul.f32 %v2786, 1.442695
        %v2809 = vpow.pop %v2808
        %v2810 = vmul.f32 %v2787, 1.442695
        %v2811 = vpow.pop %v2810
        %v2812 = vmul.f32 %v2788, 1.442695
        %v2813 = vpow.pop %v2812
        %v2814 = vmul.f32 %v2789, 1.442695
        %v2815 = vpow.pop %v2814
        %v2816 = vmul.f32 %v2790, 1.442695
        %v2817 = vpow.pop %v2816
        %v2818 = vmul.f32 %v2791, 1.442695
        %v2819 = vpow.pop %v2818
        %v2820 = vadd.f32 %v2793, 1.0
        %v2821 = vadd.f32 %v2795, 1.0
        %v2822 = vadd.f32 %v2797, 1.0
        %v2823 = vadd.f32 %v2799, 1.0
        %v2824 = vadd.f32 %v2801, 1.0
        %v2825 = vadd.f32 %v2803, 1.0
        %v2826 = vadd.f32 %v2805, 1.0
        %v2827 = vadd.f32 %v2807, 1.0
        %v2828 = vadd.f32 %v2809, 1.0
        %v2829 = vadd.f32 %v2811, 1.0
        %v2830 = vadd.f32 %v2813, 1.0
        %v2831 = vadd.f32 %v2815, 1.0
        %v2832 = vadd.f32 %v2817, 1.0
        %v2833 = vadd.f32 %v2819, 1.0
        %v2834 = vrcp.pop %v2820
        %v2835 = vmul.f32 %v2820, %v2834
        %v2836 = vsub.f32 1.0, %v2835
        %v2837 = vmul.f32 %v2834, %v2836
        %v2838 = vadd.f32 %v2834, %v2837
        %vm2839 = vweird.f32 %v2820
        %vm2840 = vweird.f32 %v2834
        %vm2841 = vmor %vm2839, %vm2840
        %v2842 = vsel %vm2841, %v2834, %v2838
        %v2843 = vand.u32 2147483647, %v2820
        %vm2844 = vcmp.eq.f32.partialorder %v2843, 8.507059e+37
        %v2845 = vand.u32 %v2820, 2147483648
        %v2846 = vor.u32 1.1754944e-38, %v2845
        %v2847 = vsel %vm2844, %v2846, %v2842
        %v2848 = vmul.f32 1.0, %v2847
        %v2849 = vrcp.pop %v2821
        %v2850 = vmul.f32 %v2821, %v2849
        %v2851 = vsub.f32 1.0, %v2850
        %v2852 = vmul.f32 %v2849, %v2851
        %v2853 = vadd.f32 %v2849, %v2852
        %vm2854 = vweird.f32 %v2821
        %vm2855 = vweird.f32 %v2849
        %vm2856 = vmor %vm2854, %vm2855
        %v2857 = vsel %vm2856, %v2849, %v2853
        %v2858 = vand.u32 2147483647, %v2821
        %vm2859 = vcmp.eq.f32.partialorder %v2858, 8.507059e+37
        %v2860 = vand.u32 %v2821, 2147483648
        %v2861 = vor.u32 1.1754944e-38, %v2860
        %v2862 = vsel %vm2859, %v2861, %v2857
        %v2863 = vmul.f32 1.0, %v2862
        %v2864 = vrcp.pop %v2822
        %v2865 = vmul.f32 %v2822, %v2864
        %v2866 = vsub.f32 1.0, %v2865
        %v2867 = vmul.f32 %v2864, %v2866
        %v2868 = vadd.f32 %v2864, %v2867
        %vm2869 = vweird.f32 %v2822
        %vm2870 = vweird.f32 %v2864
        %vm2871 = vmor %vm2869, %vm2870
        %v2872 = vsel %vm2871, %v2864, %v2868
        %v2873 = vand.u32 2147483647, %v2822
        %vm2874 = vcmp.eq.f32.partialorder %v2873, 8.507059e+37
        %v2875 = vand.u32 %v2822, 2147483648
        %v2876 = vor.u32 1.1754944e-38, %v2875
        %v2877 = vsel %vm2874, %v2876, %v2872
        %v2878 = vmul.f32 1.0, %v2877
        %v2879 = vrcp.pop %v2823
        %v2880 = vmul.f32 %v2823, %v2879
        %v2881 = vsub.f32 1.0, %v2880
        %v2882 = vmul.f32 %v2879, %v2881
        %v2883 = vadd.f32 %v2879, %v2882
        %vm2884 = vweird.f32 %v2823
        %vm2885 = vweird.f32 %v2879
        %vm2886 = vmor %vm2884, %vm2885
        %v2887 = vsel %vm2886, %v2879, %v2883
        %v2888 = vand.u32 2147483647, %v2823
        %vm2889 = vcmp.eq.f32.partialorder %v2888, 8.507059e+37
        %v2890 = vand.u32 %v2823, 2147483648
        %v2891 = vor.u32 1.1754944e-38, %v2890
        %v2892 = vsel %vm2889, %v2891, %v2887
        %v2893 = vmul.f32 1.0, %v2892
        %v2894 = vrcp.pop %v2824
        %v2895 = vmul.f32 %v2824, %v2894
        %v2896 = vsub.f32 1.0, %v2895
        %v2897 = vmul.f32 %v2894, %v2896
        %v2898 = vadd.f32 %v2894, %v2897
        %vm2899 = vweird.f32 %v2824
        %vm2900 = vweird.f32 %v2894
        %vm2901 = vmor %vm2899, %vm2900
        %v2902 = vsel %vm2901, %v2894, %v2898
        %v2903 = vand.u32 2147483647, %v2824
        %vm2904 = vcmp.eq.f32.partialorder %v2903, 8.507059e+37
        %v2905 = vand.u32 %v2824, 2147483648
        %v2906 = vor.u32 1.1754944e-38, %v2905
        %v2907 = vsel %vm2904, %v2906, %v2902
        %v2908 = vmul.f32 1.0, %v2907
        %v2909 = vrcp.pop %v2825
        %v2910 = vmul.f32 %v2825, %v2909
        %v2911 = vsub.f32 1.0, %v2910
        %v2912 = vmul.f32 %v2909, %v2911
        %v2913 = vadd.f32 %v2909, %v2912
        %vm2914 = vweird.f32 %v2825
        %vm2915 = vweird.f32 %v2909
        %vm2916 = vmor %vm2914, %vm2915
        %v2917 = vsel %vm2916, %v2909, %v2913
        %v2918 = vand.u32 2147483647, %v2825
        %vm2919 = vcmp.eq.f32.partialorder %v2918, 8.507059e+37
        %v2920 = vand.u32 %v2825, 2147483648
        %v2921 = vor.u32 1.1754944e-38, %v2920
        %v2922 = vsel %vm2919, %v2921, %v2917
        %v2923 = vmul.f32 1.0, %v2922
        %v2924 = vrcp.pop %v2826
        %v2925 = vmul.f32 %v2826, %v2924
        %v2926 = vsub.f32 1.0, %v2925
        %v2927 = vmul.f32 %v2924, %v2926
        %v2928 = vadd.f32 %v2924, %v2927
        %vm2929 = vweird.f32 %v2826
        %vm2930 = vweird.f32 %v2924
        %vm2931 = vmor %vm2929, %vm2930
        %v2932 = vsel %vm2931, %v2924, %v2928
        %v2933 = vand.u32 2147483647, %v2826
        %vm2934 = vcmp.eq.f32.partialorder %v2933, 8.507059e+37
        %v2935 = vand.u32 %v2826, 2147483648
        %v2936 = vor.u32 1.1754944e-38, %v2935
        %v2937 = vsel %vm2934, %v2936, %v2932
        %v2938 = vmul.f32 1.0, %v2937
        %v2939 = vrcp.pop %v2827
        %v2940 = vmul.f32 %v2827, %v2939
        %v2941 = vsub.f32 1.0, %v2940
        %v2942 = vmul.f32 %v2939, %v2941
        %v2943 = vadd.f32 %v2939, %v2942
        %vm2944 = vweird.f32 %v2827
        %vm2945 = vweird.f32 %v2939
        %vm2946 = vmor %vm2944, %vm2945
        %v2947 = vsel %vm2946, %v2939, %v2943
        %v2948 = vand.u32 2147483647, %v2827
        %vm2949 = vcmp.eq.f32.partialorder %v2948, 8.507059e+37
        %v2950 = vand.u32 %v2827, 2147483648
        %v2951 = vor.u32 1.1754944e-38, %v2950
        %v2952 = vsel %vm2949, %v2951, %v2947
        %v2953 = vmul.f32 1.0, %v2952
        %v2954 = vrcp.pop %v2828
        %v2955 = vmul.f32 %v2828, %v2954
        %v2956 = vsub.f32 1.0, %v2955
        %v2957 = vmul.f32 %v2954, %v2956
        %v2958 = vadd.f32 %v2954, %v2957
        %vm2959 = vweird.f32 %v2828
        %vm2960 = vweird.f32 %v2954
        %vm2961 = vmor %vm2959, %vm2960
        %v2962 = vsel %vm2961, %v2954, %v2958
        %v2963 = vand.u32 2147483647, %v2828
        %vm2964 = vcmp.eq.f32.partialorder %v2963, 8.507059e+37
        %v2965 = vand.u32 %v2828, 2147483648
        %v2966 = vor.u32 1.1754944e-38, %v2965
        %v2967 = vsel %vm2964, %v2966, %v2962
        %v2968 = vmul.f32 1.0, %v2967
        %v2969 = vrcp.pop %v2829
        %v2970 = vmul.f32 %v2829, %v2969
        %v2971 = vsub.f32 1.0, %v2970
        %v2972 = vmul.f32 %v2969, %v2971
        %v2973 = vadd.f32 %v2969, %v2972
        %vm2974 = vweird.f32 %v2829
        %vm2975 = vweird.f32 %v2969
        %vm2976 = vmor %vm2974, %vm2975
        %v2977 = vsel %vm2976, %v2969, %v2973
        %v2978 = vand.u32 2147483647, %v2829
        %vm2979 = vcmp.eq.f32.partialorder %v2978, 8.507059e+37
        %v2980 = vand.u32 %v2829, 2147483648
        %v2981 = vor.u32 1.1754944e-38, %v2980
        %v2982 = vsel %vm2979, %v2981, %v2977
        %v2983 = vmul.f32 1.0, %v2982
        %v2984 = vrcp.pop %v2830
        %v2985 = vmul.f32 %v2830, %v2984
        %v2986 = vsub.f32 1.0, %v2985
        %v2987 = vmul.f32 %v2984, %v2986
        %v2988 = vadd.f32 %v2984, %v2987
        %vm2989 = vweird.f32 %v2830
        %vm2990 = vweird.f32 %v2984
        %vm2991 = vmor %vm2989, %vm2990
        %v2992 = vsel %vm2991, %v2984, %v2988
        %v2993 = vand.u32 2147483647, %v2830
        %vm2994 = vcmp.eq.f32.partialorder %v2993, 8.507059e+37
        %v2995 = vand.u32 %v2830, 2147483648
        %v2996 = vor.u32 1.1754944e-38, %v2995
        %v2997 = vsel %vm2994, %v2996, %v2992
        %v2998 = vmul.f32 1.0, %v2997
        %v2999 = vrcp.pop %v2831
        %v3000 = vmul.f32 %v2831, %v2999
        %v3001 = vsub.f32 1.0, %v3000
        %v3002 = vmul.f32 %v2999, %v3001
        %v3003 = vadd.f32 %v2999, %v3002
        %vm3004 = vweird.f32 %v2831
        %vm3005 = vweird.f32 %v2999
        %vm3006 = vmor %vm3004, %vm3005
        %v3007 = vsel %vm3006, %v2999, %v3003
        %v3008 = vand.u32 2147483647, %v2831
        %vm3009 = vcmp.eq.f32.partialorder %v3008, 8.507059e+37
        %v3010 = vand.u32 %v2831, 2147483648
        %v3011 = vor.u32 1.1754944e-38, %v3010
        %v3012 = vsel %vm3009, %v3011, %v3007
        %v3013 = vmul.f32 1.0, %v3012
        %v3014 = vrcp.pop %v2832
        %v3015 = vmul.f32 %v2832, %v3014
        %v3016 = vsub.f32 1.0, %v3015
        %v3017 = vmul.f32 %v3014, %v3016
        %v3018 = vadd.f32 %v3014, %v3017
        %vm3019 = vweird.f32 %v2832
        %vm3020 = vweird.f32 %v3014
        %vm3021 = vmor %vm3019, %vm3020
        %v3022 = vsel %vm3021, %v3014, %v3018
        %v3023 = vand.u32 2147483647, %v2832
        %vm3024 = vcmp.eq.f32.partialorder %v3023, 8.507059e+37
        %v3025 = vand.u32 %v2832, 2147483648
        %v3026 = vor.u32 1.1754944e-38, %v3025
        %v3027 = vsel %vm3024, %v3026, %v3022
        %v3028 = vmul.f32 1.0, %v3027
        %v3029 = vrcp.pop %v2833
        %v3030 = vmul.f32 %v2833, %v3029
        %v3031 = vsub.f32 1.0, %v3030
        %v3032 = vmul.f32 %v3029, %v3031
        %v3033 = vadd.f32 %v3029, %v3032
        %vm3034 = vweird.f32 %v2833
        %vm3035 = vweird.f32 %v3029
        %vm3036 = vmor %vm3034, %vm3035
        %v3037 = vsel %vm3036, %v3029, %v3033
        %v3038 = vand.u32 2147483647, %v2833
        %vm3039 = vcmp.eq.f32.partialorder %v3038, 8.507059e+37
        %v3040 = vand.u32 %v2833, 2147483648
        %v3041 = vor.u32 1.1754944e-38, %v3040
        %v3042 = vsel %vm3039, %v3041, %v3037
        %v3043 = vmul.f32 1.0, %v3042
        %3058 = vset.pattern.permute.xlu0 3
        %3059 = vperm.xlu0 %3058, %v2848
        %v3060 = vpop.permute.xlu0 %3059
        %3061 = vset.pattern.permute.xlu0 3
        %3062 = vperm.xlu0 %3061, %v2863
        %v3063 = vpop.permute.xlu0 %3062
        %3064 = vset.pattern.permute.xlu0 3
        %3065 = vperm.xlu0 %3064, %v2878
        %v3066 = vpop.permute.xlu0 %3065
        %3067 = vset.pattern.permute.xlu0 3
        %3068 = vperm.xlu0 %3067, %v2893
        %v3069 = vpop.permute.xlu0 %3068
        %3070 = vset.pattern.permute.xlu0 3
        %3071 = vperm.xlu0 %3070, %v2908
        %v3072 = vpop.permute.xlu0 %3071
        %3073 = vset.pattern.permute.xlu0 3
        %3074 = vperm.xlu0 %3073, %v2923
        %v3075 = vpop.permute.xlu0 %3074
        %3076 = vset.pattern.permute.xlu0 3
        %3077 = vperm.xlu0 %3076, %v2938
        %v3078 = vpop.permute.xlu0 %3077
        %3079 = vset.pattern.permute.xlu0 3
        %3080 = vperm.xlu0 %3079, %v2953
        %v3081 = vpop.permute.xlu0 %3080
        %3082 = vset.pattern.permute.xlu0 3
        %3083 = vperm.xlu0 %3082, %v2968
        %v3084 = vpop.permute.xlu0 %3083
        %3085 = vset.pattern.permute.xlu0 3
        %3086 = vperm.xlu0 %3085, %v2983
        %v3087 = vpop.permute.xlu0 %3086
        %3088 = vset.pattern.permute.xlu0 3
        %3089 = vperm.xlu0 %3088, %v2998
        %v3090 = vpop.permute.xlu0 %3089
        %3091 = vset.pattern.permute.xlu0 3
        %3092 = vperm.xlu0 %3091, %v3013
        %v3093 = vpop.permute.xlu0 %3092
        %3094 = vset.pattern.permute.xlu0 3
        %3095 = vperm.xlu0 %3094, %v3028
        %v3096 = vpop.permute.xlu0 %3095
        %3097 = vset.pattern.permute.xlu0 3
        %3098 = vperm.xlu0 %3097, %v3043
        %v3099 = vpop.permute.xlu0 %3098
        %v3100 = vperm.slane %v3060, %v1409
        %v3101 = vperm.slane %v3063, %v1411
        %v3102 = vsel %vm1413, %v3101, %v3100
        %v3103 = vperm.slane %v3066, %v1415
        %v3104 = vsel %vm1417, %v3103, %v3102
        %v3105 = vperm.slane %v3069, %v1419
        %v3106 = vsel %vm1421, %v3105, %v3104
        %v3107 = vperm.slane %v3072, %v1423
        %v3108 = vsel %vm1425, %v3107, %v3106
        %v3109 = vperm.slane %v3075, %v1427
        %v3110 = vsel %vm1429, %v3109, %v3108
        %v3111 = vperm.slane %v3078, %v1431
        %v3112 = vsel %vm1433, %v3111, %v3110
        %v3113 = vperm.slane %v3081, %v1409
        %v3114 = vperm.slane %v3084, %v1411
        %v3115 = vsel %vm1413, %v3114, %v3113
        %v3116 = vperm.slane %v3087, %v1415
        %v3117 = vsel %vm1417, %v3116, %v3115
        %v3118 = vperm.slane %v3090, %v1419
        %v3119 = vsel %vm1421, %v3118, %v3117
        %v3120 = vperm.slane %v3093, %v1423
        %v3121 = vsel %vm1425, %v3120, %v3119
        %v3122 = vperm.slane %v3096, %v1427
        %v3123 = vsel %vm1429, %v3122, %v3121
        %v3124 = vperm.slane %v3099, %v1431
        %v3125 = vsel %vm1433, %v3124, %v3123
        %v3126 = vsel %vm1448, %v3125, %v3112
        %v3128 = vsel %vm1451, %v3126, 0.0
        %s3129 = scalar_lea.vmem %s258, 6 [#allocation8]
        %3130 = vst [vmem:[%s3129] sm:$0x3] %v3128
        %v3131 = vpack.c.bf16 %v2848, %v2848
        %v3132 = vpack.c.bf16 %v2863, %v2863
        %v3133 = vpack.c.bf16 %v2878, %v2878
        %v3134 = vpack.c.bf16 %v2893, %v2893
        %v3135 = vpack.c.bf16 %v2908, %v2908
        %v3136 = vpack.c.bf16 %v2923, %v2923
        %v3137 = vpack.c.bf16 %v2938, %v2938
        %v3138 = vpack.c.bf16 %v2953, %v2953
        %v3139 = vpack.c.bf16 %v2968, %v2968
        %v3140 = vpack.c.bf16 %v2983, %v2983
        %v3141 = vpack.c.bf16 %v2998, %v2998
        %v3142 = vpack.c.bf16 %v3013, %v3013
        %v3143 = vpack.c.bf16 %v3028, %v3028
        %v3144 = vpack.c.bf16 %v3043, %v3043
        %v3152 = vunpack.c.l.b16 %v3131
        %v3153 = vunpack.c.l.b16 %v3132
        %v3154 = vunpack.c.l.b16 %v3133
        %v3155 = vunpack.c.l.b16 %v3134
        %v3156 = vunpack.c.l.b16 %v3135
        %v3157 = vunpack.c.l.b16 %v3136
        %v3158 = vunpack.c.l.b16 %v3137
        %v3159 = vpack.c.b16 %v3153, %v3152
        %v3160 = vpack.c.b16 %v3155, %v3154
        %v3161 = vpack.c.b16 %v3157, %v3156
        %v3162 = vpack.c.b16 %v3158, %v3158
        %v3163 = vunpack.c.l.b16 %v3159
        %v3164 = vunpack.c.h.b16 %v3159
        %v3165 = vunpack.c.l.b16 %v3160
        %v3166 = vunpack.c.h.b16 %v3160
        %v3167 = vunpack.c.l.b16 %v3161
        %v3168 = vunpack.c.h.b16 %v3161
        %v3169 = vunpack.c.l.b16 %v3162
        %3170 = vset.pattern.permute.xlu0 3
        %3171 = vperm.xlu0 %3170, %v3163
        %v3172 = vpop.permute.xlu0 %3171
        %3173 = vset.pattern.permute.xlu0 3
        %3174 = vperm.xlu0 %3173, %v3164
        %v3175 = vpop.permute.xlu0 %3174
        %3176 = vset.pattern.permute.xlu0 3
        %3177 = vperm.xlu0 %3176, %v3165
        %v3178 = vpop.permute.xlu0 %3177
        %3179 = vset.pattern.permute.xlu0 3
        %3180 = vperm.xlu0 %3179, %v3166
        %v3181 = vpop.permute.xlu0 %3180
        %3182 = vset.pattern.permute.xlu0 3
        %3183 = vperm.xlu0 %3182, %v3167
        %v3184 = vpop.permute.xlu0 %3183
        %3185 = vset.pattern.permute.xlu0 3
        %3186 = vperm.xlu0 %3185, %v3168
        %v3187 = vpop.permute.xlu0 %3186
        %3188 = vset.pattern.permute.xlu0 3
        %3189 = vperm.xlu0 %3188, %v3169
        %v3190 = vpop.permute.xlu0 %3189
        %v3191 = vperm.slane %v3172, %v1409
        %v3192 = vperm.slane %v3175, %v1411
        %v3193 = vsel %vm1413, %v3192, %v3191
        %v3194 = vperm.slane %v3178, %v1415
        %v3195 = vsel %vm1417, %v3194, %v3193
        %v3196 = vperm.slane %v3181, %v1419
        %v3197 = vsel %vm1421, %v3196, %v3195
        %v3198 = vperm.slane %v3184, %v1423
        %v3199 = vsel %vm1425, %v3198, %v3197
        %v3200 = vperm.slane %v3187, %v1427
        %v3201 = vsel %vm1429, %v3200, %v3199
        %v3202 = vperm.slane %v3190, %v1431
        %v3203 = vsel %vm1433, %v3202, %v3201
        %v3204 = vpack.c.b16 %v3203, %v3203
        %v3205 = vpack.c.b16 %v556, %v556
        %v3207 = vsel %vm1451, %v3204, 0
        %v3210 = vsel %vm1532, %v3205, 0
        %3212 = vmatpush.bf16.msra.mxu0 0
        %3213 = vmatpush.bf16.msra.mxu0 0
        %3214 = vmatpush.bf16.msra.mxu0 0
        %3215 = vmatpush.bf16.msra.mxu0 0
        %3216 = vmatpush.bf16.msra.mxu0 %v3210
        %3217 = vmatpush.bf16.msra.mxu0 %v643
        %3218 = vmatpush.bf16.msra.mxu0 %v642
        %3219 = vmatpush.bf16.msra.mxu0 %v641
        %3220 = vmatmul.bf16.gmra.mxu0 %v3207
        %v3221 = vpop.f32.mrf.mxu0
        %v3222 = vadd.f32 0.0, %v3221
        %v3223 = vpop.f32.mrf.mxu0
        %3224 = vdwg.mxu0
        %v3232 = vunpack.c.l.b16 %v3138
        %v3233 = vunpack.c.l.b16 %v3139
        %v3234 = vunpack.c.l.b16 %v3140
        %v3235 = vunpack.c.l.b16 %v3141
        %v3236 = vunpack.c.l.b16 %v3142
        %v3237 = vunpack.c.l.b16 %v3143
        %v3238 = vunpack.c.l.b16 %v3144
        %v3239 = vpack.c.b16 %v3233, %v3232
        %v3240 = vpack.c.b16 %v3235, %v3234
        %v3241 = vpack.c.b16 %v3237, %v3236
        %v3242 = vpack.c.b16 %v3238, %v3238
        %v3243 = vunpack.c.l.b16 %v3239
        %v3244 = vunpack.c.h.b16 %v3239
        %v3245 = vunpack.c.l.b16 %v3240
        %v3246 = vunpack.c.h.b16 %v3240
        %v3247 = vunpack.c.l.b16 %v3241
        %v3248 = vunpack.c.h.b16 %v3241
        %v3249 = vunpack.c.l.b16 %v3242
        %3250 = vset.pattern.permute.xlu0 3
        %3251 = vperm.xlu0 %3250, %v3243
        %v3252 = vpop.permute.xlu0 %3251
        %3253 = vset.pattern.permute.xlu0 3
        %3254 = vperm.xlu0 %3253, %v3244
        %v3255 = vpop.permute.xlu0 %3254
        %3256 = vset.pattern.permute.xlu0 3
        %3257 = vperm.xlu0 %3256, %v3245
        %v3258 = vpop.permute.xlu0 %3257
        %3259 = vset.pattern.permute.xlu0 3
        %3260 = vperm.xlu0 %3259, %v3246
        %v3261 = vpop.permute.xlu0 %3260
        %3262 = vset.pattern.permute.xlu0 3
        %3263 = vperm.xlu0 %3262, %v3247
        %v3264 = vpop.permute.xlu0 %3263
        %3265 = vset.pattern.permute.xlu0 3
        %3266 = vperm.xlu0 %3265, %v3248
        %v3267 = vpop.permute.xlu0 %3266
        %3268 = vset.pattern.permute.xlu0 3
        %3269 = vperm.xlu0 %3268, %v3249
        %v3270 = vpop.permute.xlu0 %3269
        %v3271 = vperm.slane %v3252, %v1409
        %v3272 = vperm.slane %v3255, %v1411
        %v3273 = vsel %vm1413, %v3272, %v3271
        %v3274 = vperm.slane %v3258, %v1415
        %v3275 = vsel %vm1417, %v3274, %v3273
        %v3276 = vperm.slane %v3261, %v1419
        %v3277 = vsel %vm1421, %v3276, %v3275
        %v3278 = vperm.slane %v3264, %v1423
        %v3279 = vsel %vm1425, %v3278, %v3277
        %v3280 = vperm.slane %v3267, %v1427
        %v3281 = vsel %vm1429, %v3280, %v3279
        %v3282 = vperm.slane %v3270, %v1431
        %v3283 = vsel %vm1433, %v3282, %v3281
        %v3284 = vpack.c.b16 %v3283, %v3283
        %v3285 = vpack.c.b16 %v558, %v557
        %v3286 = vpack.c.b16 %v560, %v559
        %v3287 = vpack.c.b16 %v562, %v561
        %v3288 = vpack.c.b16 %v563, %v563
        %v3293 = vsel %vm1451, %v3284, 0
        %v3296 = vsel %vm1532, %v3288, 0
        %3298 = vmatpush.bf16.msra.mxu0 0
        %3299 = vmatpush.bf16.msra.mxu0 0
        %3300 = vmatpush.bf16.msra.mxu0 0
        %3301 = vmatpush.bf16.msra.mxu0 0
        %3302 = vmatpush.bf16.msra.mxu0 %v3296
        %3303 = vmatpush.bf16.msra.mxu0 %v3287
        %3304 = vmatpush.bf16.msra.mxu0 %v3286
        %3305 = vmatpush.bf16.msra.mxu0 %v3285
        %3306 = vmatmul.bf16.gmra.mxu0 %v3293
        %v3307 = vpop.f32.mrf.mxu0
        %v3308 = vadd.f32 0.0, %v3307
        %v3309 = vpop.f32.mrf.mxu0
        %3310 = vdwg.mxu0
        %v3311 = vmul.f32 %v3222, 0.020408163
        %v3312 = vmul.f32 %v3308, 0.020408163
        %v3315 = vrot.slane %v3312, 7
        %v3316 = vsel %vm1448, %v3315, %v3311
        %s3318 = scalar_lea.vmem %s251, 6 [#allocation7]
        %3319 = vst [vmem:[%s3318] sm:$0x3] %v3316
        %s3320 = sadd.s32 %s1069, 4
        %s3321 = sld [smem:[#allocation6 + %s3320]]
        %v3322 = vstv %s3321
        %v3323 = vadd.f32 %v930, %v3322
        %v3324 = vadd.f32 %v932, %v3322
        %v3325 = vadd.f32 %v935, %v3322
        %v3326 = vadd.f32 %v937, %v3322
        %v3327 = vadd.f32 %v940, %v3322
        %v3328 = vadd.f32 %v942, %v3322
        %v3329 = vadd.f32 %v945, %v3322
        %v3330 = vadd.f32 %v947, %v3322
        %v3331 = vadd.f32 %v950, %v3322
        %v3332 = vadd.f32 %v952, %v3322
        %v3333 = vadd.f32 %v955, %v3322
        %v3334 = vadd.f32 %v957, %v3322
        %v3335 = vadd.f32 %v960, %v3322
        %v3336 = vadd.f32 %v962, %v3322
        %v3337 = vxor.u32 %v3323, 2147483648
        %v3338 = vxor.u32 %v3324, 2147483648
        %v3339 = vxor.u32 %v3325, 2147483648
        %v3340 = vxor.u32 %v3326, 2147483648
        %v3341 = vxor.u32 %v3327, 2147483648
        %v3342 = vxor.u32 %v3328, 2147483648
        %v3343 = vxor.u32 %v3329, 2147483648
        %v3344 = vxor.u32 %v3330, 2147483648
        %v3345 = vxor.u32 %v3331, 2147483648
        %v3346 = vxor.u32 %v3332, 2147483648
        %v3347 = vxor.u32 %v3333, 2147483648
        %v3348 = vxor.u32 %v3334, 2147483648
        %v3349 = vxor.u32 %v3335, 2147483648
        %v3350 = vxor.u32 %v3336, 2147483648
        %v3351 = vmul.f32 %v3337, 1.442695
        %v3352 = vpow.pop %v3351
        %v3353 = vmul.f32 %v3338, 1.442695
        %v3354 = vpow.pop %v3353
        %v3355 = vmul.f32 %v3339, 1.442695
        %v3356 = vpow.pop %v3355
        %v3357 = vmul.f32 %v3340, 1.442695
        %v3358 = vpow.pop %v3357
        %v3359 = vmul.f32 %v3341, 1.442695
        %v3360 = vpow.pop %v3359
        %v3361 = vmul.f32 %v3342, 1.442695
        %v3362 = vpow.pop %v3361
        %v3363 = vmul.f32 %v3343, 1.442695
        %v3364 = vpow.pop %v3363
        %v3365 = vmul.f32 %v3344, 1.442695
        %v3366 = vpow.pop %v3365
        %v3367 = vmul.f32 %v3345, 1.442695
        %v3368 = vpow.pop %v3367
        %v3369 = vmul.f32 %v3346, 1.442695
        %v3370 = vpow.pop %v3369
        %v3371 = vmul.f32 %v3347, 1.442695
        %v3372 = vpow.pop %v3371
        %v3373 = vmul.f32 %v3348, 1.442695
        %v3374 = vpow.pop %v3373
        %v3375 = vmul.f32 %v3349, 1.442695
        %v3376 = vpow.pop %v3375
        %v3377 = vmul.f32 %v3350, 1.442695
        %v3378 = vpow.pop %v3377
        %v3379 = vadd.f32 %v3352, 1.0
        %v3380 = vadd.f32 %v3354, 1.0
        %v3381 = vadd.f32 %v3356, 1.0
        %v3382 = vadd.f32 %v3358, 1.0
        %v3383 = vadd.f32 %v3360, 1.0
        %v3384 = vadd.f32 %v3362, 1.0
        %v3385 = vadd.f32 %v3364, 1.0
        %v3386 = vadd.f32 %v3366, 1.0
        %v3387 = vadd.f32 %v3368, 1.0
        %v3388 = vadd.f32 %v3370, 1.0
        %v3389 = vadd.f32 %v3372, 1.0
        %v3390 = vadd.f32 %v3374, 1.0
        %v3391 = vadd.f32 %v3376, 1.0
        %v3392 = vadd.f32 %v3378, 1.0
        %v3393 = vrcp.pop %v3379
        %v3394 = vmul.f32 %v3379, %v3393
        %v3395 = vsub.f32 1.0, %v3394
        %v3396 = vmul.f32 %v3393, %v3395
        %v3397 = vadd.f32 %v3393, %v3396
        %vm3398 = vweird.f32 %v3379
        %vm3399 = vweird.f32 %v3393
        %vm3400 = vmor %vm3398, %vm3399
        %v3401 = vsel %vm3400, %v3393, %v3397
        %v3402 = vand.u32 2147483647, %v3379
        %vm3403 = vcmp.eq.f32.partialorder %v3402, 8.507059e+37
        %v3404 = vand.u32 %v3379, 2147483648
        %v3405 = vor.u32 1.1754944e-38, %v3404
        %v3406 = vsel %vm3403, %v3405, %v3401
        %v3407 = vmul.f32 1.0, %v3406
        %v3408 = vrcp.pop %v3380
        %v3409 = vmul.f32 %v3380, %v3408
        %v3410 = vsub.f32 1.0, %v3409
        %v3411 = vmul.f32 %v3408, %v3410
        %v3412 = vadd.f32 %v3408, %v3411
        %vm3413 = vweird.f32 %v3380
        %vm3414 = vweird.f32 %v3408
        %vm3415 = vmor %vm3413, %vm3414
        %v3416 = vsel %vm3415, %v3408, %v3412
        %v3417 = vand.u32 2147483647, %v3380
        %vm3418 = vcmp.eq.f32.partialorder %v3417, 8.507059e+37
        %v3419 = vand.u32 %v3380, 2147483648
        %v3420 = vor.u32 1.1754944e-38, %v3419
        %v3421 = vsel %vm3418, %v3420, %v3416
        %v3422 = vmul.f32 1.0, %v3421
        %v3423 = vrcp.pop %v3381
        %v3424 = vmul.f32 %v3381, %v3423
        %v3425 = vsub.f32 1.0, %v3424
        %v3426 = vmul.f32 %v3423, %v3425
        %v3427 = vadd.f32 %v3423, %v3426
        %vm3428 = vweird.f32 %v3381
        %vm3429 = vweird.f32 %v3423
        %vm3430 = vmor %vm3428, %vm3429
        %v3431 = vsel %vm3430, %v3423, %v3427
        %v3432 = vand.u32 2147483647, %v3381
        %vm3433 = vcmp.eq.f32.partialorder %v3432, 8.507059e+37
        %v3434 = vand.u32 %v3381, 2147483648
        %v3435 = vor.u32 1.1754944e-38, %v3434
        %v3436 = vsel %vm3433, %v3435, %v3431
        %v3437 = vmul.f32 1.0, %v3436
        %v3438 = vrcp.pop %v3382
        %v3439 = vmul.f32 %v3382, %v3438
        %v3440 = vsub.f32 1.0, %v3439
        %v3441 = vmul.f32 %v3438, %v3440
        %v3442 = vadd.f32 %v3438, %v3441
        %vm3443 = vweird.f32 %v3382
        %vm3444 = vweird.f32 %v3438
        %vm3445 = vmor %vm3443, %vm3444
        %v3446 = vsel %vm3445, %v3438, %v3442
        %v3447 = vand.u32 2147483647, %v3382
        %vm3448 = vcmp.eq.f32.partialorder %v3447, 8.507059e+37
        %v3449 = vand.u32 %v3382, 2147483648
        %v3450 = vor.u32 1.1754944e-38, %v3449
        %v3451 = vsel %vm3448, %v3450, %v3446
        %v3452 = vmul.f32 1.0, %v3451
        %v3453 = vrcp.pop %v3383
        %v3454 = vmul.f32 %v3383, %v3453
        %v3455 = vsub.f32 1.0, %v3454
        %v3456 = vmul.f32 %v3453, %v3455
        %v3457 = vadd.f32 %v3453, %v3456
        %vm3458 = vweird.f32 %v3383
        %vm3459 = vweird.f32 %v3453
        %vm3460 = vmor %vm3458, %vm3459
        %v3461 = vsel %vm3460, %v3453, %v3457
        %v3462 = vand.u32 2147483647, %v3383
        %vm3463 = vcmp.eq.f32.partialorder %v3462, 8.507059e+37
        %v3464 = vand.u32 %v3383, 2147483648
        %v3465 = vor.u32 1.1754944e-38, %v3464
        %v3466 = vsel %vm3463, %v3465, %v3461
        %v3467 = vmul.f32 1.0, %v3466
        %v3468 = vrcp.pop %v3384
        %v3469 = vmul.f32 %v3384, %v3468
        %v3470 = vsub.f32 1.0, %v3469
        %v3471 = vmul.f32 %v3468, %v3470
        %v3472 = vadd.f32 %v3468, %v3471
        %vm3473 = vweird.f32 %v3384
        %vm3474 = vweird.f32 %v3468
        %vm3475 = vmor %vm3473, %vm3474
        %v3476 = vsel %vm3475, %v3468, %v3472
        %v3477 = vand.u32 2147483647, %v3384
        %vm3478 = vcmp.eq.f32.partialorder %v3477, 8.507059e+37
        %v3479 = vand.u32 %v3384, 2147483648
        %v3480 = vor.u32 1.1754944e-38, %v3479
        %v3481 = vsel %vm3478, %v3480, %v3476
        %v3482 = vmul.f32 1.0, %v3481
        %v3483 = vrcp.pop %v3385
        %v3484 = vmul.f32 %v3385, %v3483
        %v3485 = vsub.f32 1.0, %v3484
        %v3486 = vmul.f32 %v3483, %v3485
        %v3487 = vadd.f32 %v3483, %v3486
        %vm3488 = vweird.f32 %v3385
        %vm3489 = vweird.f32 %v3483
        %vm3490 = vmor %vm3488, %vm3489
        %v3491 = vsel %vm3490, %v3483, %v3487
        %v3492 = vand.u32 2147483647, %v3385
        %vm3493 = vcmp.eq.f32.partialorder %v3492, 8.507059e+37
        %v3494 = vand.u32 %v3385, 2147483648
        %v3495 = vor.u32 1.1754944e-38, %v3494
        %v3496 = vsel %vm3493, %v3495, %v3491
        %v3497 = vmul.f32 1.0, %v3496
        %v3498 = vrcp.pop %v3386
        %v3499 = vmul.f32 %v3386, %v3498
        %v3500 = vsub.f32 1.0, %v3499
        %v3501 = vmul.f32 %v3498, %v3500
        %v3502 = vadd.f32 %v3498, %v3501
        %vm3503 = vweird.f32 %v3386
        %vm3504 = vweird.f32 %v3498
        %vm3505 = vmor %vm3503, %vm3504
        %v3506 = vsel %vm3505, %v3498, %v3502
        %v3507 = vand.u32 2147483647, %v3386
        %vm3508 = vcmp.eq.f32.partialorder %v3507, 8.507059e+37
        %v3509 = vand.u32 %v3386, 2147483648
        %v3510 = vor.u32 1.1754944e-38, %v3509
        %v3511 = vsel %vm3508, %v3510, %v3506
        %v3512 = vmul.f32 1.0, %v3511
        %v3513 = vrcp.pop %v3387
        %v3514 = vmul.f32 %v3387, %v3513
        %v3515 = vsub.f32 1.0, %v3514
        %v3516 = vmul.f32 %v3513, %v3515
        %v3517 = vadd.f32 %v3513, %v3516
        %vm3518 = vweird.f32 %v3387
        %vm3519 = vweird.f32 %v3513
        %vm3520 = vmor %vm3518, %vm3519
        %v3521 = vsel %vm3520, %v3513, %v3517
        %v3522 = vand.u32 2147483647, %v3387
        %vm3523 = vcmp.eq.f32.partialorder %v3522, 8.507059e+37
        %v3524 = vand.u32 %v3387, 2147483648
        %v3525 = vor.u32 1.1754944e-38, %v3524
        %v3526 = vsel %vm3523, %v3525, %v3521
        %v3527 = vmul.f32 1.0, %v3526
        %v3528 = vrcp.pop %v3388
        %v3529 = vmul.f32 %v3388, %v3528
        %v3530 = vsub.f32 1.0, %v3529
        %v3531 = vmul.f32 %v3528, %v3530
        %v3532 = vadd.f32 %v3528, %v3531
        %vm3533 = vweird.f32 %v3388
        %vm3534 = vweird.f32 %v3528
        %vm3535 = vmor %vm3533, %vm3534
        %v3536 = vsel %vm3535, %v3528, %v3532
        %v3537 = vand.u32 2147483647, %v3388
        %vm3538 = vcmp.eq.f32.partialorder %v3537, 8.507059e+37
        %v3539 = vand.u32 %v3388, 2147483648
        %v3540 = vor.u32 1.1754944e-38, %v3539
        %v3541 = vsel %vm3538, %v3540, %v3536
        %v3542 = vmul.f32 1.0, %v3541
        %v3543 = vrcp.pop %v3389
        %v3544 = vmul.f32 %v3389, %v3543
        %v3545 = vsub.f32 1.0, %v3544
        %v3546 = vmul.f32 %v3543, %v3545
        %v3547 = vadd.f32 %v3543, %v3546
        %vm3548 = vweird.f32 %v3389
        %vm3549 = vweird.f32 %v3543
        %vm3550 = vmor %vm3548, %vm3549
        %v3551 = vsel %vm3550, %v3543, %v3547
        %v3552 = vand.u32 2147483647, %v3389
        %vm3553 = vcmp.eq.f32.partialorder %v3552, 8.507059e+37
        %v3554 = vand.u32 %v3389, 2147483648
        %v3555 = vor.u32 1.1754944e-38, %v3554
        %v3556 = vsel %vm3553, %v3555, %v3551
        %v3557 = vmul.f32 1.0, %v3556
        %v3558 = vrcp.pop %v3390
        %v3559 = vmul.f32 %v3390, %v3558
        %v3560 = vsub.f32 1.0, %v3559
        %v3561 = vmul.f32 %v3558, %v3560
        %v3562 = vadd.f32 %v3558, %v3561
        %vm3563 = vweird.f32 %v3390
        %vm3564 = vweird.f32 %v3558
        %vm3565 = vmor %vm3563, %vm3564
        %v3566 = vsel %vm3565, %v3558, %v3562
        %v3567 = vand.u32 2147483647, %v3390
        %vm3568 = vcmp.eq.f32.partialorder %v3567, 8.507059e+37
        %v3569 = vand.u32 %v3390, 2147483648
        %v3570 = vor.u32 1.1754944e-38, %v3569
        %v3571 = vsel %vm3568, %v3570, %v3566
        %v3572 = vmul.f32 1.0, %v3571
        %v3573 = vrcp.pop %v3391
        %v3574 = vmul.f32 %v3391, %v3573
        %v3575 = vsub.f32 1.0, %v3574
        %v3576 = vmul.f32 %v3573, %v3575
        %v3577 = vadd.f32 %v3573, %v3576
        %vm3578 = vweird.f32 %v3391
        %vm3579 = vweird.f32 %v3573
        %vm3580 = vmor %vm3578, %vm3579
        %v3581 = vsel %vm3580, %v3573, %v3577
        %v3582 = vand.u32 2147483647, %v3391
        %vm3583 = vcmp.eq.f32.partialorder %v3582, 8.507059e+37
        %v3584 = vand.u32 %v3391, 2147483648
        %v3585 = vor.u32 1.1754944e-38, %v3584
        %v3586 = vsel %vm3583, %v3585, %v3581
        %v3587 = vmul.f32 1.0, %v3586
        %v3588 = vrcp.pop %v3392
        %v3589 = vmul.f32 %v3392, %v3588
        %v3590 = vsub.f32 1.0, %v3589
        %v3591 = vmul.f32 %v3588, %v3590
        %v3592 = vadd.f32 %v3588, %v3591
        %vm3593 = vweird.f32 %v3392
        %vm3594 = vweird.f32 %v3588
        %vm3595 = vmor %vm3593, %vm3594
        %v3596 = vsel %vm3595, %v3588, %v3592
        %v3597 = vand.u32 2147483647, %v3392
        %vm3598 = vcmp.eq.f32.partialorder %v3597, 8.507059e+37
        %v3599 = vand.u32 %v3392, 2147483648
        %v3600 = vor.u32 1.1754944e-38, %v3599
        %v3601 = vsel %vm3598, %v3600, %v3596
        %v3602 = vmul.f32 1.0, %v3601
        %3617 = vset.pattern.permute.xlu0 4
        %3618 = vperm.xlu0 %3617, %v3407
        %v3619 = vpop.permute.xlu0 %3618
        %3620 = vset.pattern.permute.xlu0 4
        %3621 = vperm.xlu0 %3620, %v3422
        %v3622 = vpop.permute.xlu0 %3621
        %3623 = vset.pattern.permute.xlu0 4
        %3624 = vperm.xlu0 %3623, %v3437
        %v3625 = vpop.permute.xlu0 %3624
        %3626 = vset.pattern.permute.xlu0 4
        %3627 = vperm.xlu0 %3626, %v3452
        %v3628 = vpop.permute.xlu0 %3627
        %3629 = vset.pattern.permute.xlu0 4
        %3630 = vperm.xlu0 %3629, %v3467
        %v3631 = vpop.permute.xlu0 %3630
        %3632 = vset.pattern.permute.xlu0 4
        %3633 = vperm.xlu0 %3632, %v3482
        %v3634 = vpop.permute.xlu0 %3633
        %3635 = vset.pattern.permute.xlu0 4
        %3636 = vperm.xlu0 %3635, %v3497
        %v3637 = vpop.permute.xlu0 %3636
        %3638 = vset.pattern.permute.xlu0 4
        %3639 = vperm.xlu0 %3638, %v3512
        %v3640 = vpop.permute.xlu0 %3639
        %3641 = vset.pattern.permute.xlu0 4
        %3642 = vperm.xlu0 %3641, %v3527
        %v3643 = vpop.permute.xlu0 %3642
        %3644 = vset.pattern.permute.xlu0 4
        %3645 = vperm.xlu0 %3644, %v3542
        %v3646 = vpop.permute.xlu0 %3645
        %3647 = vset.pattern.permute.xlu0 4
        %3648 = vperm.xlu0 %3647, %v3557
        %v3649 = vpop.permute.xlu0 %3648
        %3650 = vset.pattern.permute.xlu0 4
        %3651 = vperm.xlu0 %3650, %v3572
        %v3652 = vpop.permute.xlu0 %3651
        %3653 = vset.pattern.permute.xlu0 4
        %3654 = vperm.xlu0 %3653, %v3587
        %v3655 = vpop.permute.xlu0 %3654
        %3656 = vset.pattern.permute.xlu0 4
        %3657 = vperm.xlu0 %3656, %v3602
        %v3658 = vpop.permute.xlu0 %3657
        %v3659 = vperm.slane %v3619, %v1409
        %v3660 = vperm.slane %v3622, %v1411
        %v3661 = vsel %vm1413, %v3660, %v3659
        %v3662 = vperm.slane %v3625, %v1415
        %v3663 = vsel %vm1417, %v3662, %v3661
        %v3664 = vperm.slane %v3628, %v1419
        %v3665 = vsel %vm1421, %v3664, %v3663
        %v3666 = vperm.slane %v3631, %v1423
        %v3667 = vsel %vm1425, %v3666, %v3665
        %v3668 = vperm.slane %v3634, %v1427
        %v3669 = vsel %vm1429, %v3668, %v3667
        %v3670 = vperm.slane %v3637, %v1431
        %v3671 = vsel %vm1433, %v3670, %v3669
        %v3672 = vperm.slane %v3640, %v1409
        %v3673 = vperm.slane %v3643, %v1411
        %v3674 = vsel %vm1413, %v3673, %v3672
        %v3675 = vperm.slane %v3646, %v1415
        %v3676 = vsel %vm1417, %v3675, %v3674
        %v3677 = vperm.slane %v3649, %v1419
        %v3678 = vsel %vm1421, %v3677, %v3676
        %v3679 = vperm.slane %v3652, %v1423
        %v3680 = vsel %vm1425, %v3679, %v3678
        %v3681 = vperm.slane %v3655, %v1427
        %v3682 = vsel %vm1429, %v3681, %v3680
        %v3683 = vperm.slane %v3658, %v1431
        %v3684 = vsel %vm1433, %v3683, %v3682
        %v3685 = vsel %vm1448, %v3684, %v3671
        %v3687 = vsel %vm1451, %v3685, 0.0
        %s3688 = scalar_lea.vmem %s258, 8 [#allocation8]
        %3689 = vst [vmem:[%s3688] sm:$0x3] %v3687
        %v3690 = vpack.c.bf16 %v3407, %v3407
        %v3691 = vpack.c.bf16 %v3422, %v3422
        %v3692 = vpack.c.bf16 %v3437, %v3437
        %v3693 = vpack.c.bf16 %v3452, %v3452
        %v3694 = vpack.c.bf16 %v3467, %v3467
        %v3695 = vpack.c.bf16 %v3482, %v3482
        %v3696 = vpack.c.bf16 %v3497, %v3497
        %v3697 = vpack.c.bf16 %v3512, %v3512
        %v3698 = vpack.c.bf16 %v3527, %v3527
        %v3699 = vpack.c.bf16 %v3542, %v3542
        %v3700 = vpack.c.bf16 %v3557, %v3557
        %v3701 = vpack.c.bf16 %v3572, %v3572
        %v3702 = vpack.c.bf16 %v3587, %v3587
        %v3703 = vpack.c.bf16 %v3602, %v3602
        %v3711 = vunpack.c.l.b16 %v3690
        %v3712 = vunpack.c.l.b16 %v3691
        %v3713 = vunpack.c.l.b16 %v3692
        %v3714 = vunpack.c.l.b16 %v3693
        %v3715 = vunpack.c.l.b16 %v3694
        %v3716 = vunpack.c.l.b16 %v3695
        %v3717 = vunpack.c.l.b16 %v3696
        %v3718 = vpack.c.b16 %v3712, %v3711
        %v3719 = vpack.c.b16 %v3714, %v3713
        %v3720 = vpack.c.b16 %v3716, %v3715
        %v3721 = vpack.c.b16 %v3717, %v3717
        %v3722 = vunpack.c.l.b16 %v3718
        %v3723 = vunpack.c.h.b16 %v3718
        %v3724 = vunpack.c.l.b16 %v3719
        %v3725 = vunpack.c.h.b16 %v3719
        %v3726 = vunpack.c.l.b16 %v3720
        %v3727 = vunpack.c.h.b16 %v3720
        %v3728 = vunpack.c.l.b16 %v3721
        %3729 = vset.pattern.permute.xlu0 4
        %3730 = vperm.xlu0 %3729, %v3722
        %v3731 = vpop.permute.xlu0 %3730
        %3732 = vset.pattern.permute.xlu0 4
        %3733 = vperm.xlu0 %3732, %v3723
        %v3734 = vpop.permute.xlu0 %3733
        %3735 = vset.pattern.permute.xlu0 4
        %3736 = vperm.xlu0 %3735, %v3724
        %v3737 = vpop.permute.xlu0 %3736
        %3738 = vset.pattern.permute.xlu0 4
        %3739 = vperm.xlu0 %3738, %v3725
        %v3740 = vpop.permute.xlu0 %3739
        %3741 = vset.pattern.permute.xlu0 4
        %3742 = vperm.xlu0 %3741, %v3726
        %v3743 = vpop.permute.xlu0 %3742
        %3744 = vset.pattern.permute.xlu0 4
        %3745 = vperm.xlu0 %3744, %v3727
        %v3746 = vpop.permute.xlu0 %3745
        %3747 = vset.pattern.permute.xlu0 4
        %3748 = vperm.xlu0 %3747, %v3728
        %v3749 = vpop.permute.xlu0 %3748
        %v3750 = vperm.slane %v3731, %v1409
        %v3751 = vperm.slane %v3734, %v1411
        %v3752 = vsel %vm1413, %v3751, %v3750
        %v3753 = vperm.slane %v3737, %v1415
        %v3754 = vsel %vm1417, %v3753, %v3752
        %v3755 = vperm.slane %v3740, %v1419
        %v3756 = vsel %vm1421, %v3755, %v3754
        %v3757 = vperm.slane %v3743, %v1423
        %v3758 = vsel %vm1425, %v3757, %v3756
        %v3759 = vperm.slane %v3746, %v1427
        %v3760 = vsel %vm1429, %v3759, %v3758
        %v3761 = vperm.slane %v3749, %v1431
        %v3762 = vsel %vm1433, %v3761, %v3760
        %v3763 = vpack.c.b16 %v3762, %v3762
        %v3764 = vpack.c.b16 %v570, %v570
        %v3766 = vsel %vm1451, %v3763, 0
        %v3769 = vsel %vm1532, %v3764, 0
        %3771 = vmatpush.bf16.msra.mxu0 0
        %3772 = vmatpush.bf16.msra.mxu0 0
        %3773 = vmatpush.bf16.msra.mxu0 0
        %3774 = vmatpush.bf16.msra.mxu0 0
        %3775 = vmatpush.bf16.msra.mxu0 %v3769
        %3776 = vmatpush.bf16.msra.mxu0 %v650
        %3777 = vmatpush.bf16.msra.mxu0 %v649
        %3778 = vmatpush.bf16.msra.mxu0 %v648
        %3779 = vmatmul.bf16.gmra.mxu0 %v3766
        %v3780 = vpop.f32.mrf.mxu0
        %v3781 = vadd.f32 0.0, %v3780
        %v3782 = vpop.f32.mrf.mxu0
        %3783 = vdwg.mxu0
        %v3791 = vunpack.c.l.b16 %v3697
        %v3792 = vunpack.c.l.b16 %v3698
        %v3793 = vunpack.c.l.b16 %v3699
        %v3794 = vunpack.c.l.b16 %v3700
        %v3795 = vunpack.c.l.b16 %v3701
        %v3796 = vunpack.c.l.b16 %v3702
        %v3797 = vunpack.c.l.b16 %v3703
        %v3798 = vpack.c.b16 %v3792, %v3791
        %v3799 = vpack.c.b16 %v3794, %v3793
        %v3800 = vpack.c.b16 %v3796, %v3795
        %v3801 = vpack.c.b16 %v3797, %v3797
        %v3802 = vunpack.c.l.b16 %v3798
        %v3803 = vunpack.c.h.b16 %v3798
        %v3804 = vunpack.c.l.b16 %v3799
        %v3805 = vunpack.c.h.b16 %v3799
        %v3806 = vunpack.c.l.b16 %v3800
        %v3807 = vunpack.c.h.b16 %v3800
        %v3808 = vunpack.c.l.b16 %v3801
        %3809 = vset.pattern.permute.xlu0 4
        %3810 = vperm.xlu0 %3809, %v3802
        %v3811 = vpop.permute.xlu0 %3810
        %3812 = vset.pattern.permute.xlu0 4
        %3813 = vperm.xlu0 %3812, %v3803
        %v3814 = vpop.permute.xlu0 %3813
        %3815 = vset.pattern.permute.xlu0 4
        %3816 = vperm.xlu0 %3815, %v3804
        %v3817 = vpop.permute.xlu0 %3816
        %3818 = vset.pattern.permute.xlu0 4
        %3819 = vperm.xlu0 %3818, %v3805
        %v3820 = vpop.permute.xlu0 %3819
        %3821 = vset.pattern.permute.xlu0 4
        %3822 = vperm.xlu0 %3821, %v3806
        %v3823 = vpop.permute.xlu0 %3822
        %3824 = vset.pattern.permute.xlu0 4
        %3825 = vperm.xlu0 %3824, %v3807
        %v3826 = vpop.permute.xlu0 %3825
        %3827 = vset.pattern.permute.xlu0 4
        %3828 = vperm.xlu0 %3827, %v3808
        %v3829 = vpop.permute.xlu0 %3828
        %v3830 = vperm.slane %v3811, %v1409
        %v3831 = vperm.slane %v3814, %v1411
        %v3832 = vsel %vm1413, %v3831, %v3830
        %v3833 = vperm.slane %v3817, %v1415
        %v3834 = vsel %vm1417, %v3833, %v3832
        %v3835 = vperm.slane %v3820, %v1419
        %v3836 = vsel %vm1421, %v3835, %v3834
        %v3837 = vperm.slane %v3823, %v1423
        %v3838 = vsel %vm1425, %v3837, %v3836
        %v3839 = vperm.slane %v3826, %v1427
        %v3840 = vsel %vm1429, %v3839, %v3838
        %v3841 = vperm.slane %v3829, %v1431
        %v3842 = vsel %vm1433, %v3841, %v3840
        %v3843 = vpack.c.b16 %v3842, %v3842
        %v3844 = vpack.c.b16 %v572, %v571
        %v3845 = vpack.c.b16 %v574, %v573
        %v3846 = vpack.c.b16 %v576, %v575
        %v3847 = vpack.c.b16 %v577, %v577
        %v3852 = vsel %vm1451, %v3843, 0
        %v3855 = vsel %vm1532, %v3847, 0
        %3857 = vmatpush.bf16.msra.mxu0 0
        %3858 = vmatpush.bf16.msra.mxu0 0
        %3859 = vmatpush.bf16.msra.mxu0 0
        %3860 = vmatpush.bf16.msra.mxu0 0
        %3861 = vmatpush.bf16.msra.mxu0 %v3855
        %3862 = vmatpush.bf16.msra.mxu0 %v3846
        %3863 = vmatpush.bf16.msra.mxu0 %v3845
        %3864 = vmatpush.bf16.msra.mxu0 %v3844
        %3865 = vmatmul.bf16.gmra.mxu0 %v3852
        %v3866 = vpop.f32.mrf.mxu0
        %v3867 = vadd.f32 0.0, %v3866
        %v3868 = vpop.f32.mrf.mxu0
        %3869 = vdwg.mxu0
        %v3870 = vmul.f32 %v3781, 0.020408163
        %v3871 = vmul.f32 %v3867, 0.020408163
        %v3874 = vrot.slane %v3871, 7
        %v3875 = vsel %vm1448, %v3874, %v3870
        %s3877 = scalar_lea.vmem %s251, 8 [#allocation7]
        %3878 = vst [vmem:[%s3877] sm:$0x3] %v3875
        %s3879 = sadd.s32 %s1069, 5
        %s3880 = sld [smem:[#allocation6 + %s3879]]
        %v3881 = vstv %s3880
        %v3882 = vadd.f32 %v965, %v3881
        %v3883 = vadd.f32 %v967, %v3881
        %v3884 = vadd.f32 %v970, %v3881
        %v3885 = vadd.f32 %v972, %v3881
        %v3886 = vadd.f32 %v975, %v3881
        %v3887 = vadd.f32 %v977, %v3881
        %v3888 = vadd.f32 %v980, %v3881
        %v3889 = vadd.f32 %v982, %v3881
        %v3890 = vadd.f32 %v985, %v3881
        %v3891 = vadd.f32 %v987, %v3881
        %v3892 = vadd.f32 %v990, %v3881
        %v3893 = vadd.f32 %v992, %v3881
        %v3894 = vadd.f32 %v995, %v3881
        %v3895 = vadd.f32 %v997, %v3881
        %v3896 = vxor.u32 %v3882, 2147483648
        %v3897 = vxor.u32 %v3883, 2147483648
        %v3898 = vxor.u32 %v3884, 2147483648
        %v3899 = vxor.u32 %v3885, 2147483648
        %v3900 = vxor.u32 %v3886, 2147483648
        %v3901 = vxor.u32 %v3887, 2147483648
        %v3902 = vxor.u32 %v3888, 2147483648
        %v3903 = vxor.u32 %v3889, 2147483648
        %v3904 = vxor.u32 %v3890, 2147483648
        %v3905 = vxor.u32 %v3891, 2147483648
        %v3906 = vxor.u32 %v3892, 2147483648
        %v3907 = vxor.u32 %v3893, 2147483648
        %v3908 = vxor.u32 %v3894, 2147483648
        %v3909 = vxor.u32 %v3895, 2147483648
        %v3910 = vmul.f32 %v3896, 1.442695
        %v3911 = vpow.pop %v3910
        %v3912 = vmul.f32 %v3897, 1.442695
        %v3913 = vpow.pop %v3912
        %v3914 = vmul.f32 %v3898, 1.442695
        %v3915 = vpow.pop %v3914
        %v3916 = vmul.f32 %v3899, 1.442695
        %v3917 = vpow.pop %v3916
        %v3918 = vmul.f32 %v3900, 1.442695
        %v3919 = vpow.pop %v3918
        %v3920 = vmul.f32 %v3901, 1.442695
        %v3921 = vpow.pop %v3920
        %v3922 = vmul.f32 %v3902, 1.442695
        %v3923 = vpow.pop %v3922
        %v3924 = vmul.f32 %v3903, 1.442695
        %v3925 = vpow.pop %v3924
        %v3926 = vmul.f32 %v3904, 1.442695
        %v3927 = vpow.pop %v3926
        %v3928 = vmul.f32 %v3905, 1.442695
        %v3929 = vpow.pop %v3928
        %v3930 = vmul.f32 %v3906, 1.442695
        %v3931 = vpow.pop %v3930
        %v3932 = vmul.f32 %v3907, 1.442695
        %v3933 = vpow.pop %v3932
        %v3934 = vmul.f32 %v3908, 1.442695
        %v3935 = vpow.pop %v3934
        %v3936 = vmul.f32 %v3909, 1.442695
        %v3937 = vpow.pop %v3936
        %v3938 = vadd.f32 %v3911, 1.0
        %v3939 = vadd.f32 %v3913, 1.0
        %v3940 = vadd.f32 %v3915, 1.0
        %v3941 = vadd.f32 %v3917, 1.0
        %v3942 = vadd.f32 %v3919, 1.0
        %v3943 = vadd.f32 %v3921, 1.0
        %v3944 = vadd.f32 %v3923, 1.0
        %v3945 = vadd.f32 %v3925, 1.0
        %v3946 = vadd.f32 %v3927, 1.0
        %v3947 = vadd.f32 %v3929, 1.0
        %v3948 = vadd.f32 %v3931, 1.0
        %v3949 = vadd.f32 %v3933, 1.0
        %v3950 = vadd.f32 %v3935, 1.0
        %v3951 = vadd.f32 %v3937, 1.0
        %v3952 = vrcp.pop %v3938
        %v3953 = vmul.f32 %v3938, %v3952
        %v3954 = vsub.f32 1.0, %v3953
        %v3955 = vmul.f32 %v3952, %v3954
        %v3956 = vadd.f32 %v3952, %v3955
        %vm3957 = vweird.f32 %v3938
        %vm3958 = vweird.f32 %v3952
        %vm3959 = vmor %vm3957, %vm3958
        %v3960 = vsel %vm3959, %v3952, %v3956
        %v3961 = vand.u32 2147483647, %v3938
        %vm3962 = vcmp.eq.f32.partialorder %v3961, 8.507059e+37
        %v3963 = vand.u32 %v3938, 2147483648
        %v3964 = vor.u32 1.1754944e-38, %v3963
        %v3965 = vsel %vm3962, %v3964, %v3960
        %v3966 = vmul.f32 1.0, %v3965
        %v3967 = vrcp.pop %v3939
        %v3968 = vmul.f32 %v3939, %v3967
        %v3969 = vsub.f32 1.0, %v3968
        %v3970 = vmul.f32 %v3967, %v3969
        %v3971 = vadd.f32 %v3967, %v3970
        %vm3972 = vweird.f32 %v3939
        %vm3973 = vweird.f32 %v3967
        %vm3974 = vmor %vm3972, %vm3973
        %v3975 = vsel %vm3974, %v3967, %v3971
        %v3976 = vand.u32 2147483647, %v3939
        %vm3977 = vcmp.eq.f32.partialorder %v3976, 8.507059e+37
        %v3978 = vand.u32 %v3939, 2147483648
        %v3979 = vor.u32 1.1754944e-38, %v3978
        %v3980 = vsel %vm3977, %v3979, %v3975
        %v3981 = vmul.f32 1.0, %v3980
        %v3982 = vrcp.pop %v3940
        %v3983 = vmul.f32 %v3940, %v3982
        %v3984 = vsub.f32 1.0, %v3983
        %v3985 = vmul.f32 %v3982, %v3984
        %v3986 = vadd.f32 %v3982, %v3985
        %vm3987 = vweird.f32 %v3940
        %vm3988 = vweird.f32 %v3982
        %vm3989 = vmor %vm3987, %vm3988
        %v3990 = vsel %vm3989, %v3982, %v3986
        %v3991 = vand.u32 2147483647, %v3940
        %vm3992 = vcmp.eq.f32.partialorder %v3991, 8.507059e+37
        %v3993 = vand.u32 %v3940, 2147483648
        %v3994 = vor.u32 1.1754944e-38, %v3993
        %v3995 = vsel %vm3992, %v3994, %v3990
        %v3996 = vmul.f32 1.0, %v3995
        %v3997 = vrcp.pop %v3941
        %v3998 = vmul.f32 %v3941, %v3997
        %v3999 = vsub.f32 1.0, %v3998
        %v4000 = vmul.f32 %v3997, %v3999
        %v4001 = vadd.f32 %v3997, %v4000
        %vm4002 = vweird.f32 %v3941
        %vm4003 = vweird.f32 %v3997
        %vm4004 = vmor %vm4002, %vm4003
        %v4005 = vsel %vm4004, %v3997, %v4001
        %v4006 = vand.u32 2147483647, %v3941
        %vm4007 = vcmp.eq.f32.partialorder %v4006, 8.507059e+37
        %v4008 = vand.u32 %v3941, 2147483648
        %v4009 = vor.u32 1.1754944e-38, %v4008
        %v4010 = vsel %vm4007, %v4009, %v4005
        %v4011 = vmul.f32 1.0, %v4010
        %v4012 = vrcp.pop %v3942
        %v4013 = vmul.f32 %v3942, %v4012
        %v4014 = vsub.f32 1.0, %v4013
        %v4015 = vmul.f32 %v4012, %v4014
        %v4016 = vadd.f32 %v4012, %v4015
        %vm4017 = vweird.f32 %v3942
        %vm4018 = vweird.f32 %v4012
        %vm4019 = vmor %vm4017, %vm4018
        %v4020 = vsel %vm4019, %v4012, %v4016
        %v4021 = vand.u32 2147483647, %v3942
        %vm4022 = vcmp.eq.f32.partialorder %v4021, 8.507059e+37
        %v4023 = vand.u32 %v3942, 2147483648
        %v4024 = vor.u32 1.1754944e-38, %v4023
        %v4025 = vsel %vm4022, %v4024, %v4020
        %v4026 = vmul.f32 1.0, %v4025
        %v4027 = vrcp.pop %v3943
        %v4028 = vmul.f32 %v3943, %v4027
        %v4029 = vsub.f32 1.0, %v4028
        %v4030 = vmul.f32 %v4027, %v4029
        %v4031 = vadd.f32 %v4027, %v4030
        %vm4032 = vweird.f32 %v3943
        %vm4033 = vweird.f32 %v4027
        %vm4034 = vmor %vm4032, %vm4033
        %v4035 = vsel %vm4034, %v4027, %v4031
        %v4036 = vand.u32 2147483647, %v3943
        %vm4037 = vcmp.eq.f32.partialorder %v4036, 8.507059e+37
        %v4038 = vand.u32 %v3943, 2147483648
        %v4039 = vor.u32 1.1754944e-38, %v4038
        %v4040 = vsel %vm4037, %v4039, %v4035
        %v4041 = vmul.f32 1.0, %v4040
        %v4042 = vrcp.pop %v3944
        %v4043 = vmul.f32 %v3944, %v4042
        %v4044 = vsub.f32 1.0, %v4043
        %v4045 = vmul.f32 %v4042, %v4044
        %v4046 = vadd.f32 %v4042, %v4045
        %vm4047 = vweird.f32 %v3944
        %vm4048 = vweird.f32 %v4042
        %vm4049 = vmor %vm4047, %vm4048
        %v4050 = vsel %vm4049, %v4042, %v4046
        %v4051 = vand.u32 2147483647, %v3944
        %vm4052 = vcmp.eq.f32.partialorder %v4051, 8.507059e+37
        %v4053 = vand.u32 %v3944, 2147483648
        %v4054 = vor.u32 1.1754944e-38, %v4053
        %v4055 = vsel %vm4052, %v4054, %v4050
        %v4056 = vmul.f32 1.0, %v4055
        %v4057 = vrcp.pop %v3945
        %v4058 = vmul.f32 %v3945, %v4057
        %v4059 = vsub.f32 1.0, %v4058
        %v4060 = vmul.f32 %v4057, %v4059
        %v4061 = vadd.f32 %v4057, %v4060
        %vm4062 = vweird.f32 %v3945
        %vm4063 = vweird.f32 %v4057
        %vm4064 = vmor %vm4062, %vm4063
        %v4065 = vsel %vm4064, %v4057, %v4061
        %v4066 = vand.u32 2147483647, %v3945
        %vm4067 = vcmp.eq.f32.partialorder %v4066, 8.507059e+37
        %v4068 = vand.u32 %v3945, 2147483648
        %v4069 = vor.u32 1.1754944e-38, %v4068
        %v4070 = vsel %vm4067, %v4069, %v4065
        %v4071 = vmul.f32 1.0, %v4070
        %v4072 = vrcp.pop %v3946
        %v4073 = vmul.f32 %v3946, %v4072
        %v4074 = vsub.f32 1.0, %v4073
        %v4075 = vmul.f32 %v4072, %v4074
        %v4076 = vadd.f32 %v4072, %v4075
        %vm4077 = vweird.f32 %v3946
        %vm4078 = vweird.f32 %v4072
        %vm4079 = vmor %vm4077, %vm4078
        %v4080 = vsel %vm4079, %v4072, %v4076
        %v4081 = vand.u32 2147483647, %v3946
        %vm4082 = vcmp.eq.f32.partialorder %v4081, 8.507059e+37
        %v4083 = vand.u32 %v3946, 2147483648
        %v4084 = vor.u32 1.1754944e-38, %v4083
        %v4085 = vsel %vm4082, %v4084, %v4080
        %v4086 = vmul.f32 1.0, %v4085
        %v4087 = vrcp.pop %v3947
        %v4088 = vmul.f32 %v3947, %v4087
        %v4089 = vsub.f32 1.0, %v4088
        %v4090 = vmul.f32 %v4087, %v4089
        %v4091 = vadd.f32 %v4087, %v4090
        %vm4092 = vweird.f32 %v3947
        %vm4093 = vweird.f32 %v4087
        %vm4094 = vmor %vm4092, %vm4093
        %v4095 = vsel %vm4094, %v4087, %v4091
        %v4096 = vand.u32 2147483647, %v3947
        %vm4097 = vcmp.eq.f32.partialorder %v4096, 8.507059e+37
        %v4098 = vand.u32 %v3947, 2147483648
        %v4099 = vor.u32 1.1754944e-38, %v4098
        %v4100 = vsel %vm4097, %v4099, %v4095
        %v4101 = vmul.f32 1.0, %v4100
        %v4102 = vrcp.pop %v3948
        %v4103 = vmul.f32 %v3948, %v4102
        %v4104 = vsub.f32 1.0, %v4103
        %v4105 = vmul.f32 %v4102, %v4104
        %v4106 = vadd.f32 %v4102, %v4105
        %vm4107 = vweird.f32 %v3948
        %vm4108 = vweird.f32 %v4102
        %vm4109 = vmor %vm4107, %vm4108
        %v4110 = vsel %vm4109, %v4102, %v4106
        %v4111 = vand.u32 2147483647, %v3948
        %vm4112 = vcmp.eq.f32.partialorder %v4111, 8.507059e+37
        %v4113 = vand.u32 %v3948, 2147483648
        %v4114 = vor.u32 1.1754944e-38, %v4113
        %v4115 = vsel %vm4112, %v4114, %v4110
        %v4116 = vmul.f32 1.0, %v4115
        %v4117 = vrcp.pop %v3949
        %v4118 = vmul.f32 %v3949, %v4117
        %v4119 = vsub.f32 1.0, %v4118
        %v4120 = vmul.f32 %v4117, %v4119
        %v4121 = vadd.f32 %v4117, %v4120
        %vm4122 = vweird.f32 %v3949
        %vm4123 = vweird.f32 %v4117
        %vm4124 = vmor %vm4122, %vm4123
        %v4125 = vsel %vm4124, %v4117, %v4121
        %v4126 = vand.u32 2147483647, %v3949
        %vm4127 = vcmp.eq.f32.partialorder %v4126, 8.507059e+37
        %v4128 = vand.u32 %v3949, 2147483648
        %v4129 = vor.u32 1.1754944e-38, %v4128
        %v4130 = vsel %vm4127, %v4129, %v4125
        %v4131 = vmul.f32 1.0, %v4130
        %v4132 = vrcp.pop %v3950
        %v4133 = vmul.f32 %v3950, %v4132
        %v4134 = vsub.f32 1.0, %v4133
        %v4135 = vmul.f32 %v4132, %v4134
        %v4136 = vadd.f32 %v4132, %v4135
        %vm4137 = vweird.f32 %v3950
        %vm4138 = vweird.f32 %v4132
        %vm4139 = vmor %vm4137, %vm4138
        %v4140 = vsel %vm4139, %v4132, %v4136
        %v4141 = vand.u32 2147483647, %v3950
        %vm4142 = vcmp.eq.f32.partialorder %v4141, 8.507059e+37
        %v4143 = vand.u32 %v3950, 2147483648
        %v4144 = vor.u32 1.1754944e-38, %v4143
        %v4145 = vsel %vm4142, %v4144, %v4140
        %v4146 = vmul.f32 1.0, %v4145
        %v4147 = vrcp.pop %v3951
        %v4148 = vmul.f32 %v3951, %v4147
        %v4149 = vsub.f32 1.0, %v4148
        %v4150 = vmul.f32 %v4147, %v4149
        %v4151 = vadd.f32 %v4147, %v4150
        %vm4152 = vweird.f32 %v3951
        %vm4153 = vweird.f32 %v4147
        %vm4154 = vmor %vm4152, %vm4153
        %v4155 = vsel %vm4154, %v4147, %v4151
        %v4156 = vand.u32 2147483647, %v3951
        %vm4157 = vcmp.eq.f32.partialorder %v4156, 8.507059e+37
        %v4158 = vand.u32 %v3951, 2147483648
        %v4159 = vor.u32 1.1754944e-38, %v4158
        %v4160 = vsel %vm4157, %v4159, %v4155
        %v4161 = vmul.f32 1.0, %v4160
        %4176 = vset.pattern.permute.xlu0 5
        %4177 = vperm.xlu0 %4176, %v3966
        %v4178 = vpop.permute.xlu0 %4177
        %4179 = vset.pattern.permute.xlu0 5
        %4180 = vperm.xlu0 %4179, %v3981
        %v4181 = vpop.permute.xlu0 %4180
        %4182 = vset.pattern.permute.xlu0 5
        %4183 = vperm.xlu0 %4182, %v3996
        %v4184 = vpop.permute.xlu0 %4183
        %4185 = vset.pattern.permute.xlu0 5
        %4186 = vperm.xlu0 %4185, %v4011
        %v4187 = vpop.permute.xlu0 %4186
        %4188 = vset.pattern.permute.xlu0 5
        %4189 = vperm.xlu0 %4188, %v4026
        %v4190 = vpop.permute.xlu0 %4189
        %4191 = vset.pattern.permute.xlu0 5
        %4192 = vperm.xlu0 %4191, %v4041
        %v4193 = vpop.permute.xlu0 %4192
        %4194 = vset.pattern.permute.xlu0 5
        %4195 = vperm.xlu0 %4194, %v4056
        %v4196 = vpop.permute.xlu0 %4195
        %4197 = vset.pattern.permute.xlu0 5
        %4198 = vperm.xlu0 %4197, %v4071
        %v4199 = vpop.permute.xlu0 %4198
        %4200 = vset.pattern.permute.xlu0 5
        %4201 = vperm.xlu0 %4200, %v4086
        %v4202 = vpop.permute.xlu0 %4201
        %4203 = vset.pattern.permute.xlu0 5
        %4204 = vperm.xlu0 %4203, %v4101
        %v4205 = vpop.permute.xlu0 %4204
        %4206 = vset.pattern.permute.xlu0 5
        %4207 = vperm.xlu0 %4206, %v4116
        %v4208 = vpop.permute.xlu0 %4207
        %4209 = vset.pattern.permute.xlu0 5
        %4210 = vperm.xlu0 %4209, %v4131
        %v4211 = vpop.permute.xlu0 %4210
        %4212 = vset.pattern.permute.xlu0 5
        %4213 = vperm.xlu0 %4212, %v4146
        %v4214 = vpop.permute.xlu0 %4213
        %4215 = vset.pattern.permute.xlu0 5
        %4216 = vperm.xlu0 %4215, %v4161
        %v4217 = vpop.permute.xlu0 %4216
        %v4218 = vperm.slane %v4178, %v1409
        %v4219 = vperm.slane %v4181, %v1411
        %v4220 = vsel %vm1413, %v4219, %v4218
        %v4221 = vperm.slane %v4184, %v1415
        %v4222 = vsel %vm1417, %v4221, %v4220
        %v4223 = vperm.slane %v4187, %v1419
        %v4224 = vsel %vm1421, %v4223, %v4222
        %v4225 = vperm.slane %v4190, %v1423
        %v4226 = vsel %vm1425, %v4225, %v4224
        %v4227 = vperm.slane %v4193, %v1427
        %v4228 = vsel %vm1429, %v4227, %v4226
        %v4229 = vperm.slane %v4196, %v1431
        %v4230 = vsel %vm1433, %v4229, %v4228
        %v4231 = vperm.slane %v4199, %v1409
        %v4232 = vperm.slane %v4202, %v1411
        %v4233 = vsel %vm1413, %v4232, %v4231
        %v4234 = vperm.slane %v4205, %v1415
        %v4235 = vsel %vm1417, %v4234, %v4233
        %v4236 = vperm.slane %v4208, %v1419
        %v4237 = vsel %vm1421, %v4236, %v4235
        %v4238 = vperm.slane %v4211, %v1423
        %v4239 = vsel %vm1425, %v4238, %v4237
        %v4240 = vperm.slane %v4214, %v1427
        %v4241 = vsel %vm1429, %v4240, %v4239
        %v4242 = vperm.slane %v4217, %v1431
        %v4243 = vsel %vm1433, %v4242, %v4241
        %v4244 = vsel %vm1448, %v4243, %v4230
        %v4246 = vsel %vm1451, %v4244, 0.0
        %s4247 = scalar_lea.vmem %s258, 10 [#allocation8]
        %4248 = vst [vmem:[%s4247] sm:$0x3] %v4246
        %v4249 = vpack.c.bf16 %v3966, %v3966
        %v4250 = vpack.c.bf16 %v3981, %v3981
        %v4251 = vpack.c.bf16 %v3996, %v3996
        %v4252 = vpack.c.bf16 %v4011, %v4011
        %v4253 = vpack.c.bf16 %v4026, %v4026
        %v4254 = vpack.c.bf16 %v4041, %v4041
        %v4255 = vpack.c.bf16 %v4056, %v4056
        %v4256 = vpack.c.bf16 %v4071, %v4071
        %v4257 = vpack.c.bf16 %v4086, %v4086
        %v4258 = vpack.c.bf16 %v4101, %v4101
        %v4259 = vpack.c.bf16 %v4116, %v4116
        %v4260 = vpack.c.bf16 %v4131, %v4131
        %v4261 = vpack.c.bf16 %v4146, %v4146
        %v4262 = vpack.c.bf16 %v4161, %v4161
        %v4270 = vunpack.c.l.b16 %v4249
        %v4271 = vunpack.c.l.b16 %v4250
        %v4272 = vunpack.c.l.b16 %v4251
        %v4273 = vunpack.c.l.b16 %v4252
        %v4274 = vunpack.c.l.b16 %v4253
        %v4275 = vunpack.c.l.b16 %v4254
        %v4276 = vunpack.c.l.b16 %v4255
        %v4277 = vpack.c.b16 %v4271, %v4270
        %v4278 = vpack.c.b16 %v4273, %v4272
        %v4279 = vpack.c.b16 %v4275, %v4274
        %v4280 = vpack.c.b16 %v4276, %v4276
        %v4281 = vunpack.c.l.b16 %v4277
        %v4282 = vunpack.c.h.b16 %v4277
        %v4283 = vunpack.c.l.b16 %v4278
        %v4284 = vunpack.c.h.b16 %v4278
        %v4285 = vunpack.c.l.b16 %v4279
        %v4286 = vunpack.c.h.b16 %v4279
        %v4287 = vunpack.c.l.b16 %v4280
        %4288 = vset.pattern.permute.xlu0 5
        %4289 = vperm.xlu0 %4288, %v4281
        %v4290 = vpop.permute.xlu0 %4289
        %4291 = vset.pattern.permute.xlu0 5
        %4292 = vperm.xlu0 %4291, %v4282
        %v4293 = vpop.permute.xlu0 %4292
        %4294 = vset.pattern.permute.xlu0 5
        %4295 = vperm.xlu0 %4294, %v4283
        %v4296 = vpop.permute.xlu0 %4295
        %4297 = vset.pattern.permute.xlu0 5
        %4298 = vperm.xlu0 %4297, %v4284
        %v4299 = vpop.permute.xlu0 %4298
        %4300 = vset.pattern.permute.xlu0 5
        %4301 = vperm.xlu0 %4300, %v4285
        %v4302 = vpop.permute.xlu0 %4301
        %4303 = vset.pattern.permute.xlu0 5
        %4304 = vperm.xlu0 %4303, %v4286
        %v4305 = vpop.permute.xlu0 %4304
        %4306 = vset.pattern.permute.xlu0 5
        %4307 = vperm.xlu0 %4306, %v4287
        %v4308 = vpop.permute.xlu0 %4307
        %v4309 = vperm.slane %v4290, %v1409
        %v4310 = vperm.slane %v4293, %v1411
        %v4311 = vsel %vm1413, %v4310, %v4309
        %v4312 = vperm.slane %v4296, %v1415
        %v4313 = vsel %vm1417, %v4312, %v4311
        %v4314 = vperm.slane %v4299, %v1419
        %v4315 = vsel %vm1421, %v4314, %v4313
        %v4316 = vperm.slane %v4302, %v1423
        %v4317 = vsel %vm1425, %v4316, %v4315
        %v4318 = vperm.slane %v4305, %v1427
        %v4319 = vsel %vm1429, %v4318, %v4317
        %v4320 = vperm.slane %v4308, %v1431
        %v4321 = vsel %vm1433, %v4320, %v4319
        %v4322 = vpack.c.b16 %v4321, %v4321
        %v4323 = vpack.c.b16 %v584, %v584
        %v4325 = vsel %vm1451, %v4322, 0
        %v4328 = vsel %vm1532, %v4323, 0
        %4330 = vmatpush.bf16.msra.mxu0 0
        %4331 = vmatpush.bf16.msra.mxu0 0
        %4332 = vmatpush.bf16.msra.mxu0 0
        %4333 = vmatpush.bf16.msra.mxu0 0
        %4334 = vmatpush.bf16.msra.mxu0 %v4328
        %4335 = vmatpush.bf16.msra.mxu0 %v657
        %4336 = vmatpush.bf16.msra.mxu0 %v656
        %4337 = vmatpush.bf16.msra.mxu0 %v655
        %4338 = vmatmul.bf16.gmra.mxu0 %v4325
        %v4339 = vpop.f32.mrf.mxu0
        %v4340 = vadd.f32 0.0, %v4339
        %v4341 = vpop.f32.mrf.mxu0
        %4342 = vdwg.mxu0
        %v4350 = vunpack.c.l.b16 %v4256
        %v4351 = vunpack.c.l.b16 %v4257
        %v4352 = vunpack.c.l.b16 %v4258
        %v4353 = vunpack.c.l.b16 %v4259
        %v4354 = vunpack.c.l.b16 %v4260
        %v4355 = vunpack.c.l.b16 %v4261
        %v4356 = vunpack.c.l.b16 %v4262
        %v4357 = vpack.c.b16 %v4351, %v4350
        %v4358 = vpack.c.b16 %v4353, %v4352
        %v4359 = vpack.c.b16 %v4355, %v4354
        %v4360 = vpack.c.b16 %v4356, %v4356
        %v4361 = vunpack.c.l.b16 %v4357
        %v4362 = vunpack.c.h.b16 %v4357
        %v4363 = vunpack.c.l.b16 %v4358
        %v4364 = vunpack.c.h.b16 %v4358
        %v4365 = vunpack.c.l.b16 %v4359
        %v4366 = vunpack.c.h.b16 %v4359
        %v4367 = vunpack.c.l.b16 %v4360
        %4368 = vset.pattern.permute.xlu0 5
        %4369 = vperm.xlu0 %4368, %v4361
        %v4370 = vpop.permute.xlu0 %4369
        %4371 = vset.pattern.permute.xlu0 5
        %4372 = vperm.xlu0 %4371, %v4362
        %v4373 = vpop.permute.xlu0 %4372
        %4374 = vset.pattern.permute.xlu0 5
        %4375 = vperm.xlu0 %4374, %v4363
        %v4376 = vpop.permute.xlu0 %4375
        %4377 = vset.pattern.permute.xlu0 5
        %4378 = vperm.xlu0 %4377, %v4364
        %v4379 = vpop.permute.xlu0 %4378
        %4380 = vset.pattern.permute.xlu0 5
        %4381 = vperm.xlu0 %4380, %v4365
        %v4382 = vpop.permute.xlu0 %4381
        %4383 = vset.pattern.permute.xlu0 5
        %4384 = vperm.xlu0 %4383, %v4366
        %v4385 = vpop.permute.xlu0 %4384
        %4386 = vset.pattern.permute.xlu0 5
        %4387 = vperm.xlu0 %4386, %v4367
        %v4388 = vpop.permute.xlu0 %4387
        %v4389 = vperm.slane %v4370, %v1409
        %v4390 = vperm.slane %v4373, %v1411
        %v4391 = vsel %vm1413, %v4390, %v4389
        %v4392 = vperm.slane %v4376, %v1415
        %v4393 = vsel %vm1417, %v4392, %v4391
        %v4394 = vperm.slane %v4379, %v1419
        %v4395 = vsel %vm1421, %v4394, %v4393
        %v4396 = vperm.slane %v4382, %v1423
        %v4397 = vsel %vm1425, %v4396, %v4395
        %v4398 = vperm.slane %v4385, %v1427
        %v4399 = vsel %vm1429, %v4398, %v4397
        %v4400 = vperm.slane %v4388, %v1431
        %v4401 = vsel %vm1433, %v4400, %v4399
        %v4402 = vpack.c.b16 %v4401, %v4401
        %v4403 = vpack.c.b16 %v586, %v585
        %v4404 = vpack.c.b16 %v588, %v587
        %v4405 = vpack.c.b16 %v590, %v589
        %v4406 = vpack.c.b16 %v591, %v591
        %v4411 = vsel %vm1451, %v4402, 0
        %v4414 = vsel %vm1532, %v4406, 0
        %4416 = vmatpush.bf16.msra.mxu0 0
        %4417 = vmatpush.bf16.msra.mxu0 0
        %4418 = vmatpush.bf16.msra.mxu0 0
        %4419 = vmatpush.bf16.msra.mxu0 0
        %4420 = vmatpush.bf16.msra.mxu0 %v4414
        %4421 = vmatpush.bf16.msra.mxu0 %v4405
        %4422 = vmatpush.bf16.msra.mxu0 %v4404
        %4423 = vmatpush.bf16.msra.mxu0 %v4403
        %4424 = vmatmul.bf16.gmra.mxu0 %v4411
        %v4425 = vpop.f32.mrf.mxu0
        %v4426 = vadd.f32 0.0, %v4425
        %v4427 = vpop.f32.mrf.mxu0
        %4428 = vdwg.mxu0
        %v4429 = vmul.f32 %v4340, 0.020408163
        %v4430 = vmul.f32 %v4426, 0.020408163
        %v4433 = vrot.slane %v4430, 7
        %v4434 = vsel %vm1448, %v4433, %v4429
        %s4436 = scalar_lea.vmem %s251, 10 [#allocation7]
        %4437 = vst [vmem:[%s4436] sm:$0x3] %v4434
        %s4438 = sadd.s32 %s1069, 6
        %s4439 = sld [smem:[#allocation6 + %s4438]]
        %v4440 = vstv %s4439
        %v4441 = vadd.f32 %v1000, %v4440
        %v4442 = vadd.f32 %v1002, %v4440
        %v4443 = vadd.f32 %v1005, %v4440
        %v4444 = vadd.f32 %v1007, %v4440
        %v4445 = vadd.f32 %v1010, %v4440
        %v4446 = vadd.f32 %v1012, %v4440
        %v4447 = vadd.f32 %v1015, %v4440
        %v4448 = vadd.f32 %v1017, %v4440
        %v4449 = vadd.f32 %v1020, %v4440
        %v4450 = vadd.f32 %v1022, %v4440
        %v4451 = vadd.f32 %v1025, %v4440
        %v4452 = vadd.f32 %v1027, %v4440
        %v4453 = vadd.f32 %v1030, %v4440
        %v4454 = vadd.f32 %v1032, %v4440
        %v4455 = vxor.u32 %v4441, 2147483648
        %v4456 = vxor.u32 %v4442, 2147483648
        %v4457 = vxor.u32 %v4443, 2147483648
        %v4458 = vxor.u32 %v4444, 2147483648
        %v4459 = vxor.u32 %v4445, 2147483648
        %v4460 = vxor.u32 %v4446, 2147483648
        %v4461 = vxor.u32 %v4447, 2147483648
        %v4462 = vxor.u32 %v4448, 2147483648
        %v4463 = vxor.u32 %v4449, 2147483648
        %v4464 = vxor.u32 %v4450, 2147483648
        %v4465 = vxor.u32 %v4451, 2147483648
        %v4466 = vxor.u32 %v4452, 2147483648
        %v4467 = vxor.u32 %v4453, 2147483648
        %v4468 = vxor.u32 %v4454, 2147483648
        %v4469 = vmul.f32 %v4455, 1.442695
        %v4470 = vpow.pop %v4469
        %v4471 = vmul.f32 %v4456, 1.442695
        %v4472 = vpow.pop %v4471
        %v4473 = vmul.f32 %v4457, 1.442695
        %v4474 = vpow.pop %v4473
        %v4475 = vmul.f32 %v4458, 1.442695
        %v4476 = vpow.pop %v4475
        %v4477 = vmul.f32 %v4459, 1.442695
        %v4478 = vpow.pop %v4477
        %v4479 = vmul.f32 %v4460, 1.442695
        %v4480 = vpow.pop %v4479
        %v4481 = vmul.f32 %v4461, 1.442695
        %v4482 = vpow.pop %v4481
        %v4483 = vmul.f32 %v4462, 1.442695
        %v4484 = vpow.pop %v4483
        %v4485 = vmul.f32 %v4463, 1.442695
        %v4486 = vpow.pop %v4485
        %v4487 = vmul.f32 %v4464, 1.442695
        %v4488 = vpow.pop %v4487
        %v4489 = vmul.f32 %v4465, 1.442695
        %v4490 = vpow.pop %v4489
        %v4491 = vmul.f32 %v4466, 1.442695
        %v4492 = vpow.pop %v4491
        %v4493 = vmul.f32 %v4467, 1.442695
        %v4494 = vpow.pop %v4493
        %v4495 = vmul.f32 %v4468, 1.442695
        %v4496 = vpow.pop %v4495
        %v4497 = vadd.f32 %v4470, 1.0
        %v4498 = vadd.f32 %v4472, 1.0
        %v4499 = vadd.f32 %v4474, 1.0
        %v4500 = vadd.f32 %v4476, 1.0
        %v4501 = vadd.f32 %v4478, 1.0
        %v4502 = vadd.f32 %v4480, 1.0
        %v4503 = vadd.f32 %v4482, 1.0
        %v4504 = vadd.f32 %v4484, 1.0
        %v4505 = vadd.f32 %v4486, 1.0
        %v4506 = vadd.f32 %v4488, 1.0
        %v4507 = vadd.f32 %v4490, 1.0
        %v4508 = vadd.f32 %v4492, 1.0
        %v4509 = vadd.f32 %v4494, 1.0
        %v4510 = vadd.f32 %v4496, 1.0
        %v4511 = vrcp.pop %v4497
        %v4512 = vmul.f32 %v4497, %v4511
        %v4513 = vsub.f32 1.0, %v4512
        %v4514 = vmul.f32 %v4511, %v4513
        %v4515 = vadd.f32 %v4511, %v4514
        %vm4516 = vweird.f32 %v4497
        %vm4517 = vweird.f32 %v4511
        %vm4518 = vmor %vm4516, %vm4517
        %v4519 = vsel %vm4518, %v4511, %v4515
        %v4520 = vand.u32 2147483647, %v4497
        %vm4521 = vcmp.eq.f32.partialorder %v4520, 8.507059e+37
        %v4522 = vand.u32 %v4497, 2147483648
        %v4523 = vor.u32 1.1754944e-38, %v4522
        %v4524 = vsel %vm4521, %v4523, %v4519
        %v4525 = vmul.f32 1.0, %v4524
        %v4526 = vrcp.pop %v4498
        %v4527 = vmul.f32 %v4498, %v4526
        %v4528 = vsub.f32 1.0, %v4527
        %v4529 = vmul.f32 %v4526, %v4528
        %v4530 = vadd.f32 %v4526, %v4529
        %vm4531 = vweird.f32 %v4498
        %vm4532 = vweird.f32 %v4526
        %vm4533 = vmor %vm4531, %vm4532
        %v4534 = vsel %vm4533, %v4526, %v4530
        %v4535 = vand.u32 2147483647, %v4498
        %vm4536 = vcmp.eq.f32.partialorder %v4535, 8.507059e+37
        %v4537 = vand.u32 %v4498, 2147483648
        %v4538 = vor.u32 1.1754944e-38, %v4537
        %v4539 = vsel %vm4536, %v4538, %v4534
        %v4540 = vmul.f32 1.0, %v4539
        %v4541 = vrcp.pop %v4499
        %v4542 = vmul.f32 %v4499, %v4541
        %v4543 = vsub.f32 1.0, %v4542
        %v4544 = vmul.f32 %v4541, %v4543
        %v4545 = vadd.f32 %v4541, %v4544
        %vm4546 = vweird.f32 %v4499
        %vm4547 = vweird.f32 %v4541
        %vm4548 = vmor %vm4546, %vm4547
        %v4549 = vsel %vm4548, %v4541, %v4545
        %v4550 = vand.u32 2147483647, %v4499
        %vm4551 = vcmp.eq.f32.partialorder %v4550, 8.507059e+37
        %v4552 = vand.u32 %v4499, 2147483648
        %v4553 = vor.u32 1.1754944e-38, %v4552
        %v4554 = vsel %vm4551, %v4553, %v4549
        %v4555 = vmul.f32 1.0, %v4554
        %v4556 = vrcp.pop %v4500
        %v4557 = vmul.f32 %v4500, %v4556
        %v4558 = vsub.f32 1.0, %v4557
        %v4559 = vmul.f32 %v4556, %v4558
        %v4560 = vadd.f32 %v4556, %v4559
        %vm4561 = vweird.f32 %v4500
        %vm4562 = vweird.f32 %v4556
        %vm4563 = vmor %vm4561, %vm4562
        %v4564 = vsel %vm4563, %v4556, %v4560
        %v4565 = vand.u32 2147483647, %v4500
        %vm4566 = vcmp.eq.f32.partialorder %v4565, 8.507059e+37
        %v4567 = vand.u32 %v4500, 2147483648
        %v4568 = vor.u32 1.1754944e-38, %v4567
        %v4569 = vsel %vm4566, %v4568, %v4564
        %v4570 = vmul.f32 1.0, %v4569
        %v4571 = vrcp.pop %v4501
        %v4572 = vmul.f32 %v4501, %v4571
        %v4573 = vsub.f32 1.0, %v4572
        %v4574 = vmul.f32 %v4571, %v4573
        %v4575 = vadd.f32 %v4571, %v4574
        %vm4576 = vweird.f32 %v4501
        %vm4577 = vweird.f32 %v4571
        %vm4578 = vmor %vm4576, %vm4577
        %v4579 = vsel %vm4578, %v4571, %v4575
        %v4580 = vand.u32 2147483647, %v4501
        %vm4581 = vcmp.eq.f32.partialorder %v4580, 8.507059e+37
        %v4582 = vand.u32 %v4501, 2147483648
        %v4583 = vor.u32 1.1754944e-38, %v4582
        %v4584 = vsel %vm4581, %v4583, %v4579
        %v4585 = vmul.f32 1.0, %v4584
        %v4586 = vrcp.pop %v4502
        %v4587 = vmul.f32 %v4502, %v4586
        %v4588 = vsub.f32 1.0, %v4587
        %v4589 = vmul.f32 %v4586, %v4588
        %v4590 = vadd.f32 %v4586, %v4589
        %vm4591 = vweird.f32 %v4502
        %vm4592 = vweird.f32 %v4586
        %vm4593 = vmor %vm4591, %vm4592
        %v4594 = vsel %vm4593, %v4586, %v4590
        %v4595 = vand.u32 2147483647, %v4502
        %vm4596 = vcmp.eq.f32.partialorder %v4595, 8.507059e+37
        %v4597 = vand.u32 %v4502, 2147483648
        %v4598 = vor.u32 1.1754944e-38, %v4597
        %v4599 = vsel %vm4596, %v4598, %v4594
        %v4600 = vmul.f32 1.0, %v4599
        %v4601 = vrcp.pop %v4503
        %v4602 = vmul.f32 %v4503, %v4601
        %v4603 = vsub.f32 1.0, %v4602
        %v4604 = vmul.f32 %v4601, %v4603
        %v4605 = vadd.f32 %v4601, %v4604
        %vm4606 = vweird.f32 %v4503
        %vm4607 = vweird.f32 %v4601
        %vm4608 = vmor %vm4606, %vm4607
        %v4609 = vsel %vm4608, %v4601, %v4605
        %v4610 = vand.u32 2147483647, %v4503
        %vm4611 = vcmp.eq.f32.partialorder %v4610, 8.507059e+37
        %v4612 = vand.u32 %v4503, 2147483648
        %v4613 = vor.u32 1.1754944e-38, %v4612
        %v4614 = vsel %vm4611, %v4613, %v4609
        %v4615 = vmul.f32 1.0, %v4614
        %v4616 = vrcp.pop %v4504
        %v4617 = vmul.f32 %v4504, %v4616
        %v4618 = vsub.f32 1.0, %v4617
        %v4619 = vmul.f32 %v4616, %v4618
        %v4620 = vadd.f32 %v4616, %v4619
        %vm4621 = vweird.f32 %v4504
        %vm4622 = vweird.f32 %v4616
        %vm4623 = vmor %vm4621, %vm4622
        %v4624 = vsel %vm4623, %v4616, %v4620
        %v4625 = vand.u32 2147483647, %v4504
        %vm4626 = vcmp.eq.f32.partialorder %v4625, 8.507059e+37
        %v4627 = vand.u32 %v4504, 2147483648
        %v4628 = vor.u32 1.1754944e-38, %v4627
        %v4629 = vsel %vm4626, %v4628, %v4624
        %v4630 = vmul.f32 1.0, %v4629
        %v4631 = vrcp.pop %v4505
        %v4632 = vmul.f32 %v4505, %v4631
        %v4633 = vsub.f32 1.0, %v4632
        %v4634 = vmul.f32 %v4631, %v4633
        %v4635 = vadd.f32 %v4631, %v4634
        %vm4636 = vweird.f32 %v4505
        %vm4637 = vweird.f32 %v4631
        %vm4638 = vmor %vm4636, %vm4637
        %v4639 = vsel %vm4638, %v4631, %v4635
        %v4640 = vand.u32 2147483647, %v4505
        %vm4641 = vcmp.eq.f32.partialorder %v4640, 8.507059e+37
        %v4642 = vand.u32 %v4505, 2147483648
        %v4643 = vor.u32 1.1754944e-38, %v4642
        %v4644 = vsel %vm4641, %v4643, %v4639
        %v4645 = vmul.f32 1.0, %v4644
        %v4646 = vrcp.pop %v4506
        %v4647 = vmul.f32 %v4506, %v4646
        %v4648 = vsub.f32 1.0, %v4647
        %v4649 = vmul.f32 %v4646, %v4648
        %v4650 = vadd.f32 %v4646, %v4649
        %vm4651 = vweird.f32 %v4506
        %vm4652 = vweird.f32 %v4646
        %vm4653 = vmor %vm4651, %vm4652
        %v4654 = vsel %vm4653, %v4646, %v4650
        %v4655 = vand.u32 2147483647, %v4506
        %vm4656 = vcmp.eq.f32.partialorder %v4655, 8.507059e+37
        %v4657 = vand.u32 %v4506, 2147483648
        %v4658 = vor.u32 1.1754944e-38, %v4657
        %v4659 = vsel %vm4656, %v4658, %v4654
        %v4660 = vmul.f32 1.0, %v4659
        %v4661 = vrcp.pop %v4507
        %v4662 = vmul.f32 %v4507, %v4661
        %v4663 = vsub.f32 1.0, %v4662
        %v4664 = vmul.f32 %v4661, %v4663
        %v4665 = vadd.f32 %v4661, %v4664
        %vm4666 = vweird.f32 %v4507
        %vm4667 = vweird.f32 %v4661
        %vm4668 = vmor %vm4666, %vm4667
        %v4669 = vsel %vm4668, %v4661, %v4665
        %v4670 = vand.u32 2147483647, %v4507
        %vm4671 = vcmp.eq.f32.partialorder %v4670, 8.507059e+37
        %v4672 = vand.u32 %v4507, 2147483648
        %v4673 = vor.u32 1.1754944e-38, %v4672
        %v4674 = vsel %vm4671, %v4673, %v4669
        %v4675 = vmul.f32 1.0, %v4674
        %v4676 = vrcp.pop %v4508
        %v4677 = vmul.f32 %v4508, %v4676
        %v4678 = vsub.f32 1.0, %v4677
        %v4679 = vmul.f32 %v4676, %v4678
        %v4680 = vadd.f32 %v4676, %v4679
        %vm4681 = vweird.f32 %v4508
        %vm4682 = vweird.f32 %v4676
        %vm4683 = vmor %vm4681, %vm4682
        %v4684 = vsel %vm4683, %v4676, %v4680
        %v4685 = vand.u32 2147483647, %v4508
        %vm4686 = vcmp.eq.f32.partialorder %v4685, 8.507059e+37
        %v4687 = vand.u32 %v4508, 2147483648
        %v4688 = vor.u32 1.1754944e-38, %v4687
        %v4689 = vsel %vm4686, %v4688, %v4684
        %v4690 = vmul.f32 1.0, %v4689
        %v4691 = vrcp.pop %v4509
        %v4692 = vmul.f32 %v4509, %v4691
        %v4693 = vsub.f32 1.0, %v4692
        %v4694 = vmul.f32 %v4691, %v4693
        %v4695 = vadd.f32 %v4691, %v4694
        %vm4696 = vweird.f32 %v4509
        %vm4697 = vweird.f32 %v4691
        %vm4698 = vmor %vm4696, %vm4697
        %v4699 = vsel %vm4698, %v4691, %v4695
        %v4700 = vand.u32 2147483647, %v4509
        %vm4701 = vcmp.eq.f32.partialorder %v4700, 8.507059e+37
        %v4702 = vand.u32 %v4509, 2147483648
        %v4703 = vor.u32 1.1754944e-38, %v4702
        %v4704 = vsel %vm4701, %v4703, %v4699
        %v4705 = vmul.f32 1.0, %v4704
        %v4706 = vrcp.pop %v4510
        %v4707 = vmul.f32 %v4510, %v4706
        %v4708 = vsub.f32 1.0, %v4707
        %v4709 = vmul.f32 %v4706, %v4708
        %v4710 = vadd.f32 %v4706, %v4709
        %vm4711 = vweird.f32 %v4510
        %vm4712 = vweird.f32 %v4706
        %vm4713 = vmor %vm4711, %vm4712
        %v4714 = vsel %vm4713, %v4706, %v4710
        %v4715 = vand.u32 2147483647, %v4510
        %vm4716 = vcmp.eq.f32.partialorder %v4715, 8.507059e+37
        %v4717 = vand.u32 %v4510, 2147483648
        %v4718 = vor.u32 1.1754944e-38, %v4717
        %v4719 = vsel %vm4716, %v4718, %v4714
        %v4720 = vmul.f32 1.0, %v4719
        %4735 = vset.pattern.permute.xlu0 6
        %4736 = vperm.xlu0 %4735, %v4525
        %v4737 = vpop.permute.xlu0 %4736
        %4738 = vset.pattern.permute.xlu0 6
        %4739 = vperm.xlu0 %4738, %v4540
        %v4740 = vpop.permute.xlu0 %4739
        %4741 = vset.pattern.permute.xlu0 6
        %4742 = vperm.xlu0 %4741, %v4555
        %v4743 = vpop.permute.xlu0 %4742
        %4744 = vset.pattern.permute.xlu0 6
        %4745 = vperm.xlu0 %4744, %v4570
        %v4746 = vpop.permute.xlu0 %4745
        %4747 = vset.pattern.permute.xlu0 6
        %4748 = vperm.xlu0 %4747, %v4585
        %v4749 = vpop.permute.xlu0 %4748
        %4750 = vset.pattern.permute.xlu0 6
        %4751 = vperm.xlu0 %4750, %v4600
        %v4752 = vpop.permute.xlu0 %4751
        %4753 = vset.pattern.permute.xlu0 6
        %4754 = vperm.xlu0 %4753, %v4615
        %v4755 = vpop.permute.xlu0 %4754
        %4756 = vset.pattern.permute.xlu0 6
        %4757 = vperm.xlu0 %4756, %v4630
        %v4758 = vpop.permute.xlu0 %4757
        %4759 = vset.pattern.permute.xlu0 6
        %4760 = vperm.xlu0 %4759, %v4645
        %v4761 = vpop.permute.xlu0 %4760
        %4762 = vset.pattern.permute.xlu0 6
        %4763 = vperm.xlu0 %4762, %v4660
        %v4764 = vpop.permute.xlu0 %4763
        %4765 = vset.pattern.permute.xlu0 6
        %4766 = vperm.xlu0 %4765, %v4675
        %v4767 = vpop.permute.xlu0 %4766
        %4768 = vset.pattern.permute.xlu0 6
        %4769 = vperm.xlu0 %4768, %v4690
        %v4770 = vpop.permute.xlu0 %4769
        %4771 = vset.pattern.permute.xlu0 6
        %4772 = vperm.xlu0 %4771, %v4705
        %v4773 = vpop.permute.xlu0 %4772
        %4774 = vset.pattern.permute.xlu0 6
        %4775 = vperm.xlu0 %4774, %v4720
        %v4776 = vpop.permute.xlu0 %4775
        %v4777 = vperm.slane %v4737, %v1409
        %v4778 = vperm.slane %v4740, %v1411
        %v4779 = vsel %vm1413, %v4778, %v4777
        %v4780 = vperm.slane %v4743, %v1415
        %v4781 = vsel %vm1417, %v4780, %v4779
        %v4782 = vperm.slane %v4746, %v1419
        %v4783 = vsel %vm1421, %v4782, %v4781
        %v4784 = vperm.slane %v4749, %v1423
        %v4785 = vsel %vm1425, %v4784, %v4783
        %v4786 = vperm.slane %v4752, %v1427
        %v4787 = vsel %vm1429, %v4786, %v4785
        %v4788 = vperm.slane %v4755, %v1431
        %v4789 = vsel %vm1433, %v4788, %v4787
        %v4790 = vperm.slane %v4758, %v1409
        %v4791 = vperm.slane %v4761, %v1411
        %v4792 = vsel %vm1413, %v4791, %v4790
        %v4793 = vperm.slane %v4764, %v1415
        %v4794 = vsel %vm1417, %v4793, %v4792
        %v4795 = vperm.slane %v4767, %v1419
        %v4796 = vsel %vm1421, %v4795, %v4794
        %v4797 = vperm.slane %v4770, %v1423
        %v4798 = vsel %vm1425, %v4797, %v4796
        %v4799 = vperm.slane %v4773, %v1427
        %v4800 = vsel %vm1429, %v4799, %v4798
        %v4801 = vperm.slane %v4776, %v1431
        %v4802 = vsel %vm1433, %v4801, %v4800
        %v4803 = vsel %vm1448, %v4802, %v4789
        %v4805 = vsel %vm1451, %v4803, 0.0
        %s4806 = scalar_lea.vmem %s258, 12 [#allocation8]
        %4807 = vst [vmem:[%s4806] sm:$0x3] %v4805
        %v4808 = vpack.c.bf16 %v4525, %v4525
        %v4809 = vpack.c.bf16 %v4540, %v4540
        %v4810 = vpack.c.bf16 %v4555, %v4555
        %v4811 = vpack.c.bf16 %v4570, %v4570
        %v4812 = vpack.c.bf16 %v4585, %v4585
        %v4813 = vpack.c.bf16 %v4600, %v4600
        %v4814 = vpack.c.bf16 %v4615, %v4615
        %v4815 = vpack.c.bf16 %v4630, %v4630
        %v4816 = vpack.c.bf16 %v4645, %v4645
        %v4817 = vpack.c.bf16 %v4660, %v4660
        %v4818 = vpack.c.bf16 %v4675, %v4675
        %v4819 = vpack.c.bf16 %v4690, %v4690
        %v4820 = vpack.c.bf16 %v4705, %v4705
        %v4821 = vpack.c.bf16 %v4720, %v4720
        %v4829 = vunpack.c.l.b16 %v4808
        %v4830 = vunpack.c.l.b16 %v4809
        %v4831 = vunpack.c.l.b16 %v4810
        %v4832 = vunpack.c.l.b16 %v4811
        %v4833 = vunpack.c.l.b16 %v4812
        %v4834 = vunpack.c.l.b16 %v4813
        %v4835 = vunpack.c.l.b16 %v4814
        %v4836 = vpack.c.b16 %v4830, %v4829
        %v4837 = vpack.c.b16 %v4832, %v4831
        %v4838 = vpack.c.b16 %v4834, %v4833
        %v4839 = vpack.c.b16 %v4835, %v4835
        %v4840 = vunpack.c.l.b16 %v4836
        %v4841 = vunpack.c.h.b16 %v4836
        %v4842 = vunpack.c.l.b16 %v4837
        %v4843 = vunpack.c.h.b16 %v4837
        %v4844 = vunpack.c.l.b16 %v4838
        %v4845 = vunpack.c.h.b16 %v4838
        %v4846 = vunpack.c.l.b16 %v4839
        %4847 = vset.pattern.permute.xlu0 6
        %4848 = vperm.xlu0 %4847, %v4840
        %v4849 = vpop.permute.xlu0 %4848
        %4850 = vset.pattern.permute.xlu0 6
        %4851 = vperm.xlu0 %4850, %v4841
        %v4852 = vpop.permute.xlu0 %4851
        %4853 = vset.pattern.permute.xlu0 6
        %4854 = vperm.xlu0 %4853, %v4842
        %v4855 = vpop.permute.xlu0 %4854
        %4856 = vset.pattern.permute.xlu0 6
        %4857 = vperm.xlu0 %4856, %v4843
        %v4858 = vpop.permute.xlu0 %4857
        %4859 = vset.pattern.permute.xlu0 6
        %4860 = vperm.xlu0 %4859, %v4844
        %v4861 = vpop.permute.xlu0 %4860
        %4862 = vset.pattern.permute.xlu0 6
        %4863 = vperm.xlu0 %4862, %v4845
        %v4864 = vpop.permute.xlu0 %4863
        %4865 = vset.pattern.permute.xlu0 6
        %4866 = vperm.xlu0 %4865, %v4846
        %v4867 = vpop.permute.xlu0 %4866
        %v4868 = vperm.slane %v4849, %v1409
        %v4869 = vperm.slane %v4852, %v1411
        %v4870 = vsel %vm1413, %v4869, %v4868
        %v4871 = vperm.slane %v4855, %v1415
        %v4872 = vsel %vm1417, %v4871, %v4870
        %v4873 = vperm.slane %v4858, %v1419
        %v4874 = vsel %vm1421, %v4873, %v4872
        %v4875 = vperm.slane %v4861, %v1423
        %v4876 = vsel %vm1425, %v4875, %v4874
        %v4877 = vperm.slane %v4864, %v1427
        %v4878 = vsel %vm1429, %v4877, %v4876
        %v4879 = vperm.slane %v4867, %v1431
        %v4880 = vsel %vm1433, %v4879, %v4878
        %v4881 = vpack.c.b16 %v4880, %v4880
        %v4882 = vpack.c.b16 %v598, %v598
        %v4884 = vsel %vm1451, %v4881, 0
        %v4887 = vsel %vm1532, %v4882, 0
        %4889 = vmatpush.bf16.msra.mxu0 0
        %4890 = vmatpush.bf16.msra.mxu0 0
        %4891 = vmatpush.bf16.msra.mxu0 0
        %4892 = vmatpush.bf16.msra.mxu0 0
        %4893 = vmatpush.bf16.msra.mxu0 %v4887
        %4894 = vmatpush.bf16.msra.mxu0 %v664
        %4895 = vmatpush.bf16.msra.mxu0 %v663
        %4896 = vmatpush.bf16.msra.mxu0 %v662
        %4897 = vmatmul.bf16.gmra.mxu0 %v4884
        %v4898 = vpop.f32.mrf.mxu0
        %v4899 = vadd.f32 0.0, %v4898
        %v4900 = vpop.f32.mrf.mxu0
        %4901 = vdwg.mxu0
        %v4909 = vunpack.c.l.b16 %v4815
        %v4910 = vunpack.c.l.b16 %v4816
        %v4911 = vunpack.c.l.b16 %v4817
        %v4912 = vunpack.c.l.b16 %v4818
        %v4913 = vunpack.c.l.b16 %v4819
        %v4914 = vunpack.c.l.b16 %v4820
        %v4915 = vunpack.c.l.b16 %v4821
        %v4916 = vpack.c.b16 %v4910, %v4909
        %v4917 = vpack.c.b16 %v4912, %v4911
        %v4918 = vpack.c.b16 %v4914, %v4913
        %v4919 = vpack.c.b16 %v4915, %v4915
        %v4920 = vunpack.c.l.b16 %v4916
        %v4921 = vunpack.c.h.b16 %v4916
        %v4922 = vunpack.c.l.b16 %v4917
        %v4923 = vunpack.c.h.b16 %v4917
        %v4924 = vunpack.c.l.b16 %v4918
        %v4925 = vunpack.c.h.b16 %v4918
        %v4926 = vunpack.c.l.b16 %v4919
        %4927 = vset.pattern.permute.xlu0 6
        %4928 = vperm.xlu0 %4927, %v4920
        %v4929 = vpop.permute.xlu0 %4928
        %4930 = vset.pattern.permute.xlu0 6
        %4931 = vperm.xlu0 %4930, %v4921
        %v4932 = vpop.permute.xlu0 %4931
        %4933 = vset.pattern.permute.xlu0 6
        %4934 = vperm.xlu0 %4933, %v4922
        %v4935 = vpop.permute.xlu0 %4934
        %4936 = vset.pattern.permute.xlu0 6
        %4937 = vperm.xlu0 %4936, %v4923
        %v4938 = vpop.permute.xlu0 %4937
        %4939 = vset.pattern.permute.xlu0 6
        %4940 = vperm.xlu0 %4939, %v4924
        %v4941 = vpop.permute.xlu0 %4940
        %4942 = vset.pattern.permute.xlu0 6
        %4943 = vperm.xlu0 %4942, %v4925
        %v4944 = vpop.permute.xlu0 %4943
        %4945 = vset.pattern.permute.xlu0 6
        %4946 = vperm.xlu0 %4945, %v4926
        %v4947 = vpop.permute.xlu0 %4946
        %v4948 = vperm.slane %v4929, %v1409
        %v4949 = vperm.slane %v4932, %v1411
        %v4950 = vsel %vm1413, %v4949, %v4948
        %v4951 = vperm.slane %v4935, %v1415
        %v4952 = vsel %vm1417, %v4951, %v4950
        %v4953 = vperm.slane %v4938, %v1419
        %v4954 = vsel %vm1421, %v4953, %v4952
        %v4955 = vperm.slane %v4941, %v1423
        %v4956 = vsel %vm1425, %v4955, %v4954
        %v4957 = vperm.slane %v4944, %v1427
        %v4958 = vsel %vm1429, %v4957, %v4956
        %v4959 = vperm.slane %v4947, %v1431
        %v4960 = vsel %vm1433, %v4959, %v4958
        %v4961 = vpack.c.b16 %v4960, %v4960
        %v4962 = vpack.c.b16 %v600, %v599
        %v4963 = vpack.c.b16 %v602, %v601
        %v4964 = vpack.c.b16 %v604, %v603
        %v4965 = vpack.c.b16 %v605, %v605
        %v4970 = vsel %vm1451, %v4961, 0
        %v4973 = vsel %vm1532, %v4965, 0
        %4975 = vmatpush.bf16.msra.mxu0 0
        %4976 = vmatpush.bf16.msra.mxu0 0
        %4977 = vmatpush.bf16.msra.mxu0 0
        %4978 = vmatpush.bf16.msra.mxu0 0
        %4979 = vmatpush.bf16.msra.mxu0 %v4973
        %4980 = vmatpush.bf16.msra.mxu0 %v4964
        %4981 = vmatpush.bf16.msra.mxu0 %v4963
        %4982 = vmatpush.bf16.msra.mxu0 %v4962
        %4983 = vmatmul.bf16.gmra.mxu0 %v4970
        %v4984 = vpop.f32.mrf.mxu0
        %v4985 = vadd.f32 0.0, %v4984
        %v4986 = vpop.f32.mrf.mxu0
        %4987 = vdwg.mxu0
        %v4988 = vmul.f32 %v4899, 0.020408163
        %v4989 = vmul.f32 %v4985, 0.020408163
        %v4992 = vrot.slane %v4989, 7
        %v4993 = vsel %vm1448, %v4992, %v4988
        %s4995 = scalar_lea.vmem %s251, 12 [#allocation7]
        %4996 = vst [vmem:[%s4995] sm:$0x3] %v4993
        %s4997 = sadd.s32 %s1069, 7
        %s4998 = sld [smem:[#allocation6 + %s4997]]
        %v4999 = vstv %s4998
        %v5000 = vadd.f32 %v1035, %v4999
        %v5001 = vadd.f32 %v1037, %v4999
        %v5002 = vadd.f32 %v1040, %v4999
        %v5003 = vadd.f32 %v1042, %v4999
        %v5004 = vadd.f32 %v1045, %v4999
        %v5005 = vadd.f32 %v1047, %v4999
        %v5006 = vadd.f32 %v1050, %v4999
        %v5007 = vadd.f32 %v1052, %v4999
        %v5008 = vadd.f32 %v1055, %v4999
        %v5009 = vadd.f32 %v1057, %v4999
        %v5010 = vadd.f32 %v1060, %v4999
        %v5011 = vadd.f32 %v1062, %v4999
        %v5012 = vadd.f32 %v1065, %v4999
        %v5013 = vadd.f32 %v1067, %v4999
        %v5014 = vxor.u32 %v5000, 2147483648
        %v5015 = vxor.u32 %v5001, 2147483648
        %v5016 = vxor.u32 %v5002, 2147483648
        %v5017 = vxor.u32 %v5003, 2147483648
        %v5018 = vxor.u32 %v5004, 2147483648
        %v5019 = vxor.u32 %v5005, 2147483648
        %v5020 = vxor.u32 %v5006, 2147483648
        %v5021 = vxor.u32 %v5007, 2147483648
        %v5022 = vxor.u32 %v5008, 2147483648
        %v5023 = vxor.u32 %v5009, 2147483648
        %v5024 = vxor.u32 %v5010, 2147483648
        %v5025 = vxor.u32 %v5011, 2147483648
        %v5026 = vxor.u32 %v5012, 2147483648
        %v5027 = vxor.u32 %v5013, 2147483648
        %v5028 = vmul.f32 %v5014, 1.442695
        %v5029 = vpow.pop %v5028
        %v5030 = vmul.f32 %v5015, 1.442695
        %v5031 = vpow.pop %v5030
        %v5032 = vmul.f32 %v5016, 1.442695
        %v5033 = vpow.pop %v5032
        %v5034 = vmul.f32 %v5017, 1.442695
        %v5035 = vpow.pop %v5034
        %v5036 = vmul.f32 %v5018, 1.442695
        %v5037 = vpow.pop %v5036
        %v5038 = vmul.f32 %v5019, 1.442695
        %v5039 = vpow.pop %v5038
        %v5040 = vmul.f32 %v5020, 1.442695
        %v5041 = vpow.pop %v5040
        %v5042 = vmul.f32 %v5021, 1.442695
        %v5043 = vpow.pop %v5042
        %v5044 = vmul.f32 %v5022, 1.442695
        %v5045 = vpow.pop %v5044
        %v5046 = vmul.f32 %v5023, 1.442695
        %v5047 = vpow.pop %v5046
        %v5048 = vmul.f32 %v5024, 1.442695
        %v5049 = vpow.pop %v5048
        %v5050 = vmul.f32 %v5025, 1.442695
        %v5051 = vpow.pop %v5050
        %v5052 = vmul.f32 %v5026, 1.442695
        %v5053 = vpow.pop %v5052
        %v5054 = vmul.f32 %v5027, 1.442695
        %v5055 = vpow.pop %v5054
        %v5056 = vadd.f32 %v5029, 1.0
        %v5057 = vadd.f32 %v5031, 1.0
        %v5058 = vadd.f32 %v5033, 1.0
        %v5059 = vadd.f32 %v5035, 1.0
        %v5060 = vadd.f32 %v5037, 1.0
        %v5061 = vadd.f32 %v5039, 1.0
        %v5062 = vadd.f32 %v5041, 1.0
        %v5063 = vadd.f32 %v5043, 1.0
        %v5064 = vadd.f32 %v5045, 1.0
        %v5065 = vadd.f32 %v5047, 1.0
        %v5066 = vadd.f32 %v5049, 1.0
        %v5067 = vadd.f32 %v5051, 1.0
        %v5068 = vadd.f32 %v5053, 1.0
        %v5069 = vadd.f32 %v5055, 1.0
        %v5070 = vrcp.pop %v5056
        %v5071 = vmul.f32 %v5056, %v5070
        %v5072 = vsub.f32 1.0, %v5071
        %v5073 = vmul.f32 %v5070, %v5072
        %v5074 = vadd.f32 %v5070, %v5073
        %vm5075 = vweird.f32 %v5056
        %vm5076 = vweird.f32 %v5070
        %vm5077 = vmor %vm5075, %vm5076
        %v5078 = vsel %vm5077, %v5070, %v5074
        %v5079 = vand.u32 2147483647, %v5056
        %vm5080 = vcmp.eq.f32.partialorder %v5079, 8.507059e+37
        %v5081 = vand.u32 %v5056, 2147483648
        %v5082 = vor.u32 1.1754944e-38, %v5081
        %v5083 = vsel %vm5080, %v5082, %v5078
        %v5084 = vmul.f32 1.0, %v5083
        %v5085 = vrcp.pop %v5057
        %v5086 = vmul.f32 %v5057, %v5085
        %v5087 = vsub.f32 1.0, %v5086
        %v5088 = vmul.f32 %v5085, %v5087
        %v5089 = vadd.f32 %v5085, %v5088
        %vm5090 = vweird.f32 %v5057
        %vm5091 = vweird.f32 %v5085
        %vm5092 = vmor %vm5090, %vm5091
        %v5093 = vsel %vm5092, %v5085, %v5089
        %v5094 = vand.u32 2147483647, %v5057
        %vm5095 = vcmp.eq.f32.partialorder %v5094, 8.507059e+37
        %v5096 = vand.u32 %v5057, 2147483648
        %v5097 = vor.u32 1.1754944e-38, %v5096
        %v5098 = vsel %vm5095, %v5097, %v5093
        %v5099 = vmul.f32 1.0, %v5098
        %v5100 = vrcp.pop %v5058
        %v5101 = vmul.f32 %v5058, %v5100
        %v5102 = vsub.f32 1.0, %v5101
        %v5103 = vmul.f32 %v5100, %v5102
        %v5104 = vadd.f32 %v5100, %v5103
        %vm5105 = vweird.f32 %v5058
        %vm5106 = vweird.f32 %v5100
        %vm5107 = vmor %vm5105, %vm5106
        %v5108 = vsel %vm5107, %v5100, %v5104
        %v5109 = vand.u32 2147483647, %v5058
        %vm5110 = vcmp.eq.f32.partialorder %v5109, 8.507059e+37
        %v5111 = vand.u32 %v5058, 2147483648
        %v5112 = vor.u32 1.1754944e-38, %v5111
        %v5113 = vsel %vm5110, %v5112, %v5108
        %v5114 = vmul.f32 1.0, %v5113
        %v5115 = vrcp.pop %v5059
        %v5116 = vmul.f32 %v5059, %v5115
        %v5117 = vsub.f32 1.0, %v5116
        %v5118 = vmul.f32 %v5115, %v5117
        %v5119 = vadd.f32 %v5115, %v5118
        %vm5120 = vweird.f32 %v5059
        %vm5121 = vweird.f32 %v5115
        %vm5122 = vmor %vm5120, %vm5121
        %v5123 = vsel %vm5122, %v5115, %v5119
        %v5124 = vand.u32 2147483647, %v5059
        %vm5125 = vcmp.eq.f32.partialorder %v5124, 8.507059e+37
        %v5126 = vand.u32 %v5059, 2147483648
        %v5127 = vor.u32 1.1754944e-38, %v5126
        %v5128 = vsel %vm5125, %v5127, %v5123
        %v5129 = vmul.f32 1.0, %v5128
        %v5130 = vrcp.pop %v5060
        %v5131 = vmul.f32 %v5060, %v5130
        %v5132 = vsub.f32 1.0, %v5131
        %v5133 = vmul.f32 %v5130, %v5132
        %v5134 = vadd.f32 %v5130, %v5133
        %vm5135 = vweird.f32 %v5060
        %vm5136 = vweird.f32 %v5130
        %vm5137 = vmor %vm5135, %vm5136
        %v5138 = vsel %vm5137, %v5130, %v5134
        %v5139 = vand.u32 2147483647, %v5060
        %vm5140 = vcmp.eq.f32.partialorder %v5139, 8.507059e+37
        %v5141 = vand.u32 %v5060, 2147483648
        %v5142 = vor.u32 1.1754944e-38, %v5141
        %v5143 = vsel %vm5140, %v5142, %v5138
        %v5144 = vmul.f32 1.0, %v5143
        %v5145 = vrcp.pop %v5061
        %v5146 = vmul.f32 %v5061, %v5145
        %v5147 = vsub.f32 1.0, %v5146
        %v5148 = vmul.f32 %v5145, %v5147
        %v5149 = vadd.f32 %v5145, %v5148
        %vm5150 = vweird.f32 %v5061
        %vm5151 = vweird.f32 %v5145
        %vm5152 = vmor %vm5150, %vm5151
        %v5153 = vsel %vm5152, %v5145, %v5149
        %v5154 = vand.u32 2147483647, %v5061
        %vm5155 = vcmp.eq.f32.partialorder %v5154, 8.507059e+37
        %v5156 = vand.u32 %v5061, 2147483648
        %v5157 = vor.u32 1.1754944e-38, %v5156
        %v5158 = vsel %vm5155, %v5157, %v5153
        %v5159 = vmul.f32 1.0, %v5158
        %v5160 = vrcp.pop %v5062
        %v5161 = vmul.f32 %v5062, %v5160
        %v5162 = vsub.f32 1.0, %v5161
        %v5163 = vmul.f32 %v5160, %v5162
        %v5164 = vadd.f32 %v5160, %v5163
        %vm5165 = vweird.f32 %v5062
        %vm5166 = vweird.f32 %v5160
        %vm5167 = vmor %vm5165, %vm5166
        %v5168 = vsel %vm5167, %v5160, %v5164
        %v5169 = vand.u32 2147483647, %v5062
        %vm5170 = vcmp.eq.f32.partialorder %v5169, 8.507059e+37
        %v5171 = vand.u32 %v5062, 2147483648
        %v5172 = vor.u32 1.1754944e-38, %v5171
        %v5173 = vsel %vm5170, %v5172, %v5168
        %v5174 = vmul.f32 1.0, %v5173
        %v5175 = vrcp.pop %v5063
        %v5176 = vmul.f32 %v5063, %v5175
        %v5177 = vsub.f32 1.0, %v5176
        %v5178 = vmul.f32 %v5175, %v5177
        %v5179 = vadd.f32 %v5175, %v5178
        %vm5180 = vweird.f32 %v5063
        %vm5181 = vweird.f32 %v5175
        %vm5182 = vmor %vm5180, %vm5181
        %v5183 = vsel %vm5182, %v5175, %v5179
        %v5184 = vand.u32 2147483647, %v5063
        %vm5185 = vcmp.eq.f32.partialorder %v5184, 8.507059e+37
        %v5186 = vand.u32 %v5063, 2147483648
        %v5187 = vor.u32 1.1754944e-38, %v5186
        %v5188 = vsel %vm5185, %v5187, %v5183
        %v5189 = vmul.f32 1.0, %v5188
        %v5190 = vrcp.pop %v5064
        %v5191 = vmul.f32 %v5064, %v5190
        %v5192 = vsub.f32 1.0, %v5191
        %v5193 = vmul.f32 %v5190, %v5192
        %v5194 = vadd.f32 %v5190, %v5193
        %vm5195 = vweird.f32 %v5064
        %vm5196 = vweird.f32 %v5190
        %vm5197 = vmor %vm5195, %vm5196
        %v5198 = vsel %vm5197, %v5190, %v5194
        %v5199 = vand.u32 2147483647, %v5064
        %vm5200 = vcmp.eq.f32.partialorder %v5199, 8.507059e+37
        %v5201 = vand.u32 %v5064, 2147483648
        %v5202 = vor.u32 1.1754944e-38, %v5201
        %v5203 = vsel %vm5200, %v5202, %v5198
        %v5204 = vmul.f32 1.0, %v5203
        %v5205 = vrcp.pop %v5065
        %v5206 = vmul.f32 %v5065, %v5205
        %v5207 = vsub.f32 1.0, %v5206
        %v5208 = vmul.f32 %v5205, %v5207
        %v5209 = vadd.f32 %v5205, %v5208
        %vm5210 = vweird.f32 %v5065
        %vm5211 = vweird.f32 %v5205
        %vm5212 = vmor %vm5210, %vm5211
        %v5213 = vsel %vm5212, %v5205, %v5209
        %v5214 = vand.u32 2147483647, %v5065
        %vm5215 = vcmp.eq.f32.partialorder %v5214, 8.507059e+37
        %v5216 = vand.u32 %v5065, 2147483648
        %v5217 = vor.u32 1.1754944e-38, %v5216
        %v5218 = vsel %vm5215, %v5217, %v5213
        %v5219 = vmul.f32 1.0, %v5218
        %v5220 = vrcp.pop %v5066
        %v5221 = vmul.f32 %v5066, %v5220
        %v5222 = vsub.f32 1.0, %v5221
        %v5223 = vmul.f32 %v5220, %v5222
        %v5224 = vadd.f32 %v5220, %v5223
        %vm5225 = vweird.f32 %v5066
        %vm5226 = vweird.f32 %v5220
        %vm5227 = vmor %vm5225, %vm5226
        %v5228 = vsel %vm5227, %v5220, %v5224
        %v5229 = vand.u32 2147483647, %v5066
        %vm5230 = vcmp.eq.f32.partialorder %v5229, 8.507059e+37
        %v5231 = vand.u32 %v5066, 2147483648
        %v5232 = vor.u32 1.1754944e-38, %v5231
        %v5233 = vsel %vm5230, %v5232, %v5228
        %v5234 = vmul.f32 1.0, %v5233
        %v5235 = vrcp.pop %v5067
        %v5236 = vmul.f32 %v5067, %v5235
        %v5237 = vsub.f32 1.0, %v5236
        %v5238 = vmul.f32 %v5235, %v5237
        %v5239 = vadd.f32 %v5235, %v5238
        %vm5240 = vweird.f32 %v5067
        %vm5241 = vweird.f32 %v5235
        %vm5242 = vmor %vm5240, %vm5241
        %v5243 = vsel %vm5242, %v5235, %v5239
        %v5244 = vand.u32 2147483647, %v5067
        %vm5245 = vcmp.eq.f32.partialorder %v5244, 8.507059e+37
        %v5246 = vand.u32 %v5067, 2147483648
        %v5247 = vor.u32 1.1754944e-38, %v5246
        %v5248 = vsel %vm5245, %v5247, %v5243
        %v5249 = vmul.f32 1.0, %v5248
        %v5250 = vrcp.pop %v5068
        %v5251 = vmul.f32 %v5068, %v5250
        %v5252 = vsub.f32 1.0, %v5251
        %v5253 = vmul.f32 %v5250, %v5252
        %v5254 = vadd.f32 %v5250, %v5253
        %vm5255 = vweird.f32 %v5068
        %vm5256 = vweird.f32 %v5250
        %vm5257 = vmor %vm5255, %vm5256
        %v5258 = vsel %vm5257, %v5250, %v5254
        %v5259 = vand.u32 2147483647, %v5068
        %vm5260 = vcmp.eq.f32.partialorder %v5259, 8.507059e+37
        %v5261 = vand.u32 %v5068, 2147483648
        %v5262 = vor.u32 1.1754944e-38, %v5261
        %v5263 = vsel %vm5260, %v5262, %v5258
        %v5264 = vmul.f32 1.0, %v5263
        %v5265 = vrcp.pop %v5069
        %v5266 = vmul.f32 %v5069, %v5265
        %v5267 = vsub.f32 1.0, %v5266
        %v5268 = vmul.f32 %v5265, %v5267
        %v5269 = vadd.f32 %v5265, %v5268
        %vm5270 = vweird.f32 %v5069
        %vm5271 = vweird.f32 %v5265
        %vm5272 = vmor %vm5270, %vm5271
        %v5273 = vsel %vm5272, %v5265, %v5269
        %v5274 = vand.u32 2147483647, %v5069
        %vm5275 = vcmp.eq.f32.partialorder %v5274, 8.507059e+37
        %v5276 = vand.u32 %v5069, 2147483648
        %v5277 = vor.u32 1.1754944e-38, %v5276
        %v5278 = vsel %vm5275, %v5277, %v5273
        %v5279 = vmul.f32 1.0, %v5278
        %5294 = vset.pattern.permute.xlu0 7
        %5295 = vperm.xlu0 %5294, %v5084
        %v5296 = vpop.permute.xlu0 %5295
        %5297 = vset.pattern.permute.xlu0 7
        %5298 = vperm.xlu0 %5297, %v5099
        %v5299 = vpop.permute.xlu0 %5298
        %5300 = vset.pattern.permute.xlu0 7
        %5301 = vperm.xlu0 %5300, %v5114
        %v5302 = vpop.permute.xlu0 %5301
        %5303 = vset.pattern.permute.xlu0 7
        %5304 = vperm.xlu0 %5303, %v5129
        %v5305 = vpop.permute.xlu0 %5304
        %5306 = vset.pattern.permute.xlu0 7
        %5307 = vperm.xlu0 %5306, %v5144
        %v5308 = vpop.permute.xlu0 %5307
        %5309 = vset.pattern.permute.xlu0 7
        %5310 = vperm.xlu0 %5309, %v5159
        %v5311 = vpop.permute.xlu0 %5310
        %5312 = vset.pattern.permute.xlu0 7
        %5313 = vperm.xlu0 %5312, %v5174
        %v5314 = vpop.permute.xlu0 %5313
        %5315 = vset.pattern.permute.xlu0 7
        %5316 = vperm.xlu0 %5315, %v5189
        %v5317 = vpop.permute.xlu0 %5316
        %5318 = vset.pattern.permute.xlu0 7
        %5319 = vperm.xlu0 %5318, %v5204
        %v5320 = vpop.permute.xlu0 %5319
        %5321 = vset.pattern.permute.xlu0 7
        %5322 = vperm.xlu0 %5321, %v5219
        %v5323 = vpop.permute.xlu0 %5322
        %5324 = vset.pattern.permute.xlu0 7
        %5325 = vperm.xlu0 %5324, %v5234
        %v5326 = vpop.permute.xlu0 %5325
        %5327 = vset.pattern.permute.xlu0 7
        %5328 = vperm.xlu0 %5327, %v5249
        %v5329 = vpop.permute.xlu0 %5328
        %5330 = vset.pattern.permute.xlu0 7
        %5331 = vperm.xlu0 %5330, %v5264
        %v5332 = vpop.permute.xlu0 %5331
        %5333 = vset.pattern.permute.xlu0 7
        %5334 = vperm.xlu0 %5333, %v5279
        %v5335 = vpop.permute.xlu0 %5334
        %v5336 = vperm.slane %v5296, %v1409
        %v5337 = vperm.slane %v5299, %v1411
        %v5338 = vsel %vm1413, %v5337, %v5336
        %v5339 = vperm.slane %v5302, %v1415
        %v5340 = vsel %vm1417, %v5339, %v5338
        %v5341 = vperm.slane %v5305, %v1419
        %v5342 = vsel %vm1421, %v5341, %v5340
        %v5343 = vperm.slane %v5308, %v1423
        %v5344 = vsel %vm1425, %v5343, %v5342
        %v5345 = vperm.slane %v5311, %v1427
        %v5346 = vsel %vm1429, %v5345, %v5344
        %v5347 = vperm.slane %v5314, %v1431
        %v5348 = vsel %vm1433, %v5347, %v5346
        %v5349 = vperm.slane %v5317, %v1409
        %v5350 = vperm.slane %v5320, %v1411
        %v5351 = vsel %vm1413, %v5350, %v5349
        %v5352 = vperm.slane %v5323, %v1415
        %v5353 = vsel %vm1417, %v5352, %v5351
        %v5354 = vperm.slane %v5326, %v1419
        %v5355 = vsel %vm1421, %v5354, %v5353
        %v5356 = vperm.slane %v5329, %v1423
        %v5357 = vsel %vm1425, %v5356, %v5355
        %v5358 = vperm.slane %v5332, %v1427
        %v5359 = vsel %vm1429, %v5358, %v5357
        %v5360 = vperm.slane %v5335, %v1431
        %v5361 = vsel %vm1433, %v5360, %v5359
        %v5362 = vsel %vm1448, %v5361, %v5348
        %v5364 = vsel %vm1451, %v5362, 0.0
        %s5365 = scalar_lea.vmem %s258, 14 [#allocation8]
        %5366 = vst [vmem:[%s5365] sm:$0x3] %v5364
        %v5367 = vpack.c.bf16 %v5084, %v5084
        %v5368 = vpack.c.bf16 %v5099, %v5099
        %v5369 = vpack.c.bf16 %v5114, %v5114
        %v5370 = vpack.c.bf16 %v5129, %v5129
        %v5371 = vpack.c.bf16 %v5144, %v5144
        %v5372 = vpack.c.bf16 %v5159, %v5159
        %v5373 = vpack.c.bf16 %v5174, %v5174
        %v5374 = vpack.c.bf16 %v5189, %v5189
        %v5375 = vpack.c.bf16 %v5204, %v5204
        %v5376 = vpack.c.bf16 %v5219, %v5219
        %v5377 = vpack.c.bf16 %v5234, %v5234
        %v5378 = vpack.c.bf16 %v5249, %v5249
        %v5379 = vpack.c.bf16 %v5264, %v5264
        %v5380 = vpack.c.bf16 %v5279, %v5279
        %v5388 = vunpack.c.l.b16 %v5367
        %v5389 = vunpack.c.l.b16 %v5368
        %v5390 = vunpack.c.l.b16 %v5369
        %v5391 = vunpack.c.l.b16 %v5370
        %v5392 = vunpack.c.l.b16 %v5371
        %v5393 = vunpack.c.l.b16 %v5372
        %v5394 = vunpack.c.l.b16 %v5373
        %v5395 = vpack.c.b16 %v5389, %v5388
        %v5396 = vpack.c.b16 %v5391, %v5390
        %v5397 = vpack.c.b16 %v5393, %v5392
        %v5398 = vpack.c.b16 %v5394, %v5394
        %v5399 = vunpack.c.l.b16 %v5395
        %v5400 = vunpack.c.h.b16 %v5395
        %v5401 = vunpack.c.l.b16 %v5396
        %v5402 = vunpack.c.h.b16 %v5396
        %v5403 = vunpack.c.l.b16 %v5397
        %v5404 = vunpack.c.h.b16 %v5397
        %v5405 = vunpack.c.l.b16 %v5398
        %5406 = vset.pattern.permute.xlu0 7
        %5407 = vperm.xlu0 %5406, %v5399
        %v5408 = vpop.permute.xlu0 %5407
        %5409 = vset.pattern.permute.xlu0 7
        %5410 = vperm.xlu0 %5409, %v5400
        %v5411 = vpop.permute.xlu0 %5410
        %5412 = vset.pattern.permute.xlu0 7
        %5413 = vperm.xlu0 %5412, %v5401
        %v5414 = vpop.permute.xlu0 %5413
        %5415 = vset.pattern.permute.xlu0 7
        %5416 = vperm.xlu0 %5415, %v5402
        %v5417 = vpop.permute.xlu0 %5416
        %5418 = vset.pattern.permute.xlu0 7
        %5419 = vperm.xlu0 %5418, %v5403
        %v5420 = vpop.permute.xlu0 %5419
        %5421 = vset.pattern.permute.xlu0 7
        %5422 = vperm.xlu0 %5421, %v5404
        %v5423 = vpop.permute.xlu0 %5422
        %5424 = vset.pattern.permute.xlu0 7
        %5425 = vperm.xlu0 %5424, %v5405
        %v5426 = vpop.permute.xlu0 %5425
        %v5427 = vperm.slane %v5408, %v1409
        %v5428 = vperm.slane %v5411, %v1411
        %v5429 = vsel %vm1413, %v5428, %v5427
        %v5430 = vperm.slane %v5414, %v1415
        %v5431 = vsel %vm1417, %v5430, %v5429
        %v5432 = vperm.slane %v5417, %v1419
        %v5433 = vsel %vm1421, %v5432, %v5431
        %v5434 = vperm.slane %v5420, %v1423
        %v5435 = vsel %vm1425, %v5434, %v5433
        %v5436 = vperm.slane %v5423, %v1427
        %v5437 = vsel %vm1429, %v5436, %v5435
        %v5438 = vperm.slane %v5426, %v1431
        %v5439 = vsel %vm1433, %v5438, %v5437
        %v5440 = vpack.c.b16 %v5439, %v5439
        %v5441 = vpack.c.b16 %v612, %v612
        %v5443 = vsel %vm1451, %v5440, 0
        %v5446 = vsel %vm1532, %v5441, 0
        %5448 = vmatpush.bf16.msra.mxu0 0
        %5449 = vmatpush.bf16.msra.mxu0 0
        %5450 = vmatpush.bf16.msra.mxu0 0
        %5451 = vmatpush.bf16.msra.mxu0 0
        %5452 = vmatpush.bf16.msra.mxu0 %v5446
        %5453 = vmatpush.bf16.msra.mxu0 %v671
        %5454 = vmatpush.bf16.msra.mxu0 %v670
        %5455 = vmatpush.bf16.msra.mxu0 %v669
        %5456 = vmatmul.bf16.gmra.mxu0 %v5443
        %v5457 = vpop.f32.mrf.mxu0
        %v5458 = vadd.f32 0.0, %v5457
        %v5459 = vpop.f32.mrf.mxu0
        %5460 = vdwg.mxu0
        %v5468 = vunpack.c.l.b16 %v5374
        %v5469 = vunpack.c.l.b16 %v5375
        %v5470 = vunpack.c.l.b16 %v5376
        %v5471 = vunpack.c.l.b16 %v5377
        %v5472 = vunpack.c.l.b16 %v5378
        %v5473 = vunpack.c.l.b16 %v5379
        %v5474 = vunpack.c.l.b16 %v5380
        %v5475 = vpack.c.b16 %v5469, %v5468
        %v5476 = vpack.c.b16 %v5471, %v5470
        %v5477 = vpack.c.b16 %v5473, %v5472
        %v5478 = vpack.c.b16 %v5474, %v5474
        %v5479 = vunpack.c.l.b16 %v5475
        %v5480 = vunpack.c.h.b16 %v5475
        %v5481 = vunpack.c.l.b16 %v5476
        %v5482 = vunpack.c.h.b16 %v5476
        %v5483 = vunpack.c.l.b16 %v5477
        %v5484 = vunpack.c.h.b16 %v5477
        %v5485 = vunpack.c.l.b16 %v5478
        %5486 = vset.pattern.permute.xlu0 7
        %5487 = vperm.xlu0 %5486, %v5479
        %v5488 = vpop.permute.xlu0 %5487
        %5489 = vset.pattern.permute.xlu0 7
        %5490 = vperm.xlu0 %5489, %v5480
        %v5491 = vpop.permute.xlu0 %5490
        %5492 = vset.pattern.permute.xlu0 7
        %5493 = vperm.xlu0 %5492, %v5481
        %v5494 = vpop.permute.xlu0 %5493
        %5495 = vset.pattern.permute.xlu0 7
        %5496 = vperm.xlu0 %5495, %v5482
        %v5497 = vpop.permute.xlu0 %5496
        %5498 = vset.pattern.permute.xlu0 7
        %5499 = vperm.xlu0 %5498, %v5483
        %v5500 = vpop.permute.xlu0 %5499
        %5501 = vset.pattern.permute.xlu0 7
        %5502 = vperm.xlu0 %5501, %v5484
        %v5503 = vpop.permute.xlu0 %5502
        %5504 = vset.pattern.permute.xlu0 7
        %5505 = vperm.xlu0 %5504, %v5485
        %v5506 = vpop.permute.xlu0 %5505
        %v5507 = vperm.slane %v5488, %v1409
        %v5508 = vperm.slane %v5491, %v1411
        %v5509 = vsel %vm1413, %v5508, %v5507
        %v5510 = vperm.slane %v5494, %v1415
        %v5511 = vsel %vm1417, %v5510, %v5509
        %v5512 = vperm.slane %v5497, %v1419
        %v5513 = vsel %vm1421, %v5512, %v5511
        %v5514 = vperm.slane %v5500, %v1423
        %v5515 = vsel %vm1425, %v5514, %v5513
        %v5516 = vperm.slane %v5503, %v1427
        %v5517 = vsel %vm1429, %v5516, %v5515
        %v5518 = vperm.slane %v5506, %v1431
        %v5519 = vsel %vm1433, %v5518, %v5517
        %v5520 = vpack.c.b16 %v5519, %v5519
        %v5521 = vpack.c.b16 %v614, %v613
        %v5522 = vpack.c.b16 %v616, %v615
        %v5523 = vpack.c.b16 %v618, %v617
        %v5524 = vpack.c.b16 %v619, %v619
        %v5529 = vsel %vm1451, %v5520, 0
        %v5532 = vsel %vm1532, %v5524, 0
        %5534 = vmatpush.bf16.msra.mxu0 0
        %5535 = vmatpush.bf16.msra.mxu0 0
        %5536 = vmatpush.bf16.msra.mxu0 0
        %5537 = vmatpush.bf16.msra.mxu0 0
        %5538 = vmatpush.bf16.msra.mxu0 %v5532
        %5539 = vmatpush.bf16.msra.mxu0 %v5523
        %5540 = vmatpush.bf16.msra.mxu0 %v5522
        %5541 = vmatpush.bf16.msra.mxu0 %v5521
        %5542 = vmatmul.bf16.gmra.mxu0 %v5529
        %v5543 = vpop.f32.mrf.mxu0
        %v5544 = vadd.f32 0.0, %v5543
        %v5545 = vpop.f32.mrf.mxu0
        %5546 = vdwg.mxu0
        %v5547 = vmul.f32 %v5458, 0.020408163
        %v5548 = vmul.f32 %v5544, 0.020408163
        %v5551 = vrot.slane %v5548, 7
        %v5552 = vsel %vm1448, %v5551, %v5547
        %s5554 = scalar_lea.vmem %s251, 14 [#allocation7]
        %5555 = vst [vmem:[%s5554] sm:$0x3] %v5552
        %s5556 = sand.u32 %s107, 1
        %s5557 = scalar_lea.sflag [#allocation4], %s5556
        %s5558 = sand.u32 %s107, 1
        %s5559 = smul.addr %s5558, 16
        %s5560 = scalar_lea.vmem [#allocation7], %s5559
        %s5561 = sand.u32 %s133, 1
        %s5562 = scalar_lea.sflag [#allocation9], %s5561
        %s5563 = sand.u32 %s133, 1
        %s5564 = smul.addr %s5563, 16
        %s5565 = scalar_lea.vmem [#allocation8], %s5564
        // Predicated region
        $region41: #{tpu_custom_call.1} parent=31 // pred_check
          %p5566 = pneg %p117
        $region42: #{tpu_custom_call.1} parent=31 // pred_check_branch
          %5568 = sbr.rel (%p5566) target = $region44
        $region43: #{tpu_custom_call.1} parent=31 // pred_region
          %s5569 = smul.u32 8, %s26
          %5571 = vsyncadd %s5557, 0
          %s5572 = smul.addr %s5569, 2
          %s5573 = scalar_lea.hbm %s3, %s5572
          %s5574 = sshll.u32 %s5560, 4
          %s5575 = int_to_ptr.vmem [resolvable:$true] %s5574
          %s5576 = sshll.u32 %s5573, 4
          %s5577 = int_to_ptr.hbm [resolvable:$true] %s5576
          %5582 = dma.vmem_to_hbm [thread:$0]  %s5575, 256, %s5577, %s5557, 32, 32, 2
        $region44: #{tpu_custom_call.1} parent=31 // pred_fallthru
          _
        // Predicated region
        $region45: #{tpu_custom_call.1} parent=31 // pred_check
          %p5583 = pneg %p143
        $region46: #{tpu_custom_call.1} parent=31 // pred_check_branch
          %5585 = sbr.rel (%p5583) target = $region48
        $region47: #{tpu_custom_call.1} parent=31 // pred_region
          %s5586 = smul.u32 8, %s26
          %5588 = vsyncadd %s5562, 0
          %s5589 = smul.addr %s5586, 2
          %s5590 = scalar_lea.hbm %s4, %s5589
          %s5591 = sshll.u32 %s5565, 4
          %s5592 = int_to_ptr.vmem [resolvable:$true] %s5591
          %s5593 = sshll.u32 %s5590, 4
          %s5594 = int_to_ptr.hbm [resolvable:$true] %s5593
          %5599 = dma.vmem_to_hbm [thread:$0]  %s5592, 256, %s5594, %s5562, 32, 32, 2
        $region48: #{tpu_custom_call.1} parent=31 // pred_fallthru
          _
      $region32: #{tpu_custom_call.1} parent=5 // pred_fallthru
        _
      %p5600 = scmp.le.s32.totalorder 2, %s21
      // Predicated region
      $region49: #{tpu_custom_call.1} parent=5 // pred_check
        %p5601 = pneg %p5600
      $region50: #{tpu_custom_call.1} parent=5 // pred_check_branch
        %5603 = sbr.rel (%p5601) target = $region52
      $region51: #{tpu_custom_call.1} parent=5 // pred_region
        %s5604 = ssub.s32 %s21, 2
        // Predicated region
        $region53: #{tpu_custom_call.1} parent=51 // pred_check
          %p5605 = pneg %p123
        $region54: #{tpu_custom_call.1} parent=51 // pred_check_branch
          %5607 = sbr.rel (%p5605) target = $region56
        $region55: #{tpu_custom_call.1} parent=51 // pred_region
          %s5608 = sand.u32 %s108, 1
          %s5609 = scalar_lea.sflag [#allocation4], %s5608
          %s5610 = sand.u32 %s108, 1
          %s5611 = smul.addr %s5610, 16
          %s5612 = scalar_lea.vmem [#allocation7], %s5611
          %5614 = dma.done %s5609, 256
        $region56: #{tpu_custom_call.1} parent=51 // pred_fallthru
          _
        // Predicated region
        $region57: #{tpu_custom_call.1} parent=51 // pred_check
          %p5615 = pneg %p149
        $region58: #{tpu_custom_call.1} parent=51 // pred_check_branch
          %5617 = sbr.rel (%p5615) target = $region60
        $region59: #{tpu_custom_call.1} parent=51 // pred_region
          %s5618 = sand.u32 %s134, 1
          %s5619 = scalar_lea.sflag [#allocation9], %s5618
          %s5620 = sand.u32 %s134, 1
          %s5621 = smul.addr %s5620, 16
          %s5622 = scalar_lea.vmem [#allocation8], %s5621
          %5624 = dma.done %s5619, 256
        $region60: #{tpu_custom_call.1} parent=51 // pred_fallthru
          _
      $region52: #{tpu_custom_call.1} parent=5 // pred_fallthru
        _
    $region6: #{tpu_custom_call.1} parent=1 // loop_footer
      %s25 = sadd.s32 1, %s21
    $region7: #{tpu_custom_call.1} parent=1 // loop_footer_branch
      %20 = sbr.rel target = $region3
    $region8: #{tpu_custom_call.1} parent=1 // loop_exit
      _
    %5625 = vsyncpa [#allocation3], 1
    %s5626 = scalar_lea.sflag [#allocation3], 1
    %5627 = vsyncpa %s5626, 1
    %5628 = vsyncpa [#allocation4], 1
    %s5629 = scalar_lea.sflag [#allocation4], 1
    %5630 = vsyncpa %s5629, 1
    %5631 = vsyncpa [#allocation9], 1
    %s5632 = scalar_lea.sflag [#allocation9], 1
    %5633 = vsyncpa %s5632, 1
    %5634 = vsyncpa [#allocation5], 1
    %s5635 = scalar_lea.sflag [#allocation5], 1
    %5636 = vsyncpa %s5635, 1

</llo_original>
